<compile_context>
chip_gen: v5e
topology: v5e:2x2
jax: 0.10.0
libtpu: 0.0.40
codegen_flags: <defaults>
</compile_context>

<pallas_src>
import functools

import jax
import jax.numpy as jnp
from jax import lax
from jax.experimental import pallas as pl
from jax.experimental.pallas import tpu as pltpu


def _round_up(x, m):
    return (x + m - 1) // m * m


def _bottleneck_kernel(d, TH, W,
                       x_hbm, mask_ref, w1_ref, w2_ref, w3_ref,
                       s1_ref, b1_ref, s2_ref, b2_ref, s3_ref, b3_ref,
                       o_ref, xbuf, dma_sem):
    Wp = W + 2 * d                     # padded width
    THWp = TH * Wp                     # flat rows of the output tile
    L2 = (TH + 2 * d) * Wp + 2 * d     # flat rows of the extended halo window
    PP = w1_ref.shape[1]

    n = pl.program_id(0)
    i = pl.program_id(1)
    slot = lax.rem(i, 2)

    def start_fetch(tile, s):
        pltpu.make_async_copy(
            x_hbm.at[n, pl.ds(tile * THWp, L2)], xbuf.at[s], dma_sem.at[s]
        ).start()

    # First tile of this image: issue its own fetch (prefetch never crosses images,
    # so megacore sharding of the batch axis stays correct).
    @pl.when(i == 0)
    def _():
        start_fetch(i, slot)

    # Wait for the current window, then immediately prefetch the next one (overlaps
    # the next HBM read with this tile's MXU work).
    pltpu.make_async_copy(
        x_hbm.at[n, pl.ds(i * THWp, L2)], xbuf.at[slot], dma_sem.at[slot]
    ).wait()

    @pl.when(i + 1 < pl.num_programs(1))
    def _():
        start_fetch(i + 1, 1 - slot)

    x_win = xbuf[slot]                                       # (L2, CinP), input dtype

    # ---- conv1 (1x1) + bn1 + relu, computed on the full extended halo window ----
    y1 = jnp.dot(x_win.astype(jnp.bfloat16), w1_ref[...],
                 preferred_element_type=jnp.float32)         # (L2, PP) f32
    y1 = jnp.maximum(y1 * s1_ref[...] + b1_ref[...], 0.0)
    # conv2 expects *zero* spatial padding of its input; conv1+bn1+relu makes padded
    # pixels nonzero (relu(bn bias)), so zero them with the precomputed mask.
    y1 = y1 * mask_ref[...]                                  # mask: (L2, 1) of {0,1}

    # ---- conv2 (3x3, dilation=d) as 9 statically-sliced bf16 matmuls ----
    # Interior output flat row r' lives at slab index d*Wp + d + r'; the (kh,kw) tap
    # lives at slab index d*Wp + d + r' + (kh-1)*d*Wp + (kw-1)*d, which is always a
    # valid in-bounds static slice of the extended slab.  (Values read for discarded
    # width-padding output columns are harmless — they are sliced away in the wrapper.)
    acc = jnp.zeros((THWp, PP), jnp.float32)
    for kh in range(3):
        for kw in range(3):
            start = d * Wp + d + (kh - 1) * d * Wp + (kw - 1) * d
            tap = y1[start:start + THWp]
            acc = acc + jnp.dot(tap.astype(jnp.bfloat16), w2_ref[kh, kw],
                                preferred_element_type=jnp.float32)
    y2 = jnp.maximum(acc * s2_ref[...] + b2_ref[...], 0.0)   # (THWp, PP)

    # ---- conv3 (1x1) + bn3 ----
    y3 = jnp.dot(y2.astype(jnp.bfloat16), w3_ref[...],
                 preferred_element_type=jnp.float32)         # (THWp, CoutP)
    y3 = y3 * s3_ref[...] + b3_ref[...]

    # ---- residual add (downsample=None => Cin == Cout, stride == 1) + relu ----
    res = x_win[d * Wp + d:d * Wp + d + THWp].astype(jnp.float32)
    o_ref[...] = jnp.maximum(y3 + res, 0.0).astype(o_ref.dtype)


def bottleneck_forward(x_nchw, params, *, dilation=1, stride=1, row_tile=None):
    """Fused Bottleneck forward. x_nchw: (N, Cin, H, W)."""
    # TODO(synk): the optional `downsample` projection shortcut is not implemented;
    #             this matches the downsample=None (stride=1, inplanes==4*planes) case.
    assert stride == 1, "downsample=None requires stride=1"
    w1, w2, w3, s1, b1, s2, b2, s3, b3 = params

    N, Cin, H, W = x_nchw.shape
    P = w1.shape[1]
    Cout = w3.shape[1]
    assert Cin == Cout, "residual add requires inplanes == planes * 4"
    d = dilation

    # Lane-dense channel padding (multiples of 128).
    CinP = _round_up(Cin, 128)
    PP = _round_up(P, 128)
    CoutP = _round_up(Cout, 128)
    assert CinP == CoutP

    Wp = W + 2 * d
    Hp = H + 2 * d

    # Row-tile selection (must divide H; tile*Wp must be sublane-aligned unless full).
    if row_tile is None:
        row_tile = max(t for t in range(1, H + 1) if H % t == 0 and t <= 16)
    TH = row_tile
    if H % TH != 0 or (TH != H and (TH * Wp) % 8 != 0):
        TH = H
    num_tiles = H // TH
    THWp = TH * Wp
    L2 = (TH + 2 * d) * Wp + 2 * d     # extended halo window (flat rows)

    f32, bf16 = jnp.float32, jnp.bfloat16

    def pad2(a, r, c):
        return jnp.pad(a.astype(f32), ((0, r - a.shape[0]), (0, c - a.shape[1])))

    def padv(v, c):
        return jnp.pad(v.astype(f32), (0, c - v.shape[0])).reshape(1, c)

    # Weights cast to bf16 once (MXU operands); BN scale/shift stay f32.
    w1p = pad2(w1, CinP, PP).astype(bf16)
    w2p = jnp.pad(w2.astype(f32),
                  ((0, 0), (0, 0), (0, PP - P), (0, PP - P))).astype(bf16)
    w3p = pad2(w3, PP, CoutP).astype(bf16)
    s1p, b1p = padv(s1, PP), padv(b1, PP)
    s2p, b2p = padv(s2, PP), padv(b2, PP)
    s3p, b3p = padv(s3, CoutP), padv(b3, CoutP)

    # NCHW -> NHWC, zero-pad spatially by d, pad channels, flatten spatial dims, and
    # add d extra zero "flat rows" front/back so every halo window slice is in bounds.
    x = jnp.transpose(x_nchw, (0, 2, 3, 1))
    x = jnp.pad(x, ((0, 0), (d, d), (d, d), (0, CinP - Cin)))
    x_flat = x.reshape(N, Hp * Wp, CinP)
    x_flat2 = jnp.pad(x_flat, ((0, 0), (d, d), (0, 0)))      # (N, Hp*Wp + 2d, CinP)

    # Precomputed per-tile validity mask over the extended window (zeros over the
    # spatial padding region), so the kernel needs no in-kernel iota / division.
    e = jnp.arange(L2, dtype=jnp.int32)
    tiles = jnp.arange(num_tiles, dtype=jnp.int32)
    f = tiles[:, None] * THWp - d + e[None, :]               # flat index into x_flat
    pr = jnp.floor_divide(f, Wp)
    pc = f - pr * Wp
    valid = (pr >= d) & (pr < d + H) & (pc >= d) & (pc < d + W)
    mask = valid.astype(f32)[:, :, None]                     # (num_tiles, L2, 1)

    kernel = functools.partial(_bottleneck_kernel, d, TH, W)

    out_flat = pl.pallas_call(
        kernel,
        out_shape=jax.ShapeDtypeStruct((N, H * Wp, CoutP), x_nchw.dtype),
        grid_spec=pltpu.PrefetchScalarGridSpec(
            num_scalar_prefetch=0,
            grid=(N, num_tiles),
            in_specs=[
                pl.BlockSpec(memory_space=pl.ANY),                        # x (HBM)
                pl.BlockSpec((None, L2, 1), lambda n, i: (i, 0, 0)),      # pad mask
                pl.BlockSpec((CinP, PP), lambda n, i: (0, 0)),            # w1
                pl.BlockSpec((3, 3, PP, PP), lambda n, i: (0, 0, 0, 0)),  # w2
                pl.BlockSpec((PP, CoutP), lambda n, i: (0, 0)),           # w3
                pl.BlockSpec((1, PP), lambda n, i: (0, 0)),               # bn1 scale
                pl.BlockSpec((1, PP), lambda n, i: (0, 0)),               # bn1 shift
                pl.BlockSpec((1, PP), lambda n, i: (0, 0)),               # bn2 scale
                pl.BlockSpec((1, PP), lambda n, i: (0, 0)),               # bn2 shift
                pl.BlockSpec((1, CoutP), lambda n, i: (0, 0)),            # bn3 scale
                pl.BlockSpec((1, CoutP), lambda n, i: (0, 0)),            # bn3 shift
            ],
            out_specs=pl.BlockSpec((None, THWp, CoutP), lambda n, i: (n, i, 0)),
            scratch_shapes=[
                pltpu.VMEM((2, L2, CinP), x_nchw.dtype),     # double-buffered halo window
                pltpu.SemaphoreType.DMA((2,)),               # per-slot DMA semaphores
            ],
        ),
        compiler_params=pltpu.CompilerParams(
            # Tile axis must stay sequential ("arbitrary") so the cross-step input
            # prefetch is valid; the batch axis is sharded across cores.
            dimension_semantics=("parallel", "arbitrary"),
            vmem_limit_bytes=64 * 1024 * 1024,
        ),
    )(x_flat2, mask, w1p, w2p, w3p, s1p, b1p, s2p, b2p, s3p, b3p)

    # Drop width padding / channel padding, back to NCHW.
    out = out_flat.reshape(N, H, Wp, CoutP)[:, :, d:d + W, :Cout]
    return jnp.transpose(out, (0, 3, 1, 2))


def bottleneck_ref(x_nchw, params, *, dilation=1):
    """Pure-JAX reference (lax conv) for correctness checking."""
    w1, w2, w3, s1, b1, s2, b2, s3, b3 = params
    x = jnp.transpose(x_nchw, (0, 2, 3, 1))
    dn = ('NHWC', 'HWIO', 'NHWC')
    d = dilation
    y = lax.conv_general_dilated(x, w1.reshape(1, 1, *w1.shape), (1, 1), 'VALID',
                                 dimension_numbers=dn)
    y = jnp.maximum(y * s1 + b1, 0.0)
    y = lax.conv_general_dilated(y, w2, (1, 1), [(d, d), (d, d)],
                                 rhs_dilation=(d, d), dimension_numbers=dn)
    y = jnp.maximum(y * s2 + b2, 0.0)
    y = lax.conv_general_dilated(y, w3.reshape(1, 1, *w3.shape), (1, 1), 'VALID',
                                 dimension_numbers=dn)
    y = y * s3 + b3
    y = jnp.maximum(y + x, 0.0)
    return jnp.transpose(y, (0, 3, 1, 2))


if __name__ == "__main__":
    # Small shapes consistent with the module: inplanes = planes * expansion so
    # that downsample=None is valid.
    N, inplanes, planes, H, W = 2, 32, 8, 16, 16
    dilation = 2
    Cout = planes * 4            # == inplanes (residual add without downsample)
    eps = 1e-5                   # PyTorch BatchNorm2d default

    key = jax.random.PRNGKey(0)
    ks = jax.random.split(key, 8)

    x = jax.random.normal(ks[0], (N, inplanes, H, W), jnp.float32)
    w1 = 0.1 * jax.random.normal(ks[1], (inplanes, planes), jnp.float32)
    w2 = 0.1 * jax.random.normal(ks[2], (3, 3, planes, planes), jnp.float32)
    w3 = 0.1 * jax.random.normal(ks[3], (planes, Cout), jnp.float32)

    def bn_fold(k, c):
        kg, kb, km, kv = jax.random.split(k, 4)
        gamma = 1.0 + 0.1 * jax.random.normal(kg, (c,), jnp.float32)
        beta = 0.1 * jax.random.normal(kb, (c,), jnp.float32)
        mean = 0.1 * jax.random.normal(km, (c,), jnp.float32)
        var = 1.0 + 0.1 * jax.random.uniform(kv, (c,), jnp.float32)
        scale = gamma / jnp.sqrt(var + eps)
        shift = beta - mean * scale
        return scale, shift

    s1, b1 = bn_fold(ks[4], planes)
    s2, b2 = bn_fold(ks[5], planes)
    s3, b3 = bn_fold(ks[6], Cout)
    params = (w1, w2, w3, s1, b1, s2, b2, s3, b3)

    out = bottleneck_forward(x, params, dilation=dilation, row_tile=8)
    out = jax.block_until_ready(out)
    assert out.shape == (N, Cout, H, W)

    # Reference with bf16-rounded weights (the kernel feeds the MXU bf16 operands;
    # activations are also bf16-rounded in the kernel, hence the tolerance).
    rnd = lambda w: w.astype(jnp.bfloat16).astype(jnp.float32)
    params_ref = (rnd(w1), rnd(w2), rnd(w3), s1, b1, s2, b2, s3, b3)
    ref = bottleneck_ref(x, params_ref, dilation=dilation)
    err = float(jnp.max(jnp.abs(out - ref)))
    assert err < 5e-2, f"max abs err {err}"

    print("KERNEL_OK")
</pallas_src>

<mosaic_0001>
module attributes {stable_mosaic.version = 11 : i64} {
  func.func @_bottleneck_kernel(%arg0: i32, %arg1: i32, %arg2: memref<2x404x128xf32, #tpu.memory_space<any>>, %arg3: memref<1x244x1xf32, #tpu.memory_space<vmem>>, %arg4: memref<128x128xbf16, #tpu.memory_space<vmem>>, %arg5: memref<3x3x128x128xbf16, #tpu.memory_space<vmem>>, %arg6: memref<128x128xbf16, #tpu.memory_space<vmem>>, %arg7: memref<1x128xf32, #tpu.memory_space<vmem>>, %arg8: memref<1x128xf32, #tpu.memory_space<vmem>>, %arg9: memref<1x128xf32, #tpu.memory_space<vmem>>, %arg10: memref<1x128xf32, #tpu.memory_space<vmem>>, %arg11: memref<1x128xf32, #tpu.memory_space<vmem>>, %arg12: memref<1x128xf32, #tpu.memory_space<vmem>>, %arg13: memref<1x160x128xf32, #tpu.memory_space<vmem>>, %arg14: memref<2x244x128xf32, #tpu.memory_space<vmem>>, %arg15: memref<2x!tpu.dma_semaphore, #tpu.memory_space<semaphore_mem>>) attributes {dimension_semantics = [#tpu.dimension_semantics<parallel>, #tpu.dimension_semantics<arbitrary>], iteration_bounds = array<i64: 2, 2>, scalar_prefetch = 0 : i64, scratch_operands = 2 : i64, tpu.core_type = #tpu.core_type<tc>, window_params = [{}, {transform_indices = @transform_1, window_bounds = array<i64: 1, 244, 1>}, {pipeline_mode = #tpu.pipeline_mode<synchronous>, transform_indices = @transform_2, window_bounds = array<i64: 128, 128>}, {pipeline_mode = #tpu.pipeline_mode<synchronous>, transform_indices = @transform_3, window_bounds = array<i64: 3, 3, 128, 128>}, {pipeline_mode = #tpu.pipeline_mode<synchronous>, transform_indices = @transform_4, window_bounds = array<i64: 128, 128>}, {pipeline_mode = #tpu.pipeline_mode<synchronous>, transform_indices = @transform_5, window_bounds = array<i64: 1, 128>}, {pipeline_mode = #tpu.pipeline_mode<synchronous>, transform_indices = @transform_6, window_bounds = array<i64: 1, 128>}, {pipeline_mode = #tpu.pipeline_mode<synchronous>, transform_indices = @transform_7, window_bounds = array<i64: 1, 128>}, {pipeline_mode = #tpu.pipeline_mode<synchronous>, transform_indices = @transform_8, window_bounds = array<i64: 1, 128>}, {pipeline_mode = #tpu.pipeline_mode<synchronous>, transform_indices = @transform_9, window_bounds = array<i64: 1, 128>}, {pipeline_mode = #tpu.pipeline_mode<synchronous>, transform_indices = @transform_10, window_bounds = array<i64: 1, 128>}, {transform_indices = @transform_11, window_bounds = array<i64: 1, 160, 128>}]} {
    %c2_i32 = arith.constant 2 : i32
    %0 = arith.remsi %arg1, %c2_i32 : i32
    %c0_i32 = arith.constant 0 : i32
    %1 = arith.cmpi eq, %arg1, %c0_i32 : i32
    %2 = arith.extui %1 : i1 to i32
    %c0_i32_0 = arith.constant 0 : i32
    %3 = arith.cmpi ne, %2, %c0_i32_0 : i32
    scf.if %3 {
      %c160_i32_77 = arith.constant 160 : i32
      %112 = arith.muli %arg1, %c160_i32_77 : i32
      %c0_i32_78 = arith.constant 0 : i32
      %113 = tpu.memref_slice %arg2[%arg0, %112, %c0_i32_78] : memref<2x404x128xf32, #tpu.memory_space<any>> -> memref<1x244x128xf32, #tpu.memory_space<any>>
      %114 = tpu.memref_squeeze %113 : memref<1x244x128xf32, #tpu.memory_space<any>> -> memref<244x128xf32, #tpu.memory_space<any>>
      %c0_i32_79 = arith.constant 0 : i32
      %c0_i32_80 = arith.constant 0 : i32
      %115 = tpu.memref_slice %arg14[%0, %c0_i32_79, %c0_i32_80] : memref<2x244x128xf32, #tpu.memory_space<vmem>> -> memref<1x244x128xf32, #tpu.memory_space<vmem>>
      %116 = tpu.memref_squeeze %115 : memref<1x244x128xf32, #tpu.memory_space<vmem>> -> memref<244x128xf32, #tpu.memory_space<vmem>>
      %117 = tpu.memref_slice %arg15[%0] : memref<2x!tpu.dma_semaphore, #tpu.memory_space<semaphore_mem>> -> memref<1x!tpu.dma_semaphore, #tpu.memory_space<semaphore_mem>>
      %118 = tpu.memref_squeeze %117 : memref<1x!tpu.dma_semaphore, #tpu.memory_space<semaphore_mem>> -> memref<!tpu.dma_semaphore, #tpu.memory_space<semaphore_mem>>
      tpu.enqueue_dma source(%114 : memref<244x128xf32, #tpu.memory_space<any>>) target(%116 : memref<244x128xf32, #tpu.memory_space<vmem>>) target_semaphore(%118 : memref<!tpu.dma_semaphore, #tpu.memory_space<semaphore_mem>>)
    } else {
    }
    %c160_i32 = arith.constant 160 : i32
    %4 = arith.muli %arg1, %c160_i32 : i32
    %c0_i32_1 = arith.constant 0 : i32
    %5 = tpu.memref_slice %arg2[%arg0, %4, %c0_i32_1] : memref<2x404x128xf32, #tpu.memory_space<any>> -> memref<1x244x128xf32, #tpu.memory_space<any>>
    %6 = tpu.memref_squeeze %5 : memref<1x244x128xf32, #tpu.memory_space<any>> -> memref<244x128xf32, #tpu.memory_space<any>>
    %c0_i32_2 = arith.constant 0 : i32
    %c0_i32_3 = arith.constant 0 : i32
    %7 = tpu.memref_slice %arg14[%0, %c0_i32_2, %c0_i32_3] : memref<2x244x128xf32, #tpu.memory_space<vmem>> -> memref<1x244x128xf32, #tpu.memory_space<vmem>>
    %8 = tpu.memref_squeeze %7 : memref<1x244x128xf32, #tpu.memory_space<vmem>> -> memref<244x128xf32, #tpu.memory_space<vmem>>
    %9 = tpu.memref_slice %arg15[%0] : memref<2x!tpu.dma_semaphore, #tpu.memory_space<semaphore_mem>> -> memref<1x!tpu.dma_semaphore, #tpu.memory_space<semaphore_mem>>
    %10 = tpu.memref_squeeze %9 : memref<1x!tpu.dma_semaphore, #tpu.memory_space<semaphore_mem>> -> memref<!tpu.dma_semaphore, #tpu.memory_space<semaphore_mem>>
    tpu.wait_dma2 semaphore(%10 : memref<!tpu.dma_semaphore, #tpu.memory_space<semaphore_mem>>) src(%6 : memref<244x128xf32, #tpu.memory_space<any>>) dst(%8 : memref<244x128xf32, #tpu.memory_space<vmem>>)
    %c1_i32 = arith.constant 1 : i32
    %11 = arith.addi %arg1, %c1_i32 : i32
    %c2_i32_4 = arith.constant 2 : i32
    %12 = arith.cmpi slt, %11, %c2_i32_4 : i32
    %13 = arith.extui %12 : i1 to i32
    %c0_i32_5 = arith.constant 0 : i32
    %14 = arith.cmpi ne, %13, %c0_i32_5 : i32
    scf.if %14 {
      %c1_i32_77 = arith.constant 1 : i32
      %112 = arith.addi %arg1, %c1_i32_77 : i32
      %c1_i32_78 = arith.constant 1 : i32
      %113 = arith.subi %c1_i32_78, %0 : i32
      %c160_i32_79 = arith.constant 160 : i32
      %114 = arith.muli %112, %c160_i32_79 : i32
      %c0_i32_80 = arith.constant 0 : i32
      %115 = tpu.memref_slice %arg2[%arg0, %114, %c0_i32_80] : memref<2x404x128xf32, #tpu.memory_space<any>> -> memref<1x244x128xf32, #tpu.memory_space<any>>
      %116 = tpu.memref_squeeze %115 : memref<1x244x128xf32, #tpu.memory_space<any>> -> memref<244x128xf32, #tpu.memory_space<any>>
      %c0_i32_81 = arith.constant 0 : i32
      %c0_i32_82 = arith.constant 0 : i32
      %117 = tpu.memref_slice %arg14[%113, %c0_i32_81, %c0_i32_82] : memref<2x244x128xf32, #tpu.memory_space<vmem>> -> memref<1x244x128xf32, #tpu.memory_space<vmem>>
      %118 = tpu.memref_squeeze %117 : memref<1x244x128xf32, #tpu.memory_space<vmem>> -> memref<244x128xf32, #tpu.memory_space<vmem>>
      %119 = tpu.memref_slice %arg15[%113] : memref<2x!tpu.dma_semaphore, #tpu.memory_space<semaphore_mem>> -> memref<1x!tpu.dma_semaphore, #tpu.memory_space<semaphore_mem>>
      %120 = tpu.memref_squeeze %119 : memref<1x!tpu.dma_semaphore, #tpu.memory_space<semaphore_mem>> -> memref<!tpu.dma_semaphore, #tpu.memory_space<semaphore_mem>>
      tpu.enqueue_dma source(%116 : memref<244x128xf32, #tpu.memory_space<any>>) target(%118 : memref<244x128xf32, #tpu.memory_space<vmem>>) target_semaphore(%120 : memref<!tpu.dma_semaphore, #tpu.memory_space<semaphore_mem>>)
    } else {
    }
    %15 = arith.index_cast %0 : i32 to index
    %c0 = arith.constant 0 : index
    %c0_6 = arith.constant 0 : index
    %16 = vector.load %arg14[%15, %c0, %c0_6] : memref<2x244x128xf32, #tpu.memory_space<vmem>>, vector<1x244x128xf32>
    %17 = vector.shape_cast %16 : vector<1x244x128xf32> to vector<244x128xf32>
    %18 = arith.truncf %17 : vector<244x128xf32> to vector<244x128xbf16>
    %c0_7 = arith.constant 0 : index
    %c0_8 = arith.constant 0 : index
    %19 = vector.load %arg4[%c0_7, %c0_8] : memref<128x128xbf16, #tpu.memory_space<vmem>>, vector<128x128xbf16>
    %cst = arith.constant dense<0.000000e+00> : vector<244x128xf32>
    %20 = tpu.matmul %18, %19, %cst {dimension_numbers = #tpu.dot_dimension_numbers<[1], [0], [0], [1], [0, 0, 1, 1], [], []>} : vector<244x128xbf16>, vector<128x128xbf16>, vector<244x128xf32> -> vector<244x128xf32>
    %c0_9 = arith.constant 0 : index
    %c0_10 = arith.constant 0 : index
    %21 = vector.load %arg7[%c0_9, %c0_10] : memref<1x128xf32, #tpu.memory_space<vmem>>, vector<1x128xf32>
    %22 = vector.broadcast %21 : vector<1x128xf32> to vector<244x128xf32>
    %23 = arith.mulf %20, %22 : vector<244x128xf32>
    %c0_11 = arith.constant 0 : index
    %c0_12 = arith.constant 0 : index
    %24 = vector.load %arg8[%c0_11, %c0_12] : memref<1x128xf32, #tpu.memory_space<vmem>>, vector<1x128xf32>
    %25 = vector.broadcast %24 : vector<1x128xf32> to vector<244x128xf32>
    %26 = arith.addf %23, %25 : vector<244x128xf32>
    %cst_13 = arith.constant 0.000000e+00 : f32
    %27 = vector.broadcast %cst_13 : f32 to vector<244x128xf32>
    %28 = arith.maximumf %26, %27 : vector<244x128xf32>
    %c0_14 = arith.constant 0 : index
    %c0_15 = arith.constant 0 : index
    %c0_16 = arith.constant 0 : index
    %29 = vector.load %arg3[%c0_14, %c0_15, %c0_16] : memref<1x244x1xf32, #tpu.memory_space<vmem>>, vector<1x244x1xf32>
    %30 = vector.shape_cast %29 : vector<1x244x1xf32> to vector<244x1xf32>
    %31 = vector.broadcast %30 : vector<244x1xf32> to vector<244x128xf32>
    %32 = arith.mulf %28, %31 : vector<244x128xf32>
    %cst_17 = arith.constant 0.000000e+00 : f32
    %33 = vector.broadcast %cst_17 : f32 to vector<160x128xf32>
    %34 = vector.extract_strided_slice %32 {offsets = [0, 0], sizes = [160, 128], strides = [1, 1]} : vector<244x128xf32> to vector<160x128xf32>
    %35 = arith.truncf %34 : vector<160x128xf32> to vector<160x128xbf16>
    %c0_18 = arith.constant 0 : index
    %c0_19 = arith.constant 0 : index
    %c0_20 = arith.constant 0 : index
    %c0_21 = arith.constant 0 : index
    %36 = vector.load %arg5[%c0_18, %c0_19, %c0_20, %c0_21] : memref<3x3x128x128xbf16, #tpu.memory_space<vmem>>, vector<1x1x128x128xbf16>
    %37 = vector.shape_cast %36 : vector<1x1x128x128xbf16> to vector<128x128xbf16>
    %cst_22 = arith.constant dense<0.000000e+00> : vector<160x128xf32>
    %38 = tpu.matmul %35, %37, %cst_22 {dimension_numbers = #tpu.dot_dimension_numbers<[1], [0], [0], [1], [0, 0, 1, 1], [], []>} : vector<160x128xbf16>, vector<128x128xbf16>, vector<160x128xf32> -> vector<160x128xf32>
    %39 = arith.addf %33, %38 : vector<160x128xf32>
    %40 = vector.extract_strided_slice %32 {offsets = [2, 0], sizes = [160, 128], strides = [1, 1]} : vector<244x128xf32> to vector<160x128xf32>
    %41 = arith.truncf %40 : vector<160x128xf32> to vector<160x128xbf16>
    %c0_23 = arith.constant 0 : index
    %c1 = arith.constant 1 : index
    %c0_24 = arith.constant 0 : index
    %c0_25 = arith.constant 0 : index
    %42 = vector.load %arg5[%c0_23, %c1, %c0_24, %c0_25] : memref<3x3x128x128xbf16, #tpu.memory_space<vmem>>, vector<1x1x128x128xbf16>
    %43 = vector.shape_cast %42 : vector<1x1x128x128xbf16> to vector<128x128xbf16>
    %cst_26 = arith.constant dense<0.000000e+00> : vector<160x128xf32>
    %44 = tpu.matmul %41, %43, %cst_26 {dimension_numbers = #tpu.dot_dimension_numbers<[1], [0], [0], [1], [0, 0, 1, 1], [], []>} : vector<160x128xbf16>, vector<128x128xbf16>, vector<160x128xf32> -> vector<160x128xf32>
    %45 = arith.addf %39, %44 : vector<160x128xf32>
    %46 = vector.extract_strided_slice %32 {offsets = [4, 0], sizes = [160, 128], strides = [1, 1]} : vector<244x128xf32> to vector<160x128xf32>
    %47 = arith.truncf %46 : vector<160x128xf32> to vector<160x128xbf16>
    %c0_27 = arith.constant 0 : index
    %c2 = arith.constant 2 : index
    %c0_28 = arith.constant 0 : index
    %c0_29 = arith.constant 0 : index
    %48 = vector.load %arg5[%c0_27, %c2, %c0_28, %c0_29] : memref<3x3x128x128xbf16, #tpu.memory_space<vmem>>, vector<1x1x128x128xbf16>
    %49 = vector.shape_cast %48 : vector<1x1x128x128xbf16> to vector<128x128xbf16>
    %cst_30 = arith.constant dense<0.000000e+00> : vector<160x128xf32>
    %50 = tpu.matmul %47, %49, %cst_30 {dimension_numbers = #tpu.dot_dimension_numbers<[1], [0], [0], [1], [0, 0, 1, 1], [], []>} : vector<160x128xbf16>, vector<128x128xbf16>, vector<160x128xf32> -> vector<160x128xf32>
    %51 = arith.addf %45, %50 : vector<160x128xf32>
    %52 = vector.extract_strided_slice %32 {offsets = [40, 0], sizes = [160, 128], strides = [1, 1]} : vector<244x128xf32> to vector<160x128xf32>
    %53 = arith.truncf %52 : vector<160x128xf32> to vector<160x128xbf16>
    %c1_31 = arith.constant 1 : index
    %c0_32 = arith.constant 0 : index
    %c0_33 = arith.constant 0 : index
    %c0_34 = arith.constant 0 : index
    %54 = vector.load %arg5[%c1_31, %c0_32, %c0_33, %c0_34] : memref<3x3x128x128xbf16, #tpu.memory_space<vmem>>, vector<1x1x128x128xbf16>
    %55 = vector.shape_cast %54 : vector<1x1x128x128xbf16> to vector<128x128xbf16>
    %cst_35 = arith.constant dense<0.000000e+00> : vector<160x128xf32>
    %56 = tpu.matmul %53, %55, %cst_35 {dimension_numbers = #tpu.dot_dimension_numbers<[1], [0], [0], [1], [0, 0, 1, 1], [], []>} : vector<160x128xbf16>, vector<128x128xbf16>, vector<160x128xf32> -> vector<160x128xf32>
    %57 = arith.addf %51, %56 : vector<160x128xf32>
    %58 = vector.extract_strided_slice %32 {offsets = [42, 0], sizes = [160, 128], strides = [1, 1]} : vector<244x128xf32> to vector<160x128xf32>
    %59 = arith.truncf %58 : vector<160x128xf32> to vector<160x128xbf16>
    %c1_36 = arith.constant 1 : index
    %c1_37 = arith.constant 1 : index
    %c0_38 = arith.constant 0 : index
    %c0_39 = arith.constant 0 : index
    %60 = vector.load %arg5[%c1_36, %c1_37, %c0_38, %c0_39] : memref<3x3x128x128xbf16, #tpu.memory_space<vmem>>, vector<1x1x128x128xbf16>
    %61 = vector.shape_cast %60 : vector<1x1x128x128xbf16> to vector<128x128xbf16>
    %cst_40 = arith.constant dense<0.000000e+00> : vector<160x128xf32>
    %62 = tpu.matmul %59, %61, %cst_40 {dimension_numbers = #tpu.dot_dimension_numbers<[1], [0], [0], [1], [0, 0, 1, 1], [], []>} : vector<160x128xbf16>, vector<128x128xbf16>, vector<160x128xf32> -> vector<160x128xf32>
    %63 = arith.addf %57, %62 : vector<160x128xf32>
    %64 = vector.extract_strided_slice %32 {offsets = [44, 0], sizes = [160, 128], strides = [1, 1]} : vector<244x128xf32> to vector<160x128xf32>
    %65 = arith.truncf %64 : vector<160x128xf32> to vector<160x128xbf16>
    %c1_41 = arith.constant 1 : index
    %c2_42 = arith.constant 2 : index
    %c0_43 = arith.constant 0 : index
    %c0_44 = arith.constant 0 : index
    %66 = vector.load %arg5[%c1_41, %c2_42, %c0_43, %c0_44] : memref<3x3x128x128xbf16, #tpu.memory_space<vmem>>, vector<1x1x128x128xbf16>
    %67 = vector.shape_cast %66 : vector<1x1x128x128xbf16> to vector<128x128xbf16>
    %cst_45 = arith.constant dense<0.000000e+00> : vector<160x128xf32>
    %68 = tpu.matmul %65, %67, %cst_45 {dimension_numbers = #tpu.dot_dimension_numbers<[1], [0], [0], [1], [0, 0, 1, 1], [], []>} : vector<160x128xbf16>, vector<128x128xbf16>, vector<160x128xf32> -> vector<160x128xf32>
    %69 = arith.addf %63, %68 : vector<160x128xf32>
    %70 = vector.extract_strided_slice %32 {offsets = [80, 0], sizes = [160, 128], strides = [1, 1]} : vector<244x128xf32> to vector<160x128xf32>
    %71 = arith.truncf %70 : vector<160x128xf32> to vector<160x128xbf16>
    %c2_46 = arith.constant 2 : index
    %c0_47 = arith.constant 0 : index
    %c0_48 = arith.constant 0 : index
    %c0_49 = arith.constant 0 : index
    %72 = vector.load %arg5[%c2_46, %c0_47, %c0_48, %c0_49] : memref<3x3x128x128xbf16, #tpu.memory_space<vmem>>, vector<1x1x128x128xbf16>
    %73 = vector.shape_cast %72 : vector<1x1x128x128xbf16> to vector<128x128xbf16>
    %cst_50 = arith.constant dense<0.000000e+00> : vector<160x128xf32>
    %74 = tpu.matmul %71, %73, %cst_50 {dimension_numbers = #tpu.dot_dimension_numbers<[1], [0], [0], [1], [0, 0, 1, 1], [], []>} : vector<160x128xbf16>, vector<128x128xbf16>, vector<160x128xf32> -> vector<160x128xf32>
    %75 = arith.addf %69, %74 : vector<160x128xf32>
    %76 = vector.extract_strided_slice %32 {offsets = [82, 0], sizes = [160, 128], strides = [1, 1]} : vector<244x128xf32> to vector<160x128xf32>
    %77 = arith.truncf %76 : vector<160x128xf32> to vector<160x128xbf16>
    %c2_51 = arith.constant 2 : index
    %c1_52 = arith.constant 1 : index
    %c0_53 = arith.constant 0 : index
    %c0_54 = arith.constant 0 : index
    %78 = vector.load %arg5[%c2_51, %c1_52, %c0_53, %c0_54] : memref<3x3x128x128xbf16, #tpu.memory_space<vmem>>, vector<1x1x128x128xbf16>
    %79 = vector.shape_cast %78 : vector<1x1x128x128xbf16> to vector<128x128xbf16>
    %cst_55 = arith.constant dense<0.000000e+00> : vector<160x128xf32>
    %80 = tpu.matmul %77, %79, %cst_55 {dimension_numbers = #tpu.dot_dimension_numbers<[1], [0], [0], [1], [0, 0, 1, 1], [], []>} : vector<160x128xbf16>, vector<128x128xbf16>, vector<160x128xf32> -> vector<160x128xf32>
    %81 = arith.addf %75, %80 : vector<160x128xf32>
    %82 = vector.extract_strided_slice %32 {offsets = [84, 0], sizes = [160, 128], strides = [1, 1]} : vector<244x128xf32> to vector<160x128xf32>
    %83 = arith.truncf %82 : vector<160x128xf32> to vector<160x128xbf16>
    %c2_56 = arith.constant 2 : index
    %c2_57 = arith.constant 2 : index
    %c0_58 = arith.constant 0 : index
    %c0_59 = arith.constant 0 : index
    %84 = vector.load %arg5[%c2_56, %c2_57, %c0_58, %c0_59] : memref<3x3x128x128xbf16, #tpu.memory_space<vmem>>, vector<1x1x128x128xbf16>
    %85 = vector.shape_cast %84 : vector<1x1x128x128xbf16> to vector<128x128xbf16>
    %cst_60 = arith.constant dense<0.000000e+00> : vector<160x128xf32>
    %86 = tpu.matmul %83, %85, %cst_60 {dimension_numbers = #tpu.dot_dimension_numbers<[1], [0], [0], [1], [0, 0, 1, 1], [], []>} : vector<160x128xbf16>, vector<128x128xbf16>, vector<160x128xf32> -> vector<160x128xf32>
    %87 = arith.addf %81, %86 : vector<160x128xf32>
    %c0_61 = arith.constant 0 : index
    %c0_62 = arith.constant 0 : index
    %88 = vector.load %arg9[%c0_61, %c0_62] : memref<1x128xf32, #tpu.memory_space<vmem>>, vector<1x128xf32>
    %89 = vector.broadcast %88 : vector<1x128xf32> to vector<160x128xf32>
    %90 = arith.mulf %87, %89 : vector<160x128xf32>
    %c0_63 = arith.constant 0 : index
    %c0_64 = arith.constant 0 : index
    %91 = vector.load %arg10[%c0_63, %c0_64] : memref<1x128xf32, #tpu.memory_space<vmem>>, vector<1x128xf32>
    %92 = vector.broadcast %91 : vector<1x128xf32> to vector<160x128xf32>
    %93 = arith.addf %90, %92 : vector<160x128xf32>
    %cst_65 = arith.constant 0.000000e+00 : f32
    %94 = vector.broadcast %cst_65 : f32 to vector<160x128xf32>
    %95 = arith.maximumf %93, %94 : vector<160x128xf32>
    %96 = arith.truncf %95 : vector<160x128xf32> to vector<160x128xbf16>
    %c0_66 = arith.constant 0 : index
    %c0_67 = arith.constant 0 : index
    %97 = vector.load %arg6[%c0_66, %c0_67] : memref<128x128xbf16, #tpu.memory_space<vmem>>, vector<128x128xbf16>
    %cst_68 = arith.constant dense<0.000000e+00> : vector<160x128xf32>
    %98 = tpu.matmul %96, %97, %cst_68 {dimension_numbers = #tpu.dot_dimension_numbers<[1], [0], [0], [1], [0, 0, 1, 1], [], []>} : vector<160x128xbf16>, vector<128x128xbf16>, vector<160x128xf32> -> vector<160x128xf32>
    %c0_69 = arith.constant 0 : index
    %c0_70 = arith.constant 0 : index
    %99 = vector.load %arg11[%c0_69, %c0_70] : memref<1x128xf32, #tpu.memory_space<vmem>>, vector<1x128xf32>
    %100 = vector.broadcast %99 : vector<1x128xf32> to vector<160x128xf32>
    %101 = arith.mulf %98, %100 : vector<160x128xf32>
    %c0_71 = arith.constant 0 : index
    %c0_72 = arith.constant 0 : index
    %102 = vector.load %arg12[%c0_71, %c0_72] : memref<1x128xf32, #tpu.memory_space<vmem>>, vector<1x128xf32>
    %103 = vector.broadcast %102 : vector<1x128xf32> to vector<160x128xf32>
    %104 = arith.addf %101, %103 : vector<160x128xf32>
    %105 = vector.extract_strided_slice %17 {offsets = [42, 0], sizes = [160, 128], strides = [1, 1]} : vector<244x128xf32> to vector<160x128xf32>
    %106 = arith.addf %104, %105 : vector<160x128xf32>
    %cst_73 = arith.constant 0.000000e+00 : f32
    %107 = vector.broadcast %cst_73 : f32 to vector<160x128xf32>
    %108 = arith.maximumf %106, %107 : vector<160x128xf32>
    %c0_74 = arith.constant 0 : index
    %c0_75 = arith.constant 0 : index
    %c0_76 = arith.constant 0 : index
    %109 = vector.load %arg13[%c0_74, %c0_75, %c0_76] : memref<1x160x128xf32, #tpu.memory_space<vmem>>, vector<1x160x128xf32>
    %110 = vector.shape_cast %109 : vector<1x160x128xf32> to vector<160x128xf32>
    %111 = vector.shape_cast %108 : vector<160x128xf32> to vector<1x160x128xf32>
    tpu.vector_store %arg13[%c0_74, %c0_75, %c0_76], %111 {strides = array<i32>} : memref<1x160x128xf32, #tpu.memory_space<vmem>>, vector<1x160x128xf32>,
    return
  }
  func.func @transform_1(%arg0: i32, %arg1: i32) -> (i32, i32, i32) {
    %c0_i32 = arith.constant 0 : i32
    %c0_i32_0 = arith.constant 0 : i32
    %c0_i32_1 = arith.constant 0 : i32
    return %arg1, %c0_i32, %c0_i32_0 : i32, i32, i32
  }
  func.func @transform_2(%arg0: i32, %arg1: i32) -> (i32, i32) {
    %c0_i32 = arith.constant 0 : i32
    %c0_i32_0 = arith.constant 0 : i32
    %c0_i32_1 = arith.constant 0 : i32
    return %c0_i32, %c0_i32_0 : i32, i32
  }
  func.func @transform_3(%arg0: i32, %arg1: i32) -> (i32, i32, i32, i32) {
    %c0_i32 = arith.constant 0 : i32
    %c0_i32_0 = arith.constant 0 : i32
    %c0_i32_1 = arith.constant 0 : i32
    %c0_i32_2 = arith.constant 0 : i32
    %c0_i32_3 = arith.constant 0 : i32
    return %c0_i32, %c0_i32_0, %c0_i32_1, %c0_i32_2 : i32, i32, i32, i32
  }
  func.func @transform_4(%arg0: i32, %arg1: i32) -> (i32, i32) {
    %c0_i32 = arith.constant 0 : i32
    %c0_i32_0 = arith.constant 0 : i32
    %c0_i32_1 = arith.constant 0 : i32
    return %c0_i32, %c0_i32_0 : i32, i32
  }
  func.func @transform_5(%arg0: i32, %arg1: i32) -> (i32, i32) {
    %c0_i32 = arith.constant 0 : i32
    %c0_i32_0 = arith.constant 0 : i32
    %c0_i32_1 = arith.constant 0 : i32
    return %c0_i32, %c0_i32_0 : i32, i32
  }
  func.func @transform_6(%arg0: i32, %arg1: i32) -> (i32, i32) {
    %c0_i32 = arith.constant 0 : i32
    %c0_i32_0 = arith.constant 0 : i32
    %c0_i32_1 = arith.constant 0 : i32
    return %c0_i32, %c0_i32_0 : i32, i32
  }
  func.func @transform_7(%arg0: i32, %arg1: i32) -> (i32, i32) {
    %c0_i32 = arith.constant 0 : i32
    %c0_i32_0 = arith.constant 0 : i32
    %c0_i32_1 = arith.constant 0 : i32
    return %c0_i32, %c0_i32_0 : i32, i32
  }
  func.func @transform_8(%arg0: i32, %arg1: i32) -> (i32, i32) {
    %c0_i32 = arith.constant 0 : i32
    %c0_i32_0 = arith.constant 0 : i32
    %c0_i32_1 = arith.constant 0 : i32
    return %c0_i32, %c0_i32_0 : i32, i32
  }
  func.func @transform_9(%arg0: i32, %arg1: i32) -> (i32, i32) {
    %c0_i32 = arith.constant 0 : i32
    %c0_i32_0 = arith.constant 0 : i32
    %c0_i32_1 = arith.constant 0 : i32
    return %c0_i32, %c0_i32_0 : i32, i32
  }
  func.func @transform_10(%arg0: i32, %arg1: i32) -> (i32, i32) {
    %c0_i32 = arith.constant 0 : i32
    %c0_i32_0 = arith.constant 0 : i32
    %c0_i32_1 = arith.constant 0 : i32
    return %c0_i32, %c0_i32_0 : i32, i32
  }
  func.func @transform_11(%arg0: i32, %arg1: i32) -> (i32, i32, i32) {
    %c0_i32 = arith.constant 0 : i32
    %c0_i32_0 = arith.constant 0 : i32
    return %arg0, %arg1, %c0_i32 : i32, i32, i32
  }
}

</mosaic_0001>

<llo_original>
// kernel: tpu_custom_call.1
$region0: #{tpu_custom_call.1}
  #allocation0 [shape = 'u32[]', space=smem, size = 0x4, offset = 0x4, fixed_abs, tag = 'smem constant byte address 0x4 - core index']
  #allocation1 [shape = 'u32[72,128]{1,0:T(1,128)}', space=vmem, size = 0x9000, scoped, tag = 'internal scratch']
  #allocation2 [shape = 'f32[2,244,128]{2,1,0:T(8,128)}', space=vmem, size = 0x3e000, scoped, tag = 'scratch operand']
  #allocation3 [shape = 's32[2]{0}', space=sflag, size = 0x8, scoped, tag = 'scratch operand']
  #allocation6 [shape = 's32[]', space=sflag, size = 0x4, offset = 0, fixed_abs, tag = 'sflag constant byte address 0x0 - dummy sync flag']
  #allocation7 [shape = 's32[]', space=sflag, size = 0x4, offset = 0, fixed_abs, tag = 'sflag constant byte address 0x0 - dummy sync flag']
  %s0 = inlined_call_operand.vmem [shape: f32[2,404,128], index: 0, kind: input, shape index: {}]
  %s1 = inlined_call_operand.vmem [shape: f32[2,244,1], index: 1, kind: input, shape index: {}]
  %s2 = inlined_call_operand.vmem [shape: bf16[128,128], index: 2, kind: input, shape index: {}]
  %s3 = inlined_call_operand.vmem [shape: bf16[3,3,128,128], index: 3, kind: input, shape index: {}]
  %s4 = inlined_call_operand.vmem [shape: bf16[128,128], index: 4, kind: input, shape index: {}]
  %s5 = inlined_call_operand.vmem [shape: f32[1,128], index: 5, kind: input, shape index: {}]
  %s6 = inlined_call_operand.vmem [shape: f32[1,128], index: 6, kind: input, shape index: {}]
  %s7 = inlined_call_operand.vmem [shape: f32[1,128], index: 7, kind: input, shape index: {}]
  %s8 = inlined_call_operand.vmem [shape: f32[1,128], index: 8, kind: input, shape index: {}]
  %s9 = inlined_call_operand.vmem [shape: f32[1,128], index: 9, kind: input, shape index: {}]
  %s10 = inlined_call_operand.vmem [shape: f32[1,128], index: 10, kind: input, shape index: {}]
  %s11 = inlined_call_operand.hbm [shape: f32[2,320,128], index: 11, kind: output, shape index: {}]
  %s12 = sld [smem:[#allocation0]]
  $region125: #{tpu_custom_call.1} parent=0
    _
  %s14 = ssub.s32 1, %s12
  %s15 = scalar_select 0, %s14, %s12
  $region1: #{tpu_custom_call.1} parent=0
    #allocation4 [shape = 'u8[163840]{0}', space=vmem, size = 0x28000, scoped, tag = 'output window, operand 0']
    #allocation5 [shape = 's32[2]{0}', space=sflag, size = 0x8, scoped, tag = 'scoped memory for tpu_custom_call.1']
    %16 = vsyncpa [#allocation5], 0
    %s17 = scalar_lea.sflag [#allocation5], 1
    %18 = vsyncpa %s17, 0
    loop: start=0, step=1, limit=6
    $region2: #{tpu_custom_call.1} parent=1 // loop_pre_header
      _
    $region3: #{tpu_custom_call.1} parent=1 // loop_header
      %s20 = sphi 0, %s24
      %p21 = scmp.ge.s32.totalorder %s20, 6
      %s27 = sphi 0, %s39
      %s28 = sphi 0, %s35
      %s29 = sphi 0, %s27
      %s30 = sphi 0, %s28
      %s31 = sphi 0, %s29
      %s32 = sphi 0, %s30
      %s42 = sphi 0, %s44
      %s45 = sphi 0, %s42
      %s46 = sphi 0, %s45
      %s62 = sphi 0, %s46
      %s66 = sphi 0, %s66
      %s68 = sphi 0, %s66
      %s69 = sphi 0, %s68
      %s83 = sphi 0, %s69
      %s87 = sphi 0, %s87
      %s89 = sphi 0, %s87
      %s90 = sphi 0, %s89
      %s104 = sphi 0, %s90
      %s108 = sphi 0, %s108
      %s110 = sphi 0, %s108
      %s111 = sphi 0, %s110
      %s125 = sphi 0, %s111
      %s129 = sphi 0, %s129
      %s131 = sphi 0, %s129
      %s132 = sphi 0, %s131
      %s146 = sphi 0, %s132
      %s150 = sphi 0, %s150
      %s152 = sphi 0, %s150
      %s153 = sphi 0, %s152
      %s167 = sphi 0, %s153
      %s171 = sphi 0, %s171
      %s173 = sphi 0, %s171
      %s174 = sphi 0, %s173
      %s188 = sphi 0, %s174
      %s192 = sphi 0, %s192
      %s194 = sphi 0, %s192
      %s195 = sphi 0, %s194
      %s209 = sphi 0, %s195
      %s213 = sphi 0, %s213
      %s215 = sphi 0, %s213
      %s216 = sphi 0, %s215
      %s230 = sphi 0, %s216
      %s234 = sphi 0, %s234
      %s236 = sphi 0, %s234
      %s237 = sphi 0, %s236
      %s251 = sphi 0, %s237
      %s259 = sphi 0, %s261
      %s262 = sphi 0, %s259
      %s263 = sphi 0, %s262
      %s279 = sphi 0, %s263
    $region4: #{tpu_custom_call.1} parent=1 // loop_header_branch
      %23 = sbr.rel (%p21) target = $region8
    $region5: #{tpu_custom_call.1} parent=1 // loop_body
      %s25 = ssub.s32 %s20, 1
      %s26 = ssub.s32 %s20, 2
      %s33 = sadd.s32 1, %s28
      %p34 = scmp.ge.s32.totalorder %s33, 2
      %s35 = scalar_select %p34, 0, %s33
      %s36 = sadd.s32 1, %s27
      %s37 = scalar_select %p34, %s36, %s27
      %p38 = scmp.ge.s32.totalorder %s37, 2
      %s39 = scalar_select %p38, 0, %s37
      %s40 = ssub.s32 %s28, %s35
      %p41 = scmp.eq.s32.totalorder %s40, 0
      %s43 = sadd.s32 %s42, 1
      %s44 = scalar_select %p41, %s42, %s43
      %p47 = pneg %p41
      %p48 = scmp.eq.s32.totalorder %s20, 3
      %p49 = por %p47, %p48
      %p50 = scmp.ne.s32.totalorder %s42, %s45
      %p51 = scmp.eq.s32.totalorder %s20, 0
      %p52 = por %p50, %p51
      %p53 = scmp.ne.s32.totalorder %s42, %s45
      %p54 = scmp.eq.s32.totalorder %s25, 3
      %p55 = por %p53, %p54
      %p56 = scmp.ne.s32.totalorder %s45, %s46
      %p57 = scmp.eq.s32.totalorder %s25, 0
      %p58 = por %p56, %p57
      %p59 = scmp.ne.s32.totalorder %s45, %s46
      %p60 = scmp.eq.s32.totalorder %s26, 3
      %p61 = por %p59, %p60
      %p63 = scmp.ne.s32.totalorder %s46, %s62
      %p64 = scmp.eq.s32.totalorder %s26, 0
      %p65 = por %p63, %p64
      %s67 = sadd.s32 %s66, 1
      %p70 = scmp.eq.s32.totalorder %s20, 3
      %p71 = scmp.ne.s32.totalorder %s66, %s68
      %p72 = scmp.eq.s32.totalorder %s20, 0
      %p73 = por %p71, %p72
      %p74 = scmp.ne.s32.totalorder %s66, %s68
      %p75 = scmp.eq.s32.totalorder %s25, 3
      %p76 = por %p74, %p75
      %p77 = scmp.ne.s32.totalorder %s68, %s69
      %p78 = scmp.eq.s32.totalorder %s25, 0
      %p79 = por %p77, %p78
      %p80 = scmp.ne.s32.totalorder %s68, %s69
      %p81 = scmp.eq.s32.totalorder %s26, 3
      %p82 = por %p80, %p81
      %p84 = scmp.ne.s32.totalorder %s69, %s83
      %p85 = scmp.eq.s32.totalorder %s26, 0
      %p86 = por %p84, %p85
      %s88 = sadd.s32 %s87, 1
      %p91 = scmp.eq.s32.totalorder %s20, 3
      %p92 = scmp.ne.s32.totalorder %s87, %s89
      %p93 = scmp.eq.s32.totalorder %s20, 0
      %p94 = por %p92, %p93
      %p95 = scmp.ne.s32.totalorder %s87, %s89
      %p96 = scmp.eq.s32.totalorder %s25, 3
      %p97 = por %p95, %p96
      %p98 = scmp.ne.s32.totalorder %s89, %s90
      %p99 = scmp.eq.s32.totalorder %s25, 0
      %p100 = por %p98, %p99
      %p101 = scmp.ne.s32.totalorder %s89, %s90
      %p102 = scmp.eq.s32.totalorder %s26, 3
      %p103 = por %p101, %p102
      %p105 = scmp.ne.s32.totalorder %s90, %s104
      %p106 = scmp.eq.s32.totalorder %s26, 0
      %p107 = por %p105, %p106
      %s109 = sadd.s32 %s108, 1
      %p112 = scmp.eq.s32.totalorder %s20, 3
      %p113 = scmp.ne.s32.totalorder %s108, %s110
      %p114 = scmp.eq.s32.totalorder %s20, 0
      %p115 = por %p113, %p114
      %p116 = scmp.ne.s32.totalorder %s108, %s110
      %p117 = scmp.eq.s32.totalorder %s25, 3
      %p118 = por %p116, %p117
      %p119 = scmp.ne.s32.totalorder %s110, %s111
      %p120 = scmp.eq.s32.totalorder %s25, 0
      %p121 = por %p119, %p120
      %p122 = scmp.ne.s32.totalorder %s110, %s111
      %p123 = scmp.eq.s32.totalorder %s26, 3
      %p124 = por %p122, %p123
      %p126 = scmp.ne.s32.totalorder %s111, %s125
      %p127 = scmp.eq.s32.totalorder %s26, 0
      %p128 = por %p126, %p127
      %s130 = sadd.s32 %s129, 1
      %p133 = scmp.eq.s32.totalorder %s20, 3
      %p134 = scmp.ne.s32.totalorder %s129, %s131
      %p135 = scmp.eq.s32.totalorder %s20, 0
      %p136 = por %p134, %p135
      %p137 = scmp.ne.s32.totalorder %s129, %s131
      %p138 = scmp.eq.s32.totalorder %s25, 3
      %p139 = por %p137, %p138
      %p140 = scmp.ne.s32.totalorder %s131, %s132
      %p141 = scmp.eq.s32.totalorder %s25, 0
      %p142 = por %p140, %p141
      %p143 = scmp.ne.s32.totalorder %s131, %s132
      %p144 = scmp.eq.s32.totalorder %s26, 3
      %p145 = por %p143, %p144
      %p147 = scmp.ne.s32.totalorder %s132, %s146
      %p148 = scmp.eq.s32.totalorder %s26, 0
      %p149 = por %p147, %p148
      %s151 = sadd.s32 %s150, 1
      %p154 = scmp.eq.s32.totalorder %s20, 3
      %p155 = scmp.ne.s32.totalorder %s150, %s152
      %p156 = scmp.eq.s32.totalorder %s20, 0
      %p157 = por %p155, %p156
      %p158 = scmp.ne.s32.totalorder %s150, %s152
      %p159 = scmp.eq.s32.totalorder %s25, 3
      %p160 = por %p158, %p159
      %p161 = scmp.ne.s32.totalorder %s152, %s153
      %p162 = scmp.eq.s32.totalorder %s25, 0
      %p163 = por %p161, %p162
      %p164 = scmp.ne.s32.totalorder %s152, %s153
      %p165 = scmp.eq.s32.totalorder %s26, 3
      %p166 = por %p164, %p165
      %p168 = scmp.ne.s32.totalorder %s153, %s167
      %p169 = scmp.eq.s32.totalorder %s26, 0
      %p170 = por %p168, %p169
      %s172 = sadd.s32 %s171, 1
      %p175 = scmp.eq.s32.totalorder %s20, 3
      %p176 = scmp.ne.s32.totalorder %s171, %s173
      %p177 = scmp.eq.s32.totalorder %s20, 0
      %p178 = por %p176, %p177
      %p179 = scmp.ne.s32.totalorder %s171, %s173
      %p180 = scmp.eq.s32.totalorder %s25, 3
      %p181 = por %p179, %p180
      %p182 = scmp.ne.s32.totalorder %s173, %s174
      %p183 = scmp.eq.s32.totalorder %s25, 0
      %p184 = por %p182, %p183
      %p185 = scmp.ne.s32.totalorder %s173, %s174
      %p186 = scmp.eq.s32.totalorder %s26, 3
      %p187 = por %p185, %p186
      %p189 = scmp.ne.s32.totalorder %s174, %s188
      %p190 = scmp.eq.s32.totalorder %s26, 0
      %p191 = por %p189, %p190
      %s193 = sadd.s32 %s192, 1
      %p196 = scmp.eq.s32.totalorder %s20, 3
      %p197 = scmp.ne.s32.totalorder %s192, %s194
      %p198 = scmp.eq.s32.totalorder %s20, 0
      %p199 = por %p197, %p198
      %p200 = scmp.ne.s32.totalorder %s192, %s194
      %p201 = scmp.eq.s32.totalorder %s25, 3
      %p202 = por %p200, %p201
      %p203 = scmp.ne.s32.totalorder %s194, %s195
      %p204 = scmp.eq.s32.totalorder %s25, 0
      %p205 = por %p203, %p204
      %p206 = scmp.ne.s32.totalorder %s194, %s195
      %p207 = scmp.eq.s32.totalorder %s26, 3
      %p208 = por %p206, %p207
      %p210 = scmp.ne.s32.totalorder %s195, %s209
      %p211 = scmp.eq.s32.totalorder %s26, 0
      %p212 = por %p210, %p211
      %s214 = sadd.s32 %s213, 1
      %p217 = scmp.eq.s32.totalorder %s20, 3
      %p218 = scmp.ne.s32.totalorder %s213, %s215
      %p219 = scmp.eq.s32.totalorder %s20, 0
      %p220 = por %p218, %p219
      %p221 = scmp.ne.s32.totalorder %s213, %s215
      %p222 = scmp.eq.s32.totalorder %s25, 3
      %p223 = por %p221, %p222
      %p224 = scmp.ne.s32.totalorder %s215, %s216
      %p225 = scmp.eq.s32.totalorder %s25, 0
      %p226 = por %p224, %p225
      %p227 = scmp.ne.s32.totalorder %s215, %s216
      %p228 = scmp.eq.s32.totalorder %s26, 3
      %p229 = por %p227, %p228
      %p231 = scmp.ne.s32.totalorder %s216, %s230
      %p232 = scmp.eq.s32.totalorder %s26, 0
      %p233 = por %p231, %p232
      %s235 = sadd.s32 %s234, 1
      %p238 = scmp.eq.s32.totalorder %s20, 3
      %p239 = scmp.ne.s32.totalorder %s234, %s236
      %p240 = scmp.eq.s32.totalorder %s20, 0
      %p241 = por %p239, %p240
      %p242 = scmp.ne.s32.totalorder %s234, %s236
      %p243 = scmp.eq.s32.totalorder %s25, 3
      %p244 = por %p242, %p243
      %p245 = scmp.ne.s32.totalorder %s236, %s237
      %p246 = scmp.eq.s32.totalorder %s25, 0
      %p247 = por %p245, %p246
      %p248 = scmp.ne.s32.totalorder %s236, %s237
      %p249 = scmp.eq.s32.totalorder %s26, 3
      %p250 = por %p248, %p249
      %p252 = scmp.ne.s32.totalorder %s237, %s251
      %p253 = scmp.eq.s32.totalorder %s26, 0
      %p254 = por %p252, %p253
      %s255 = ssub.s32 %s27, %s39
      %s256 = ssub.s32 %s28, %s35
      %s257 = sor.u32 %s255, %s256
      %p258 = scmp.eq.s32.totalorder %s257, 0
      %s260 = sadd.s32 %s259, 1
      %s261 = scalar_select %p258, %s259, %s260
      %p264 = pneg %p258
      %p265 = scmp.eq.s32.totalorder %s20, 3
      %p266 = por %p264, %p265
      %p267 = scmp.ne.s32.totalorder %s259, %s262
      %p268 = scmp.eq.s32.totalorder %s20, 0
      %p269 = por %p267, %p268
      %p270 = scmp.ne.s32.totalorder %s259, %s262
      %p271 = scmp.eq.s32.totalorder %s25, 3
      %p272 = por %p270, %p271
      %p273 = scmp.ne.s32.totalorder %s262, %s263
      %p274 = scmp.eq.s32.totalorder %s25, 0
      %p275 = por %p273, %p274
      %p276 = scmp.ne.s32.totalorder %s262, %s263
      %p277 = scmp.eq.s32.totalorder %s26, 3
      %p278 = por %p276, %p277
      %p280 = scmp.ne.s32.totalorder %s263, %s279
      %p281 = scmp.eq.s32.totalorder %s26, 0
      %p282 = por %p280, %p281
      %p283 = scmp.le.s32.totalorder 1, %s20
      %p284 = scmp.lt.s32.totalorder %s20, 5
      %p285 = pnand %p283, %p284
      %p286 = pneg %p285
      // Predicated region
      $region9: #{tpu_custom_call.1} parent=5 // pred_check
        _
      $region10: #{tpu_custom_call.1} parent=5 // pred_check_branch
        %288 = sbr.rel (%p285) target = $region12
      $region11: #{tpu_custom_call.1} parent=5 // pred_region
        %s289 = ssub.s32 %s20, 1
        // Predicated region
        $region13: #{tpu_custom_call.1} parent=11 // pred_check
          %p290 = pneg %p79
        $region14: #{tpu_custom_call.1} parent=11 // pred_check_branch
          %292 = sbr.rel (%p290) target = $region16
        $region15: #{tpu_custom_call.1} parent=11 // pred_region
          _
        $region16: #{tpu_custom_call.1} parent=11 // pred_fallthru
          _
        // Predicated region
        $region17: #{tpu_custom_call.1} parent=11 // pred_check
          %p293 = pneg %p100
        $region18: #{tpu_custom_call.1} parent=11 // pred_check_branch
          %295 = sbr.rel (%p293) target = $region20
        $region19: #{tpu_custom_call.1} parent=11 // pred_region
          _
        $region20: #{tpu_custom_call.1} parent=11 // pred_fallthru
          _
        // Predicated region
        $region21: #{tpu_custom_call.1} parent=11 // pred_check
          %p296 = pneg %p121
        $region22: #{tpu_custom_call.1} parent=11 // pred_check_branch
          %298 = sbr.rel (%p296) target = $region24
        $region23: #{tpu_custom_call.1} parent=11 // pred_region
          _
        $region24: #{tpu_custom_call.1} parent=11 // pred_fallthru
          _
        // Predicated region
        $region25: #{tpu_custom_call.1} parent=11 // pred_check
          %p299 = pneg %p142
        $region26: #{tpu_custom_call.1} parent=11 // pred_check_branch
          %301 = sbr.rel (%p299) target = $region28
        $region27: #{tpu_custom_call.1} parent=11 // pred_region
          _
        $region28: #{tpu_custom_call.1} parent=11 // pred_fallthru
          _
        // Predicated region
        $region29: #{tpu_custom_call.1} parent=11 // pred_check
          %p302 = pneg %p163
        $region30: #{tpu_custom_call.1} parent=11 // pred_check_branch
          %304 = sbr.rel (%p302) target = $region32
        $region31: #{tpu_custom_call.1} parent=11 // pred_region
          _
        $region32: #{tpu_custom_call.1} parent=11 // pred_fallthru
          _
        // Predicated region
        $region33: #{tpu_custom_call.1} parent=11 // pred_check
          %p305 = pneg %p184
        $region34: #{tpu_custom_call.1} parent=11 // pred_check_branch
          %307 = sbr.rel (%p305) target = $region36
        $region35: #{tpu_custom_call.1} parent=11 // pred_region
          _
        $region36: #{tpu_custom_call.1} parent=11 // pred_fallthru
          _
        // Predicated region
        $region37: #{tpu_custom_call.1} parent=11 // pred_check
          %p308 = pneg %p205
        $region38: #{tpu_custom_call.1} parent=11 // pred_check_branch
          %310 = sbr.rel (%p308) target = $region40
        $region39: #{tpu_custom_call.1} parent=11 // pred_region
          _
        $region40: #{tpu_custom_call.1} parent=11 // pred_fallthru
          _
        // Predicated region
        $region41: #{tpu_custom_call.1} parent=11 // pred_check
          %p311 = pneg %p226
        $region42: #{tpu_custom_call.1} parent=11 // pred_check_branch
          %313 = sbr.rel (%p311) target = $region44
        $region43: #{tpu_custom_call.1} parent=11 // pred_region
          _
        $region44: #{tpu_custom_call.1} parent=11 // pred_fallthru
          _
        // Predicated region
        $region45: #{tpu_custom_call.1} parent=11 // pred_check
          %p314 = pneg %p247
        $region46: #{tpu_custom_call.1} parent=11 // pred_check_branch
          %316 = sbr.rel (%p314) target = $region48
        $region47: #{tpu_custom_call.1} parent=11 // pred_region
          _
        $region48: #{tpu_custom_call.1} parent=11 // pred_fallthru
          _
      $region12: #{tpu_custom_call.1} parent=5 // pred_fallthru
        _
      %p317 = scmp.lt.s32.totalorder %s20, 4
      // Predicated region
      $region49: #{tpu_custom_call.1} parent=5 // pred_check
        %p318 = pneg %p317
      $region50: #{tpu_custom_call.1} parent=5 // pred_check_branch
        %320 = sbr.rel (%p318) target = $region52
      $region51: #{tpu_custom_call.1} parent=5 // pred_region
        // Predicated region
        $region53: #{tpu_custom_call.1} parent=51 // pred_check
          %p321 = pneg %p52
        $region54: #{tpu_custom_call.1} parent=51 // pred_check_branch
          %323 = sbr.rel (%p321) target = $region56
        $region55: #{tpu_custom_call.1} parent=51 // pred_region
          %p324 = scmp.lt.s32.totalorder %s28, 1
          %s325 = scalar_select %p324, %s28, 1
          %s326 = smul.addr %s325, 31
          %s327 = smul.addr %s326, 8
          %s328 = scalar_lea.vmem %s1, %s327
        $region56: #{tpu_custom_call.1} parent=51 // pred_fallthru
          _
      $region52: #{tpu_custom_call.1} parent=5 // pred_fallthru
        _
      %p329 = scmp.le.s32.totalorder 1, %s20
      %p330 = scmp.lt.s32.totalorder %s20, 5
      %p331 = pnand %p329, %p330
      %p332 = pneg %p331
      // Predicated region
      $region57: #{tpu_custom_call.1} parent=5 // pred_check
        _
      $region58: #{tpu_custom_call.1} parent=5 // pred_check_branch
        %334 = sbr.rel (%p331) target = $region60
      $region59: #{tpu_custom_call.1} parent=5 // pred_region
        %s335 = ssub.s32 %s20, 1
        %p336 = scmp.lt.s32.totalorder %s30, 1
        %s337 = scalar_select %p336, %s30, 1
        %s338 = smul.addr %s337, 31
        %s339 = smul.addr %s338, 8
        %s340 = scalar_lea.vmem %s1, %s339
        %p341 = pneg %p58
        %p342 = pneg %p55
        %p343 = pneg %p79
        %p344 = pneg %p76
        %p345 = pneg %p100
        %p346 = pneg %p97
        %p347 = pneg %p121
        %p348 = pneg %p118
        %p349 = pneg %p142
        %p350 = pneg %p139
        %p351 = pneg %p163
        %p352 = pneg %p160
        %p353 = pneg %p184
        %p354 = pneg %p181
        %p355 = pneg %p205
        %p356 = pneg %p202
        %p357 = pneg %p226
        %p358 = pneg %p223
        %p359 = pneg %p247
        %p360 = pneg %p244
        %p361 = pneg %p275
        %p362 = pneg %p272
        %s363 = sand.u32 %s262, 1
        %s364 = scalar_lea.sflag [#allocation5], %s363
        %s365 = sand.u32 %s262, 1
        %s366 = smul.addr %s365, 160
        %s367 = scalar_lea.vmem [#allocation4], %s366
        %p368 = scmp.lt.s32.totalorder %s30, 1
        %s369 = scalar_select %p368, %s30, 1
        %s370 = smul.addr %s369, 31
        %s371 = smul.addr %s370, 8
        %s372 = scalar_lea.vmem %s1, %s371
        %s373 = smul.u32 20, %s30
        %p374 = scmp.lt.s32.totalorder %s30, 0
        %s375 = ssub.s32 0, %s30
        %s376 = scalar_select %p374, %s375, %s30
        %s377 = sand.u32 %s376, 1
        %s378 = ssub.s32 0, %s377
        %s379 = scalar_select %p374, %s378, %s377
        %p380 = scmp.eq.s32.totalorder %s30, 0
        // Predicated region
        $region61: #{tpu_custom_call.1} parent=59 // pred_check
          %p381 = pneg %p380
        $region62: #{tpu_custom_call.1} parent=59 // pred_check_branch
          %383 = sbr.rel (%p381) target = $region64
        $region63: #{tpu_custom_call.1} parent=59 // pred_region
          %s384 = smul.u32 %s30, 160
          %s385 = smul.u32 %s29, 408
          %s386 = sadd.s32 %s384, %s385
          %s387 = scalar_lea.vmem %s0, %s386
          %s388 = smul.u32 %s379, 248
          %s389 = scalar_lea.vmem [#allocation2], %s388
          %s390 = scalar_lea.sflag [#allocation3], %s379
          // Predicated region
          $region65: #{tpu_custom_call.1} parent=63 // pred_check
            _
          $region66: #{tpu_custom_call.1} parent=63 // pred_check_branch
            %392 = sbr.rel (0) target = $region68
          $region67: #{tpu_custom_call.1} parent=63 // pred_region
            %s393 = scalar_lea.vmem %s387, 240
            %s394 = scalar_lea.vmem %s389, 240 [#allocation2]
            loop: start=0, step=1, limit=1
            $region69: #{tpu_custom_call.1} parent=67 // loop_pre_header
              _
            $region70: #{tpu_custom_call.1} parent=67 // loop_header
              %s396 = sphi 0, %s400
              %p397 = scmp.ge.s32.totalorder %s396, 1
              %s401 = sphi %s387, %s387
              %s402 = sphi %s389, %s389
            $region71: #{tpu_custom_call.1} parent=67 // loop_header_branch
              %399 = sbr.rel (%p397) target = $region75
            $region72: #{tpu_custom_call.1} parent=67 // loop_body
              %v403 = vld [vmem:[%s401] sm:$0xff]
              %404 = vst [vmem:[%s402] sm:$0xff] %v403
              %v405 = vld [vmem:[%s401 + $0x8] sm:$0xff]
              %406 = vst [vmem:[%s402 + $0x8] sm:$0xff] %v405
              %v407 = vld [vmem:[%s401 + $0x10] sm:$0xff]
              %408 = vst [vmem:[%s402 + $0x10] sm:$0xff] %v407
              %v409 = vld [vmem:[%s401 + $0x18] sm:$0xff]
              %410 = vst [vmem:[%s402 + $0x18] sm:$0xff] %v409
              %v411 = vld [vmem:[%s401 + $0x20] sm:$0xff]
              %412 = vst [vmem:[%s402 + $0x20] sm:$0xff] %v411
              %v413 = vld [vmem:[%s401 + $0x28] sm:$0xff]
              %414 = vst [vmem:[%s402 + $0x28] sm:$0xff] %v413
              %v415 = vld [vmem:[%s401 + $0x30] sm:$0xff]
              %416 = vst [vmem:[%s402 + $0x30] sm:$0xff] %v415
              %v417 = vld [vmem:[%s401 + $0x38] sm:$0xff]
              %418 = vst [vmem:[%s402 + $0x38] sm:$0xff] %v417
              %v419 = vld [vmem:[%s401 + $0x40] sm:$0xff]
              %420 = vst [vmem:[%s402 + $0x40] sm:$0xff] %v419
              %v421 = vld [vmem:[%s401 + $0x48] sm:$0xff]
              %422 = vst [vmem:[%s402 + $0x48] sm:$0xff] %v421
              %v423 = vld [vmem:[%s401 + $0x50] sm:$0xff]
              %424 = vst [vmem:[%s402 + $0x50] sm:$0xff] %v423
              %v425 = vld [vmem:[%s401 + $0x58] sm:$0xff]
              %426 = vst [vmem:[%s402 + $0x58] sm:$0xff] %v425
              %v427 = vld [vmem:[%s401 + $0x60] sm:$0xff]
              %428 = vst [vmem:[%s402 + $0x60] sm:$0xff] %v427
              %v429 = vld [vmem:[%s401 + $0x68] sm:$0xff]
              %430 = vst [vmem:[%s402 + $0x68] sm:$0xff] %v429
              %v431 = vld [vmem:[%s401 + $0x70] sm:$0xff]
              %432 = vst [vmem:[%s402 + $0x70] sm:$0xff] %v431
              %v433 = vld [vmem:[%s401 + $0x78] sm:$0xff]
              %434 = vst [vmem:[%s402 + $0x78] sm:$0xff] %v433
              %v435 = vld [vmem:[%s401 + $0x80] sm:$0xff]
              %436 = vst [vmem:[%s402 + $0x80] sm:$0xff] %v435
              %v437 = vld [vmem:[%s401 + $0x88] sm:$0xff]
              %438 = vst [vmem:[%s402 + $0x88] sm:$0xff] %v437
              %v439 = vld [vmem:[%s401 + $0x90] sm:$0xff]
              %440 = vst [vmem:[%s402 + $0x90] sm:$0xff] %v439
              %v441 = vld [vmem:[%s401 + $0x98] sm:$0xff]
              %442 = vst [vmem:[%s402 + $0x98] sm:$0xff] %v441
              %v443 = vld [vmem:[%s401 + $0xa0] sm:$0xff]
              %444 = vst [vmem:[%s402 + $0xa0] sm:$0xff] %v443
              %v445 = vld [vmem:[%s401 + $0xa8] sm:$0xff]
              %446 = vst [vmem:[%s402 + $0xa8] sm:$0xff] %v445
              %v447 = vld [vmem:[%s401 + $0xb0] sm:$0xff]
              %448 = vst [vmem:[%s402 + $0xb0] sm:$0xff] %v447
              %v449 = vld [vmem:[%s401 + $0xb8] sm:$0xff]
              %450 = vst [vmem:[%s402 + $0xb8] sm:$0xff] %v449
              %v451 = vld [vmem:[%s401 + $0xc0] sm:$0xff]
              %452 = vst [vmem:[%s402 + $0xc0] sm:$0xff] %v451
              %v453 = vld [vmem:[%s401 + $0xc8] sm:$0xff]
              %454 = vst [vmem:[%s402 + $0xc8] sm:$0xff] %v453
              %v455 = vld [vmem:[%s401 + $0xd0] sm:$0xff]
              %456 = vst [vmem:[%s402 + $0xd0] sm:$0xff] %v455
              %v457 = vld [vmem:[%s401 + $0xd8] sm:$0xff]
              %458 = vst [vmem:[%s402 + $0xd8] sm:$0xff] %v457
              %v459 = vld [vmem:[%s401 + $0xe0] sm:$0xff]
              %460 = vst [vmem:[%s402 + $0xe0] sm:$0xff] %v459
              %v461 = vld [vmem:[%s401 + $0xe8] sm:$0xff]
              %462 = vst [vmem:[%s402 + $0xe8] sm:$0xff] %v461
            $region73: #{tpu_custom_call.1} parent=67 // loop_footer
              %s400 = sadd.s32 1, %s396
            $region74: #{tpu_custom_call.1} parent=67 // loop_footer_branch
              %395 = sbr.rel target = $region70
            $region75: #{tpu_custom_call.1} parent=67 // loop_exit
              _
            %s464 = ssub.s32 16, 1
            loop: start=0, step=1, limit=1
            $region76: #{tpu_custom_call.1} parent=67 // loop_pre_header
              _
            $region77: #{tpu_custom_call.1} parent=67 // loop_header
              %s466 = sphi 0, %s470
              %p467 = scmp.ge.s32.totalorder %s466, 1
              %s471 = sphi %s393, %s393
              %s472 = sphi %s394, %s394
            $region78: #{tpu_custom_call.1} parent=67 // loop_header_branch
              %469 = sbr.rel (%p467) target = $region82
            $region79: #{tpu_custom_call.1} parent=67 // loop_body
              %v473 = vld [vmem:[%s471] sm:%s464]
              %474 = vst [vmem:[%s472] sm:%s464] %v473
            $region80: #{tpu_custom_call.1} parent=67 // loop_footer
              %s470 = sadd.s32 1, %s466
            $region81: #{tpu_custom_call.1} parent=67 // loop_footer_branch
              %465 = sbr.rel target = $region77
            $region82: #{tpu_custom_call.1} parent=67 // loop_exit
              _
          $region68: #{tpu_custom_call.1} parent=63 // pred_fallthru
            _
          // Predicated region
          $region83: #{tpu_custom_call.1} parent=63 // pred_check
            _
          $region84: #{tpu_custom_call.1} parent=63 // pred_check_branch
            %477 = sbr.rel (0) target = $region86
          $region85: #{tpu_custom_call.1} parent=63 // pred_region
            %478 = vsyncadd %s390, 3904
          $region86: #{tpu_custom_call.1} parent=63 // pred_fallthru
            _
        $region64: #{tpu_custom_call.1} parent=59 // pred_fallthru
          _
        %s479 = smul.u32 %s379, 248
        %s480 = scalar_lea.vmem [#allocation2], %s479
        %s481 = scalar_lea.sflag [#allocation3], %s379
        %s482 = smul.u32 244, 1
        %s483 = sshll.u32 %s482, 4
        %484 = dma.done %s481, %s483
        %s485 = sadd.s32 %s30, 1
        %p486 = scmp.lt.s32.totalorder %s485, 2
        // Predicated region
        $region87: #{tpu_custom_call.1} parent=59 // pred_check
          %p487 = pneg %p486
        $region88: #{tpu_custom_call.1} parent=59 // pred_check_branch
          %489 = sbr.rel (%p487) target = $region90
        $region89: #{tpu_custom_call.1} parent=59 // pred_region
          %s490 = ssub.s32 1, %s379
          %s491 = smul.u32 %s485, 160
          %s492 = smul.u32 %s29, 408
          %s493 = sadd.s32 %s491, %s492
          %s494 = scalar_lea.vmem %s0, %s493
          %s495 = smul.u32 %s490, 248
          %s496 = scalar_lea.vmem [#allocation2], %s495
          %s497 = scalar_lea.sflag [#allocation3], %s490
          // Predicated region
          $region91: #{tpu_custom_call.1} parent=89 // pred_check
            _
          $region92: #{tpu_custom_call.1} parent=89 // pred_check_branch
            %499 = sbr.rel (0) target = $region94
          $region93: #{tpu_custom_call.1} parent=89 // pred_region
            %s500 = scalar_lea.vmem %s494, 240
            %s501 = scalar_lea.vmem %s496, 240 [#allocation2]
            loop: start=0, step=1, limit=1
            $region95: #{tpu_custom_call.1} parent=93 // loop_pre_header
              _
            $region96: #{tpu_custom_call.1} parent=93 // loop_header
              %s503 = sphi 0, %s507
              %p504 = scmp.ge.s32.totalorder %s503, 1
              %s508 = sphi %s494, %s494
              %s509 = sphi %s496, %s496
            $region97: #{tpu_custom_call.1} parent=93 // loop_header_branch
              %506 = sbr.rel (%p504) target = $region101
            $region98: #{tpu_custom_call.1} parent=93 // loop_body
              %v510 = vld [vmem:[%s508] sm:$0xff]
              %511 = vst [vmem:[%s509] sm:$0xff] %v510
              %v512 = vld [vmem:[%s508 + $0x8] sm:$0xff]
              %513 = vst [vmem:[%s509 + $0x8] sm:$0xff] %v512
              %v514 = vld [vmem:[%s508 + $0x10] sm:$0xff]
              %515 = vst [vmem:[%s509 + $0x10] sm:$0xff] %v514
              %v516 = vld [vmem:[%s508 + $0x18] sm:$0xff]
              %517 = vst [vmem:[%s509 + $0x18] sm:$0xff] %v516
              %v518 = vld [vmem:[%s508 + $0x20] sm:$0xff]
              %519 = vst [vmem:[%s509 + $0x20] sm:$0xff] %v518
              %v520 = vld [vmem:[%s508 + $0x28] sm:$0xff]
              %521 = vst [vmem:[%s509 + $0x28] sm:$0xff] %v520
              %v522 = vld [vmem:[%s508 + $0x30] sm:$0xff]
              %523 = vst [vmem:[%s509 + $0x30] sm:$0xff] %v522
              %v524 = vld [vmem:[%s508 + $0x38] sm:$0xff]
              %525 = vst [vmem:[%s509 + $0x38] sm:$0xff] %v524
              %v526 = vld [vmem:[%s508 + $0x40] sm:$0xff]
              %527 = vst [vmem:[%s509 + $0x40] sm:$0xff] %v526
              %v528 = vld [vmem:[%s508 + $0x48] sm:$0xff]
              %529 = vst [vmem:[%s509 + $0x48] sm:$0xff] %v528
              %v530 = vld [vmem:[%s508 + $0x50] sm:$0xff]
              %531 = vst [vmem:[%s509 + $0x50] sm:$0xff] %v530
              %v532 = vld [vmem:[%s508 + $0x58] sm:$0xff]
              %533 = vst [vmem:[%s509 + $0x58] sm:$0xff] %v532
              %v534 = vld [vmem:[%s508 + $0x60] sm:$0xff]
              %535 = vst [vmem:[%s509 + $0x60] sm:$0xff] %v534
              %v536 = vld [vmem:[%s508 + $0x68] sm:$0xff]
              %537 = vst [vmem:[%s509 + $0x68] sm:$0xff] %v536
              %v538 = vld [vmem:[%s508 + $0x70] sm:$0xff]
              %539 = vst [vmem:[%s509 + $0x70] sm:$0xff] %v538
              %v540 = vld [vmem:[%s508 + $0x78] sm:$0xff]
              %541 = vst [vmem:[%s509 + $0x78] sm:$0xff] %v540
              %v542 = vld [vmem:[%s508 + $0x80] sm:$0xff]
              %543 = vst [vmem:[%s509 + $0x80] sm:$0xff] %v542
              %v544 = vld [vmem:[%s508 + $0x88] sm:$0xff]
              %545 = vst [vmem:[%s509 + $0x88] sm:$0xff] %v544
              %v546 = vld [vmem:[%s508 + $0x90] sm:$0xff]
              %547 = vst [vmem:[%s509 + $0x90] sm:$0xff] %v546
              %v548 = vld [vmem:[%s508 + $0x98] sm:$0xff]
              %549 = vst [vmem:[%s509 + $0x98] sm:$0xff] %v548
              %v550 = vld [vmem:[%s508 + $0xa0] sm:$0xff]
              %551 = vst [vmem:[%s509 + $0xa0] sm:$0xff] %v550
              %v552 = vld [vmem:[%s508 + $0xa8] sm:$0xff]
              %553 = vst [vmem:[%s509 + $0xa8] sm:$0xff] %v552
              %v554 = vld [vmem:[%s508 + $0xb0] sm:$0xff]
              %555 = vst [vmem:[%s509 + $0xb0] sm:$0xff] %v554
              %v556 = vld [vmem:[%s508 + $0xb8] sm:$0xff]
              %557 = vst [vmem:[%s509 + $0xb8] sm:$0xff] %v556
              %v558 = vld [vmem:[%s508 + $0xc0] sm:$0xff]
              %559 = vst [vmem:[%s509 + $0xc0] sm:$0xff] %v558
              %v560 = vld [vmem:[%s508 + $0xc8] sm:$0xff]
              %561 = vst [vmem:[%s509 + $0xc8] sm:$0xff] %v560
              %v562 = vld [vmem:[%s508 + $0xd0] sm:$0xff]
              %563 = vst [vmem:[%s509 + $0xd0] sm:$0xff] %v562
              %v564 = vld [vmem:[%s508 + $0xd8] sm:$0xff]
              %565 = vst [vmem:[%s509 + $0xd8] sm:$0xff] %v564
              %v566 = vld [vmem:[%s508 + $0xe0] sm:$0xff]
              %567 = vst [vmem:[%s509 + $0xe0] sm:$0xff] %v566
              %v568 = vld [vmem:[%s508 + $0xe8] sm:$0xff]
              %569 = vst [vmem:[%s509 + $0xe8] sm:$0xff] %v568
            $region99: #{tpu_custom_call.1} parent=93 // loop_footer
              %s507 = sadd.s32 1, %s503
            $region100: #{tpu_custom_call.1} parent=93 // loop_footer_branch
              %502 = sbr.rel target = $region96
            $region101: #{tpu_custom_call.1} parent=93 // loop_exit
              _
            %s571 = ssub.s32 16, 1
            loop: start=0, step=1, limit=1
            $region102: #{tpu_custom_call.1} parent=93 // loop_pre_header
              _
            $region103: #{tpu_custom_call.1} parent=93 // loop_header
              %s573 = sphi 0, %s577
              %p574 = scmp.ge.s32.totalorder %s573, 1
              %s578 = sphi %s500, %s500
              %s579 = sphi %s501, %s501
            $region104: #{tpu_custom_call.1} parent=93 // loop_header_branch
              %576 = sbr.rel (%p574) target = $region108
            $region105: #{tpu_custom_call.1} parent=93 // loop_body
              %v580 = vld [vmem:[%s578] sm:%s571]
              %581 = vst [vmem:[%s579] sm:%s571] %v580
            $region106: #{tpu_custom_call.1} parent=93 // loop_footer
              %s577 = sadd.s32 1, %s573
            $region107: #{tpu_custom_call.1} parent=93 // loop_footer_branch
              %572 = sbr.rel target = $region103
            $region108: #{tpu_custom_call.1} parent=93 // loop_exit
              _
          $region94: #{tpu_custom_call.1} parent=89 // pred_fallthru
            _
          // Predicated region
          $region109: #{tpu_custom_call.1} parent=89 // pred_check
            _
          $region110: #{tpu_custom_call.1} parent=89 // pred_check_branch
            %584 = sbr.rel (0) target = $region112
          $region111: #{tpu_custom_call.1} parent=89 // pred_region
            %585 = vsyncadd %s497, 3904
          $region112: #{tpu_custom_call.1} parent=89 // pred_fallthru
            _
        $region90: #{tpu_custom_call.1} parent=59 // pred_fallthru
          _
        %v586 = vld [vmem:[%s480] sm:$0xff]
        %v587 = vld [vmem:[%s480 + $0x8] sm:$0xff]
        %v588 = vld [vmem:[%s480 + $0x10] sm:$0xff]
        %v589 = vld [vmem:[%s480 + $0x18] sm:$0xff]
        %v590 = vld [vmem:[%s480 + $0x20] sm:$0xff]
        %v591 = vld [vmem:[%s480 + $0x28] sm:$0xff]
        %v592 = vld [vmem:[%s480 + $0x30] sm:$0xff]
        %v593 = vld [vmem:[%s480 + $0x38] sm:$0xff]
        %v594 = vld [vmem:[%s480 + $0x40] sm:$0xff]
        %v595 = vld [vmem:[%s480 + $0x48] sm:$0xff]
        %v596 = vld [vmem:[%s480 + $0x50] sm:$0xff]
        %v597 = vld [vmem:[%s480 + $0x58] sm:$0xff]
        %v598 = vld [vmem:[%s480 + $0x60] sm:$0xff]
        %v599 = vld [vmem:[%s480 + $0x68] sm:$0xff]
        %v600 = vld [vmem:[%s480 + $0x70] sm:$0xff]
        %v601 = vld [vmem:[%s480 + $0x78] sm:$0xff]
        %v602 = vld [vmem:[%s480 + $0x80] sm:$0xff]
        %v603 = vld [vmem:[%s480 + $0x88] sm:$0xff]
        %v604 = vld [vmem:[%s480 + $0x90] sm:$0xff]
        %v605 = vld [vmem:[%s480 + $0x98] sm:$0xff]
        %v606 = vld [vmem:[%s480 + $0xa0] sm:$0xff]
        %v607 = vld [vmem:[%s480 + $0xa8] sm:$0xff]
        %v608 = vld [vmem:[%s480 + $0xb0] sm:$0xff]
        %v609 = vld [vmem:[%s480 + $0xb8] sm:$0xff]
        %v610 = vld [vmem:[%s480 + $0xc0] sm:$0xff]
        %v611 = vld [vmem:[%s480 + $0xc8] sm:$0xff]
        %v612 = vld [vmem:[%s480 + $0xd0] sm:$0xff]
        %v613 = vld [vmem:[%s480 + $0xd8] sm:$0xff]
        %v614 = vld [vmem:[%s480 + $0xe0] sm:$0xff]
        %v615 = vld [vmem:[%s480 + $0xe8] sm:$0xff]
        %v616 = vld [vmem:[%s480 + $0xf0] sm:$0xf]
        %v617 = vpack.c.bf16 %v587, %v586
        %v618 = vpack.c.bf16 %v589, %v588
        %v619 = vpack.c.bf16 %v591, %v590
        %v620 = vpack.c.bf16 %v593, %v592
        %v621 = vpack.c.bf16 %v595, %v594
        %v622 = vpack.c.bf16 %v597, %v596
        %v623 = vpack.c.bf16 %v599, %v598
        %v624 = vpack.c.bf16 %v601, %v600
        %v625 = vpack.c.bf16 %v603, %v602
        %v626 = vpack.c.bf16 %v605, %v604
        %v627 = vpack.c.bf16 %v607, %v606
        %v628 = vpack.c.bf16 %v609, %v608
        %v629 = vpack.c.bf16 %v611, %v610
        %v630 = vpack.c.bf16 %v613, %v612
        %v631 = vpack.c.bf16 %v615, %v614
        %v632 = vpack.c.bf16 %v616, %v616
        %v633 = vld [vmem:[%s2] sm:$0xf]
        %v634 = vld [vmem:[%s2 + $0x4] sm:$0xf]
        %v635 = vld [vmem:[%s2 + $0x8] sm:$0xf]
        %v636 = vld [vmem:[%s2 + $0xc] sm:$0xf]
        %v637 = vld [vmem:[%s2 + $0x10] sm:$0xf]
        %v638 = vld [vmem:[%s2 + $0x14] sm:$0xf]
        %v639 = vld [vmem:[%s2 + $0x18] sm:$0xf]
        %v640 = vld [vmem:[%s2 + $0x1c] sm:$0xf]
        %v641 = vld [vmem:[%s2 + $0x20] sm:$0xf]
        %v642 = vld [vmem:[%s2 + $0x24] sm:$0xf]
        %v643 = vld [vmem:[%s2 + $0x28] sm:$0xf]
        %v644 = vld [vmem:[%s2 + $0x2c] sm:$0xf]
        %v645 = vld [vmem:[%s2 + $0x30] sm:$0xf]
        %v646 = vld [vmem:[%s2 + $0x34] sm:$0xf]
        %v647 = vld [vmem:[%s2 + $0x38] sm:$0xf]
        %v648 = vld [vmem:[%s2 + $0x3c] sm:$0xf]
        %v665 = vunpack.c.l.b16 %v633
        %v666 = vunpack.c.l.b16 %v634
        %v667 = vunpack.c.l.b16 %v635
        %v668 = vunpack.c.l.b16 %v636
        %v669 = vunpack.c.l.b16 %v637
        %v670 = vunpack.c.l.b16 %v638
        %v671 = vunpack.c.l.b16 %v639
        %v672 = vunpack.c.l.b16 %v640
        %v673 = vunpack.c.l.b16 %v641
        %v674 = vunpack.c.l.b16 %v642
        %v675 = vunpack.c.l.b16 %v643
        %v676 = vunpack.c.l.b16 %v644
        %v677 = vunpack.c.l.b16 %v645
        %v678 = vunpack.c.l.b16 %v646
        %v679 = vunpack.c.l.b16 %v647
        %v680 = vunpack.c.l.b16 %v648
        %v681 = vpack.c.b16 %v666, %v665
        %v682 = vpack.c.b16 %v668, %v667
        %v683 = vpack.c.b16 %v670, %v669
        %v684 = vpack.c.b16 %v672, %v671
        %v685 = vpack.c.b16 %v674, %v673
        %v686 = vpack.c.b16 %v676, %v675
        %v687 = vpack.c.b16 %v678, %v677
        %v688 = vpack.c.b16 %v680, %v679
        %697 = vmatpush.bf16.msra.mxu0 %v688
        %698 = vmatpush.bf16.msra.mxu0 %v687
        %699 = vmatpush.bf16.msra.mxu0 %v686
        %700 = vmatpush.bf16.msra.mxu0 %v685
        %701 = vmatpush.bf16.msra.mxu0 %v684
        %702 = vmatpush.bf16.msra.mxu0 %v683
        %703 = vmatpush.bf16.msra.mxu0 %v682
        %704 = vmatpush.bf16.msra.mxu0 %v681
        %705 = vmatmul.bf16.gmra.mxu0 %v617
        %v706 = vpop.f32.mrf.mxu0
        %v707 = vadd.f32 0.0, %v706
        %v708 = vpop.f32.mrf.mxu0
        %v709 = vadd.f32 0.0, %v708
        %710 = vmatmul.bf16.gmra.mxu0 %v618
        %v711 = vpop.f32.mrf.mxu0
        %v712 = vadd.f32 0.0, %v711
        %v713 = vpop.f32.mrf.mxu0
        %v714 = vadd.f32 0.0, %v713
        %715 = vmatmul.bf16.gmra.mxu0 %v619
        %v716 = vpop.f32.mrf.mxu0
        %v717 = vadd.f32 0.0, %v716
        %v718 = vpop.f32.mrf.mxu0
        %v719 = vadd.f32 0.0, %v718
        %720 = vmatmul.bf16.gmra.mxu0 %v620
        %v721 = vpop.f32.mrf.mxu0
        %v722 = vadd.f32 0.0, %v721
        %v723 = vpop.f32.mrf.mxu0
        %v724 = vadd.f32 0.0, %v723
        %725 = vmatmul.bf16.gmra.mxu0 %v621
        %v726 = vpop.f32.mrf.mxu0
        %v727 = vadd.f32 0.0, %v726
        %v728 = vpop.f32.mrf.mxu0
        %v729 = vadd.f32 0.0, %v728
        %730 = vmatmul.bf16.gmra.mxu0 %v622
        %v731 = vpop.f32.mrf.mxu0
        %v732 = vadd.f32 0.0, %v731
        %v733 = vpop.f32.mrf.mxu0
        %v734 = vadd.f32 0.0, %v733
        %735 = vmatmul.bf16.gmra.mxu0 %v623
        %v736 = vpop.f32.mrf.mxu0
        %v737 = vadd.f32 0.0, %v736
        %v738 = vpop.f32.mrf.mxu0
        %v739 = vadd.f32 0.0, %v738
        %740 = vmatmul.bf16.gmra.mxu0 %v624
        %v741 = vpop.f32.mrf.mxu0
        %v742 = vadd.f32 0.0, %v741
        %v743 = vpop.f32.mrf.mxu0
        %v744 = vadd.f32 0.0, %v743
        %745 = vmatmul.bf16.gmra.mxu0 %v625
        %v746 = vpop.f32.mrf.mxu0
        %v747 = vadd.f32 0.0, %v746
        %v748 = vpop.f32.mrf.mxu0
        %v749 = vadd.f32 0.0, %v748
        %750 = vmatmul.bf16.gmra.mxu0 %v626
        %v751 = vpop.f32.mrf.mxu0
        %v752 = vadd.f32 0.0, %v751
        %v753 = vpop.f32.mrf.mxu0
        %v754 = vadd.f32 0.0, %v753
        %755 = vmatmul.bf16.gmra.mxu0 %v627
        %v756 = vpop.f32.mrf.mxu0
        %v757 = vadd.f32 0.0, %v756
        %v758 = vpop.f32.mrf.mxu0
        %v759 = vadd.f32 0.0, %v758
        %760 = vmatmul.bf16.gmra.mxu0 %v628
        %v761 = vpop.f32.mrf.mxu0
        %v762 = vadd.f32 0.0, %v761
        %v763 = vpop.f32.mrf.mxu0
        %v764 = vadd.f32 0.0, %v763
        %765 = vmatmul.bf16.gmra.mxu0 %v629
        %v766 = vpop.f32.mrf.mxu0
        %v767 = vadd.f32 0.0, %v766
        %v768 = vpop.f32.mrf.mxu0
        %v769 = vadd.f32 0.0, %v768
        %770 = vmatmul.bf16.gmra.mxu0 %v630
        %v771 = vpop.f32.mrf.mxu0
        %v772 = vadd.f32 0.0, %v771
        %v773 = vpop.f32.mrf.mxu0
        %v774 = vadd.f32 0.0, %v773
        %775 = vmatmul.bf16.gmra.mxu0 %v631
        %v776 = vpop.f32.mrf.mxu0
        %v777 = vadd.f32 0.0, %v776
        %v778 = vpop.f32.mrf.mxu0
        %v779 = vadd.f32 0.0, %v778
        %780 = vmatmul.bf16.gmra.mxu0 %v632
        %v781 = vpop.f32.mrf.mxu0
        %v782 = vadd.f32 0.0, %v781
        %v783 = vpop.f32.mrf.mxu0
        %784 = vdwg.mxu0
        %v785 = vld [vmem:[%s5] sm:$0x1]
        %v787 = vperm.slane %v785, 0
        %v789 = vmul.f32 %v707, %v787
        %v790 = vmul.f32 %v709, %v787
        %v791 = vmul.f32 %v712, %v787
        %v792 = vmul.f32 %v714, %v787
        %v793 = vmul.f32 %v717, %v787
        %v794 = vmul.f32 %v719, %v787
        %v795 = vmul.f32 %v722, %v787
        %v796 = vmul.f32 %v724, %v787
        %v797 = vmul.f32 %v727, %v787
        %v798 = vmul.f32 %v729, %v787
        %v799 = vmul.f32 %v732, %v787
        %v800 = vmul.f32 %v734, %v787
        %v801 = vmul.f32 %v737, %v787
        %v802 = vmul.f32 %v739, %v787
        %v803 = vmul.f32 %v742, %v787
        %v804 = vmul.f32 %v744, %v787
        %v805 = vmul.f32 %v747, %v787
        %v806 = vmul.f32 %v749, %v787
        %v807 = vmul.f32 %v752, %v787
        %v808 = vmul.f32 %v754, %v787
        %v809 = vmul.f32 %v757, %v787
        %v810 = vmul.f32 %v759, %v787
        %v811 = vmul.f32 %v762, %v787
        %v812 = vmul.f32 %v764, %v787
        %v813 = vmul.f32 %v767, %v787
        %v814 = vmul.f32 %v769, %v787
        %v815 = vmul.f32 %v772, %v787
        %v816 = vmul.f32 %v774, %v787
        %v817 = vmul.f32 %v777, %v787
        %v818 = vmul.f32 %v779, %v787
        %v819 = vmul.f32 %v782, %v787
        %v820 = vld [vmem:[%s6] sm:$0x1]
        %v822 = vperm.slane %v820, 0
        %v824 = vadd.f32 %v789, %v822
        %v825 = vadd.f32 %v790, %v822
        %v826 = vadd.f32 %v791, %v822
        %v827 = vadd.f32 %v792, %v822
        %v828 = vadd.f32 %v793, %v822
        %v829 = vadd.f32 %v794, %v822
        %v830 = vadd.f32 %v795, %v822
        %v831 = vadd.f32 %v796, %v822
        %v832 = vadd.f32 %v797, %v822
        %v833 = vadd.f32 %v798, %v822
        %v834 = vadd.f32 %v799, %v822
        %v835 = vadd.f32 %v800, %v822
        %v836 = vadd.f32 %v801, %v822
        %v837 = vadd.f32 %v802, %v822
        %v838 = vadd.f32 %v803, %v822
        %v839 = vadd.f32 %v804, %v822
        %v840 = vadd.f32 %v805, %v822
        %v841 = vadd.f32 %v806, %v822
        %v842 = vadd.f32 %v807, %v822
        %v843 = vadd.f32 %v808, %v822
        %v844 = vadd.f32 %v809, %v822
        %v845 = vadd.f32 %v810, %v822
        %v846 = vadd.f32 %v811, %v822
        %v847 = vadd.f32 %v812, %v822
        %v848 = vadd.f32 %v813, %v822
        %v849 = vadd.f32 %v814, %v822
        %v850 = vadd.f32 %v815, %v822
        %v851 = vadd.f32 %v816, %v822
        %v852 = vadd.f32 %v817, %v822
        %v853 = vadd.f32 %v818, %v822
        %v854 = vadd.f32 %v819, %v822
        %v855 = vmax.f32 %v824, 0.0
        %v856 = vmax.f32 %v825, 0.0
        %v857 = vmax.f32 %v826, 0.0
        %v858 = vmax.f32 %v827, 0.0
        %v859 = vmax.f32 %v828, 0.0
        %v860 = vmax.f32 %v829, 0.0
        %v861 = vmax.f32 %v830, 0.0
        %v862 = vmax.f32 %v831, 0.0
        %v863 = vmax.f32 %v832, 0.0
        %v864 = vmax.f32 %v833, 0.0
        %v865 = vmax.f32 %v834, 0.0
        %v866 = vmax.f32 %v835, 0.0
        %v867 = vmax.f32 %v836, 0.0
        %v868 = vmax.f32 %v837, 0.0
        %v869 = vmax.f32 %v838, 0.0
        %v870 = vmax.f32 %v839, 0.0
        %v871 = vmax.f32 %v840, 0.0
        %v872 = vmax.f32 %v841, 0.0
        %v873 = vmax.f32 %v842, 0.0
        %v874 = vmax.f32 %v843, 0.0
        %v875 = vmax.f32 %v844, 0.0
        %v876 = vmax.f32 %v845, 0.0
        %v877 = vmax.f32 %v846, 0.0
        %v878 = vmax.f32 %v847, 0.0
        %v879 = vmax.f32 %v848, 0.0
        %v880 = vmax.f32 %v849, 0.0
        %v881 = vmax.f32 %v850, 0.0
        %v882 = vmax.f32 %v851, 0.0
        %v883 = vmax.f32 %v852, 0.0
        %v884 = vmax.f32 %v853, 0.0
        %v885 = vmax.f32 %v854, 0.0
        %v886 = vld [vmem:[%s372] sm:$0xff]
        %v887 = vld [vmem:[%s372 + $0x8] sm:$0xff]
        %v888 = vld [vmem:[%s372 + $0x10] sm:$0xff]
        %v889 = vld [vmem:[%s372 + $0x18] sm:$0xff]
        %v890 = vld [vmem:[%s372 + $0x20] sm:$0xff]
        %v891 = vld [vmem:[%s372 + $0x28] sm:$0xff]
        %v892 = vld [vmem:[%s372 + $0x30] sm:$0xff]
        %v893 = vld [vmem:[%s372 + $0x38] sm:$0xff]
        %v894 = vld [vmem:[%s372 + $0x40] sm:$0xff]
        %v895 = vld [vmem:[%s372 + $0x48] sm:$0xff]
        %v896 = vld [vmem:[%s372 + $0x50] sm:$0xff]
        %v897 = vld [vmem:[%s372 + $0x58] sm:$0xff]
        %v898 = vld [vmem:[%s372 + $0x60] sm:$0xff]
        %v899 = vld [vmem:[%s372 + $0x68] sm:$0xff]
        %v900 = vld [vmem:[%s372 + $0x70] sm:$0xff]
        %v901 = vld [vmem:[%s372 + $0x78] sm:$0xff]
        %v902 = vld [vmem:[%s372 + $0x80] sm:$0xff]
        %v903 = vld [vmem:[%s372 + $0x88] sm:$0xff]
        %v904 = vld [vmem:[%s372 + $0x90] sm:$0xff]
        %v905 = vld [vmem:[%s372 + $0x98] sm:$0xff]
        %v906 = vld [vmem:[%s372 + $0xa0] sm:$0xff]
        %v907 = vld [vmem:[%s372 + $0xa8] sm:$0xff]
        %v908 = vld [vmem:[%s372 + $0xb0] sm:$0xff]
        %v909 = vld [vmem:[%s372 + $0xb8] sm:$0xff]
        %v910 = vld [vmem:[%s372 + $0xc0] sm:$0xff]
        %v911 = vld [vmem:[%s372 + $0xc8] sm:$0xff]
        %v912 = vld [vmem:[%s372 + $0xd0] sm:$0xff]
        %v913 = vld [vmem:[%s372 + $0xd8] sm:$0xff]
        %v914 = vld [vmem:[%s372 + $0xe0] sm:$0xff]
        %v915 = vld [vmem:[%s372 + $0xe8] sm:$0xff]
        %v916 = vld [vmem:[%s372 + $0xf0] sm:$0xf]
        %918 = vset.pattern.permute.xlu0 0
        %919 = vperm.xlu0 %918, %v886
        %v920 = vpop.permute.xlu0 %919
        %923 = vset.pattern.permute.xlu0 0
        %924 = vperm.xlu0 %923, %v887
        %v925 = vpop.permute.xlu0 %924
        %928 = vset.pattern.permute.xlu0 0
        %929 = vperm.xlu0 %928, %v888
        %v930 = vpop.permute.xlu0 %929
        %933 = vset.pattern.permute.xlu0 0
        %934 = vperm.xlu0 %933, %v889
        %v935 = vpop.permute.xlu0 %934
        %938 = vset.pattern.permute.xlu0 0
        %939 = vperm.xlu0 %938, %v890
        %v940 = vpop.permute.xlu0 %939
        %943 = vset.pattern.permute.xlu0 0
        %944 = vperm.xlu0 %943, %v891
        %v945 = vpop.permute.xlu0 %944
        %948 = vset.pattern.permute.xlu0 0
        %949 = vperm.xlu0 %948, %v892
        %v950 = vpop.permute.xlu0 %949
        %953 = vset.pattern.permute.xlu0 0
        %954 = vperm.xlu0 %953, %v893
        %v955 = vpop.permute.xlu0 %954
        %958 = vset.pattern.permute.xlu0 0
        %959 = vperm.xlu0 %958, %v894
        %v960 = vpop.permute.xlu0 %959
        %963 = vset.pattern.permute.xlu0 0
        %964 = vperm.xlu0 %963, %v895
        %v965 = vpop.permute.xlu0 %964
        %968 = vset.pattern.permute.xlu0 0
        %969 = vperm.xlu0 %968, %v896
        %v970 = vpop.permute.xlu0 %969
        %973 = vset.pattern.permute.xlu0 0
        %974 = vperm.xlu0 %973, %v897
        %v975 = vpop.permute.xlu0 %974
        %978 = vset.pattern.permute.xlu0 0
        %979 = vperm.xlu0 %978, %v898
        %v980 = vpop.permute.xlu0 %979
        %983 = vset.pattern.permute.xlu0 0
        %984 = vperm.xlu0 %983, %v899
        %v985 = vpop.permute.xlu0 %984
        %988 = vset.pattern.permute.xlu0 0
        %989 = vperm.xlu0 %988, %v900
        %v990 = vpop.permute.xlu0 %989
        %993 = vset.pattern.permute.xlu0 0
        %994 = vperm.xlu0 %993, %v901
        %v995 = vpop.permute.xlu0 %994
        %998 = vset.pattern.permute.xlu0 0
        %999 = vperm.xlu0 %998, %v902
        %v1000 = vpop.permute.xlu0 %999
        %1003 = vset.pattern.permute.xlu0 0
        %1004 = vperm.xlu0 %1003, %v903
        %v1005 = vpop.permute.xlu0 %1004
        %1008 = vset.pattern.permute.xlu0 0
        %1009 = vperm.xlu0 %1008, %v904
        %v1010 = vpop.permute.xlu0 %1009
        %1013 = vset.pattern.permute.xlu0 0
        %1014 = vperm.xlu0 %1013, %v905
        %v1015 = vpop.permute.xlu0 %1014
        %1018 = vset.pattern.permute.xlu0 0
        %1019 = vperm.xlu0 %1018, %v906
        %v1020 = vpop.permute.xlu0 %1019
        %1023 = vset.pattern.permute.xlu0 0
        %1024 = vperm.xlu0 %1023, %v907
        %v1025 = vpop.permute.xlu0 %1024
        %1028 = vset.pattern.permute.xlu0 0
        %1029 = vperm.xlu0 %1028, %v908
        %v1030 = vpop.permute.xlu0 %1029
        %1033 = vset.pattern.permute.xlu0 0
        %1034 = vperm.xlu0 %1033, %v909
        %v1035 = vpop.permute.xlu0 %1034
        %1038 = vset.pattern.permute.xlu0 0
        %1039 = vperm.xlu0 %1038, %v910
        %v1040 = vpop.permute.xlu0 %1039
        %1043 = vset.pattern.permute.xlu0 0
        %1044 = vperm.xlu0 %1043, %v911
        %v1045 = vpop.permute.xlu0 %1044
        %1048 = vset.pattern.permute.xlu0 0
        %1049 = vperm.xlu0 %1048, %v912
        %v1050 = vpop.permute.xlu0 %1049
        %1053 = vset.pattern.permute.xlu0 0
        %1054 = vperm.xlu0 %1053, %v913
        %v1055 = vpop.permute.xlu0 %1054
        %1058 = vset.pattern.permute.xlu0 0
        %1059 = vperm.xlu0 %1058, %v914
        %v1060 = vpop.permute.xlu0 %1059
        %1063 = vset.pattern.permute.xlu0 0
        %1064 = vperm.xlu0 %1063, %v915
        %v1065 = vpop.permute.xlu0 %1064
        %1068 = vset.pattern.permute.xlu0 0
        %1069 = vperm.xlu0 %1068, %v916
        %v1070 = vpop.permute.xlu0 %1069
        %v1072 = vmul.f32 %v855, %v920
        %v1073 = vmul.f32 %v856, %v925
        %v1074 = vmul.f32 %v857, %v930
        %v1075 = vmul.f32 %v858, %v935
        %v1076 = vmul.f32 %v859, %v940
        %v1077 = vmul.f32 %v860, %v945
        %v1078 = vmul.f32 %v861, %v950
        %v1079 = vmul.f32 %v862, %v955
        %v1080 = vmul.f32 %v863, %v960
        %v1081 = vmul.f32 %v864, %v965
        %v1082 = vmul.f32 %v865, %v970
        %v1083 = vmul.f32 %v866, %v975
        %v1084 = vmul.f32 %v867, %v980
        %v1085 = vmul.f32 %v868, %v985
        %v1086 = vmul.f32 %v869, %v990
        %v1087 = vmul.f32 %v870, %v995
        %v1088 = vmul.f32 %v871, %v1000
        %v1089 = vmul.f32 %v872, %v1005
        %v1090 = vmul.f32 %v873, %v1010
        %v1091 = vmul.f32 %v874, %v1015
        %v1092 = vmul.f32 %v875, %v1020
        %v1093 = vmul.f32 %v876, %v1025
        %v1094 = vmul.f32 %v877, %v1030
        %v1095 = vmul.f32 %v878, %v1035
        %v1096 = vmul.f32 %v879, %v1040
        %v1097 = vmul.f32 %v880, %v1045
        %v1098 = vmul.f32 %v881, %v1050
        %v1099 = vmul.f32 %v882, %v1055
        %v1100 = vmul.f32 %v883, %v1060
        %v1101 = vmul.f32 %v884, %v1065
        %v1102 = vmul.f32 %v885, %v1070
        %v1103 = vpack.c.bf16 %v1073, %v1072
        %v1104 = vpack.c.bf16 %v1075, %v1074
        %v1105 = vpack.c.bf16 %v1077, %v1076
        %v1106 = vpack.c.bf16 %v1079, %v1078
        %v1107 = vpack.c.bf16 %v1081, %v1080
        %v1108 = vpack.c.bf16 %v1083, %v1082
        %v1109 = vpack.c.bf16 %v1085, %v1084
        %v1110 = vpack.c.bf16 %v1087, %v1086
        %v1111 = vpack.c.bf16 %v1089, %v1088
        %v1112 = vpack.c.bf16 %v1091, %v1090
        %v1113 = vld [vmem:[%s3] sm:$0xf]
        %v1114 = vld [vmem:[%s3 + $0x4] sm:$0xf]
        %v1115 = vld [vmem:[%s3 + $0x8] sm:$0xf]
        %v1116 = vld [vmem:[%s3 + $0xc] sm:$0xf]
        %v1117 = vld [vmem:[%s3 + $0x10] sm:$0xf]
        %v1118 = vld [vmem:[%s3 + $0x14] sm:$0xf]
        %v1119 = vld [vmem:[%s3 + $0x18] sm:$0xf]
        %v1120 = vld [vmem:[%s3 + $0x1c] sm:$0xf]
        %v1121 = vld [vmem:[%s3 + $0x20] sm:$0xf]
        %v1122 = vld [vmem:[%s3 + $0x24] sm:$0xf]
        %v1123 = vld [vmem:[%s3 + $0x28] sm:$0xf]
        %v1124 = vld [vmem:[%s3 + $0x2c] sm:$0xf]
        %v1125 = vld [vmem:[%s3 + $0x30] sm:$0xf]
        %v1126 = vld [vmem:[%s3 + $0x34] sm:$0xf]
        %v1127 = vld [vmem:[%s3 + $0x38] sm:$0xf]
        %v1128 = vld [vmem:[%s3 + $0x3c] sm:$0xf]
        %v1129 = vpack.c.bf16 %v1092, %v1092
        %s1130 = scalar_lea.vmem %s3, 64
        %v1131 = vld [vmem:[%s1130] sm:$0xf]
        %v1132 = vld [vmem:[%s1130 + $0x4] sm:$0xf]
        %v1133 = vld [vmem:[%s1130 + $0x8] sm:$0xf]
        %v1134 = vld [vmem:[%s1130 + $0xc] sm:$0xf]
        %v1135 = vld [vmem:[%s1130 + $0x10] sm:$0xf]
        %v1136 = vld [vmem:[%s1130 + $0x14] sm:$0xf]
        %v1137 = vld [vmem:[%s1130 + $0x18] sm:$0xf]
        %v1138 = vld [vmem:[%s1130 + $0x1c] sm:$0xf]
        %v1139 = vld [vmem:[%s1130 + $0x20] sm:$0xf]
        %v1140 = vld [vmem:[%s1130 + $0x24] sm:$0xf]
        %v1141 = vld [vmem:[%s1130 + $0x28] sm:$0xf]
        %v1142 = vld [vmem:[%s1130 + $0x2c] sm:$0xf]
        %v1143 = vld [vmem:[%s1130 + $0x30] sm:$0xf]
        %v1144 = vld [vmem:[%s1130 + $0x34] sm:$0xf]
        %v1145 = vld [vmem:[%s1130 + $0x38] sm:$0xf]
        %v1146 = vld [vmem:[%s1130 + $0x3c] sm:$0xf]
        %vm1158 = vcmask 1046528
        %v1159 = vrot.slane %v1103, 1
        %v1160 = vrot.slane %v1104, 1
        %v1161 = vsel %vm1158, %v1159, %v1160
        %v1162 = vrot.slane %v1105, 1
        %v1163 = vsel %vm1158, %v1160, %v1162
        %v1164 = vrot.slane %v1106, 1
        %v1165 = vsel %vm1158, %v1162, %v1164
        %v1166 = vrot.slane %v1107, 1
        %v1167 = vsel %vm1158, %v1164, %v1166
        %v1168 = vrot.slane %v1108, 1
        %v1169 = vsel %vm1158, %v1166, %v1168
        %v1170 = vrot.slane %v1109, 1
        %v1171 = vsel %vm1158, %v1168, %v1170
        %v1172 = vrot.slane %v1110, 1
        %v1173 = vsel %vm1158, %v1170, %v1172
        %v1174 = vrot.slane %v1111, 1
        %v1175 = vsel %vm1158, %v1172, %v1174
        %v1176 = vrot.slane %v1112, 1
        %v1177 = vsel %vm1158, %v1174, %v1176
        %v1178 = vrot.slane %v1129, 1
        %v1179 = vsel %vm1158, %v1176, %v1178
        %v1206 = vunpack.c.l.b16 %v1131
        %v1207 = vunpack.c.l.b16 %v1132
        %v1208 = vunpack.c.l.b16 %v1133
        %v1209 = vunpack.c.l.b16 %v1134
        %v1210 = vunpack.c.l.b16 %v1135
        %v1211 = vunpack.c.l.b16 %v1136
        %v1212 = vunpack.c.l.b16 %v1137
        %v1213 = vunpack.c.l.b16 %v1138
        %v1214 = vunpack.c.l.b16 %v1139
        %v1215 = vunpack.c.l.b16 %v1140
        %v1216 = vunpack.c.l.b16 %v1141
        %v1217 = vunpack.c.l.b16 %v1142
        %v1218 = vunpack.c.l.b16 %v1143
        %v1219 = vunpack.c.l.b16 %v1144
        %v1220 = vunpack.c.l.b16 %v1145
        %v1221 = vunpack.c.l.b16 %v1146
        %v1222 = vpack.c.b16 %v1207, %v1206
        %v1223 = vpack.c.b16 %v1209, %v1208
        %v1224 = vpack.c.b16 %v1211, %v1210
        %v1225 = vpack.c.b16 %v1213, %v1212
        %v1226 = vpack.c.b16 %v1215, %v1214
        %v1227 = vpack.c.b16 %v1217, %v1216
        %v1228 = vpack.c.b16 %v1219, %v1218
        %v1229 = vpack.c.b16 %v1221, %v1220
        %1238 = vmatpush.bf16.msra.mxu0 %v1229
        %1239 = vmatpush.bf16.msra.mxu0 %v1228
        %1240 = vmatpush.bf16.msra.mxu0 %v1227
        %1241 = vmatpush.bf16.msra.mxu0 %v1226
        %1242 = vmatpush.bf16.msra.mxu0 %v1225
        %1243 = vmatpush.bf16.msra.mxu0 %v1224
        %1244 = vmatpush.bf16.msra.mxu0 %v1223
        %1245 = vmatpush.bf16.msra.mxu0 %v1222
        %1246 = vmatmul.bf16.gmra.mxu0 %v1161
        %v1247 = vpop.f32.mrf.mxu0
        %v1248 = vadd.f32 0.0, %v1247
        %v1249 = vpop.f32.mrf.mxu0
        %v1250 = vadd.f32 0.0, %v1249
        %1251 = vmatmul.bf16.gmra.mxu0 %v1163
        %v1252 = vpop.f32.mrf.mxu0
        %v1253 = vadd.f32 0.0, %v1252
        %v1254 = vpop.f32.mrf.mxu0
        %v1255 = vadd.f32 0.0, %v1254
        %1256 = vmatmul.bf16.gmra.mxu0 %v1165
        %v1257 = vpop.f32.mrf.mxu0
        %v1258 = vadd.f32 0.0, %v1257
        %v1259 = vpop.f32.mrf.mxu0
        %v1260 = vadd.f32 0.0, %v1259
        %1261 = vmatmul.bf16.gmra.mxu0 %v1167
        %v1262 = vpop.f32.mrf.mxu0
        %v1263 = vadd.f32 0.0, %v1262
        %v1264 = vpop.f32.mrf.mxu0
        %v1265 = vadd.f32 0.0, %v1264
        %1266 = vmatmul.bf16.gmra.mxu0 %v1169
        %v1267 = vpop.f32.mrf.mxu0
        %v1268 = vadd.f32 0.0, %v1267
        %v1269 = vpop.f32.mrf.mxu0
        %v1270 = vadd.f32 0.0, %v1269
        %1271 = vmatmul.bf16.gmra.mxu0 %v1171
        %v1272 = vpop.f32.mrf.mxu0
        %v1273 = vadd.f32 0.0, %v1272
        %v1274 = vpop.f32.mrf.mxu0
        %v1275 = vadd.f32 0.0, %v1274
        %1276 = vmatmul.bf16.gmra.mxu0 %v1173
        %v1277 = vpop.f32.mrf.mxu0
        %v1278 = vadd.f32 0.0, %v1277
        %v1279 = vpop.f32.mrf.mxu0
        %v1280 = vadd.f32 0.0, %v1279
        %1281 = vmatmul.bf16.gmra.mxu0 %v1175
        %v1282 = vpop.f32.mrf.mxu0
        %v1283 = vadd.f32 0.0, %v1282
        %v1284 = vpop.f32.mrf.mxu0
        %v1285 = vadd.f32 0.0, %v1284
        %1286 = vmatmul.bf16.gmra.mxu0 %v1177
        %v1287 = vpop.f32.mrf.mxu0
        %v1288 = vadd.f32 0.0, %v1287
        %v1289 = vpop.f32.mrf.mxu0
        %v1290 = vadd.f32 0.0, %v1289
        %1291 = vmatmul.bf16.gmra.mxu0 %v1179
        %v1292 = vpop.f32.mrf.mxu0
        %v1293 = vadd.f32 0.0, %v1292
        %v1294 = vpop.f32.mrf.mxu0
        %v1295 = vadd.f32 0.0, %v1294
        %1296 = vdwg.mxu0
        %v1313 = vunpack.c.l.b16 %v1113
        %v1314 = vunpack.c.l.b16 %v1114
        %v1315 = vunpack.c.l.b16 %v1115
        %v1316 = vunpack.c.l.b16 %v1116
        %v1317 = vunpack.c.l.b16 %v1117
        %v1318 = vunpack.c.l.b16 %v1118
        %v1319 = vunpack.c.l.b16 %v1119
        %v1320 = vunpack.c.l.b16 %v1120
        %v1321 = vunpack.c.l.b16 %v1121
        %v1322 = vunpack.c.l.b16 %v1122
        %v1323 = vunpack.c.l.b16 %v1123
        %v1324 = vunpack.c.l.b16 %v1124
        %v1325 = vunpack.c.l.b16 %v1125
        %v1326 = vunpack.c.l.b16 %v1126
        %v1327 = vunpack.c.l.b16 %v1127
        %v1328 = vunpack.c.l.b16 %v1128
        %v1329 = vpack.c.b16 %v1314, %v1313
        %v1330 = vpack.c.b16 %v1316, %v1315
        %v1331 = vpack.c.b16 %v1318, %v1317
        %v1332 = vpack.c.b16 %v1320, %v1319
        %v1333 = vpack.c.b16 %v1322, %v1321
        %v1334 = vpack.c.b16 %v1324, %v1323
        %v1335 = vpack.c.b16 %v1326, %v1325
        %v1336 = vpack.c.b16 %v1328, %v1327
        %1345 = vmatpush.bf16.msra.mxu0 %v1336
        %1346 = vmatpush.bf16.msra.mxu0 %v1335
        %1347 = vmatpush.bf16.msra.mxu0 %v1334
        %1348 = vmatpush.bf16.msra.mxu0 %v1333
        %1349 = vmatpush.bf16.msra.mxu0 %v1332
        %1350 = vmatpush.bf16.msra.mxu0 %v1331
        %1351 = vmatpush.bf16.msra.mxu0 %v1330
        %1352 = vmatpush.bf16.msra.mxu0 %v1329
        %1353 = vmatmul.bf16.gmra.mxu0 %v1103
        %v1354 = vpop.f32.mrf.mxu0
        %v1355 = vadd.f32 %v1248, %v1354
        %v1356 = vpop.f32.mrf.mxu0
        %v1357 = vadd.f32 %v1250, %v1356
        %1358 = vmatmul.bf16.gmra.mxu0 %v1104
        %v1359 = vpop.f32.mrf.mxu0
        %v1360 = vadd.f32 %v1253, %v1359
        %v1361 = vpop.f32.mrf.mxu0
        %v1362 = vadd.f32 %v1255, %v1361
        %1363 = vmatmul.bf16.gmra.mxu0 %v1105
        %v1364 = vpop.f32.mrf.mxu0
        %v1365 = vadd.f32 %v1258, %v1364
        %v1366 = vpop.f32.mrf.mxu0
        %v1367 = vadd.f32 %v1260, %v1366
        %1368 = vmatmul.bf16.gmra.mxu0 %v1106
        %v1369 = vpop.f32.mrf.mxu0
        %v1370 = vadd.f32 %v1263, %v1369
        %v1371 = vpop.f32.mrf.mxu0
        %v1372 = vadd.f32 %v1265, %v1371
        %1373 = vmatmul.bf16.gmra.mxu0 %v1107
        %v1374 = vpop.f32.mrf.mxu0
        %v1375 = vadd.f32 %v1268, %v1374
        %v1376 = vpop.f32.mrf.mxu0
        %v1377 = vadd.f32 %v1270, %v1376
        %1378 = vmatmul.bf16.gmra.mxu0 %v1108
        %v1379 = vpop.f32.mrf.mxu0
        %v1380 = vadd.f32 %v1273, %v1379
        %v1381 = vpop.f32.mrf.mxu0
        %v1382 = vadd.f32 %v1275, %v1381
        %1383 = vmatmul.bf16.gmra.mxu0 %v1109
        %v1384 = vpop.f32.mrf.mxu0
        %v1385 = vadd.f32 %v1278, %v1384
        %v1386 = vpop.f32.mrf.mxu0
        %v1387 = vadd.f32 %v1280, %v1386
        %1388 = vmatmul.bf16.gmra.mxu0 %v1110
        %v1389 = vpop.f32.mrf.mxu0
        %v1390 = vadd.f32 %v1283, %v1389
        %v1391 = vpop.f32.mrf.mxu0
        %v1392 = vadd.f32 %v1285, %v1391
        %1393 = vmatmul.bf16.gmra.mxu0 %v1111
        %v1394 = vpop.f32.mrf.mxu0
        %v1395 = vadd.f32 %v1288, %v1394
        %v1396 = vpop.f32.mrf.mxu0
        %v1397 = vadd.f32 %v1290, %v1396
        %1398 = vmatmul.bf16.gmra.mxu0 %v1112
        %v1399 = vpop.f32.mrf.mxu0
        %v1400 = vadd.f32 %v1293, %v1399
        %v1401 = vpop.f32.mrf.mxu0
        %v1402 = vadd.f32 %v1295, %v1401
        %1403 = vdwg.mxu0
        %s1404 = scalar_lea.vmem %s3, 128
        %v1405 = vld [vmem:[%s1404] sm:$0xf]
        %v1406 = vld [vmem:[%s1404 + $0x4] sm:$0xf]
        %v1407 = vld [vmem:[%s1404 + $0x8] sm:$0xf]
        %v1408 = vld [vmem:[%s1404 + $0xc] sm:$0xf]
        %v1409 = vld [vmem:[%s1404 + $0x10] sm:$0xf]
        %v1410 = vld [vmem:[%s1404 + $0x14] sm:$0xf]
        %v1411 = vld [vmem:[%s1404 + $0x18] sm:$0xf]
        %v1412 = vld [vmem:[%s1404 + $0x1c] sm:$0xf]
        %v1413 = vld [vmem:[%s1404 + $0x20] sm:$0xf]
        %v1414 = vld [vmem:[%s1404 + $0x24] sm:$0xf]
        %v1415 = vld [vmem:[%s1404 + $0x28] sm:$0xf]
        %v1416 = vld [vmem:[%s1404 + $0x2c] sm:$0xf]
        %v1417 = vld [vmem:[%s1404 + $0x30] sm:$0xf]
        %v1418 = vld [vmem:[%s1404 + $0x34] sm:$0xf]
        %v1419 = vld [vmem:[%s1404 + $0x38] sm:$0xf]
        %v1420 = vld [vmem:[%s1404 + $0x3c] sm:$0xf]
        %vm1421 = vcmask 1045504
        %v1422 = vrot.slane %v1103, 2
        %v1423 = vrot.slane %v1104, 2
        %v1424 = vsel %vm1421, %v1422, %v1423
        %v1425 = vrot.slane %v1105, 2
        %v1426 = vsel %vm1421, %v1423, %v1425
        %v1427 = vrot.slane %v1106, 2
        %v1428 = vsel %vm1421, %v1425, %v1427
        %v1429 = vrot.slane %v1107, 2
        %v1430 = vsel %vm1421, %v1427, %v1429
        %v1431 = vrot.slane %v1108, 2
        %v1432 = vsel %vm1421, %v1429, %v1431
        %v1433 = vrot.slane %v1109, 2
        %v1434 = vsel %vm1421, %v1431, %v1433
        %v1435 = vrot.slane %v1110, 2
        %v1436 = vsel %vm1421, %v1433, %v1435
        %v1437 = vrot.slane %v1111, 2
        %v1438 = vsel %vm1421, %v1435, %v1437
        %v1439 = vrot.slane %v1112, 2
        %v1440 = vsel %vm1421, %v1437, %v1439
        %v1441 = vrot.slane %v1129, 2
        %v1442 = vsel %vm1421, %v1439, %v1441
        %v1469 = vunpack.c.l.b16 %v1405
        %v1470 = vunpack.c.l.b16 %v1406
        %v1471 = vunpack.c.l.b16 %v1407
        %v1472 = vunpack.c.l.b16 %v1408
        %v1473 = vunpack.c.l.b16 %v1409
        %v1474 = vunpack.c.l.b16 %v1410
        %v1475 = vunpack.c.l.b16 %v1411
        %v1476 = vunpack.c.l.b16 %v1412
        %v1477 = vunpack.c.l.b16 %v1413
        %v1478 = vunpack.c.l.b16 %v1414
        %v1479 = vunpack.c.l.b16 %v1415
        %v1480 = vunpack.c.l.b16 %v1416
        %v1481 = vunpack.c.l.b16 %v1417
        %v1482 = vunpack.c.l.b16 %v1418
        %v1483 = vunpack.c.l.b16 %v1419
        %v1484 = vunpack.c.l.b16 %v1420
        %v1485 = vpack.c.b16 %v1470, %v1469
        %v1486 = vpack.c.b16 %v1472, %v1471
        %v1487 = vpack.c.b16 %v1474, %v1473
        %v1488 = vpack.c.b16 %v1476, %v1475
        %v1489 = vpack.c.b16 %v1478, %v1477
        %v1490 = vpack.c.b16 %v1480, %v1479
        %v1491 = vpack.c.b16 %v1482, %v1481
        %v1492 = vpack.c.b16 %v1484, %v1483
        %1501 = vmatpush.bf16.msra.mxu0 %v1492
        %1502 = vmatpush.bf16.msra.mxu0 %v1491
        %1503 = vmatpush.bf16.msra.mxu0 %v1490
        %1504 = vmatpush.bf16.msra.mxu0 %v1489
        %1505 = vmatpush.bf16.msra.mxu0 %v1488
        %1506 = vmatpush.bf16.msra.mxu0 %v1487
        %1507 = vmatpush.bf16.msra.mxu0 %v1486
        %1508 = vmatpush.bf16.msra.mxu0 %v1485
        %1509 = vmatmul.bf16.gmra.mxu0 %v1424
        %v1510 = vpop.f32.mrf.mxu0
        %v1511 = vadd.f32 0.0, %v1510
        %v1512 = vpop.f32.mrf.mxu0
        %v1513 = vadd.f32 0.0, %v1512
        %1514 = vmatmul.bf16.gmra.mxu0 %v1426
        %v1515 = vpop.f32.mrf.mxu0
        %v1516 = vadd.f32 0.0, %v1515
        %v1517 = vpop.f32.mrf.mxu0
        %v1518 = vadd.f32 0.0, %v1517
        %1519 = vmatmul.bf16.gmra.mxu0 %v1428
        %v1520 = vpop.f32.mrf.mxu0
        %v1521 = vadd.f32 0.0, %v1520
        %v1522 = vpop.f32.mrf.mxu0
        %v1523 = vadd.f32 0.0, %v1522
        %1524 = vmatmul.bf16.gmra.mxu0 %v1430
        %v1525 = vpop.f32.mrf.mxu0
        %v1526 = vadd.f32 0.0, %v1525
        %v1527 = vpop.f32.mrf.mxu0
        %v1528 = vadd.f32 0.0, %v1527
        %1529 = vmatmul.bf16.gmra.mxu0 %v1432
        %v1530 = vpop.f32.mrf.mxu0
        %v1531 = vadd.f32 0.0, %v1530
        %v1532 = vpop.f32.mrf.mxu0
        %v1533 = vadd.f32 0.0, %v1532
        %1534 = vmatmul.bf16.gmra.mxu0 %v1434
        %v1535 = vpop.f32.mrf.mxu0
        %v1536 = vadd.f32 0.0, %v1535
        %v1537 = vpop.f32.mrf.mxu0
        %v1538 = vadd.f32 0.0, %v1537
        %1539 = vmatmul.bf16.gmra.mxu0 %v1436
        %v1540 = vpop.f32.mrf.mxu0
        %v1541 = vadd.f32 0.0, %v1540
        %v1542 = vpop.f32.mrf.mxu0
        %v1543 = vadd.f32 0.0, %v1542
        %1544 = vmatmul.bf16.gmra.mxu0 %v1438
        %v1545 = vpop.f32.mrf.mxu0
        %v1546 = vadd.f32 0.0, %v1545
        %v1547 = vpop.f32.mrf.mxu0
        %v1548 = vadd.f32 0.0, %v1547
        %1549 = vmatmul.bf16.gmra.mxu0 %v1440
        %v1550 = vpop.f32.mrf.mxu0
        %v1551 = vadd.f32 0.0, %v1550
        %v1552 = vpop.f32.mrf.mxu0
        %v1553 = vadd.f32 0.0, %v1552
        %1554 = vmatmul.bf16.gmra.mxu0 %v1442
        %v1555 = vpop.f32.mrf.mxu0
        %v1556 = vadd.f32 0.0, %v1555
        %v1557 = vpop.f32.mrf.mxu0
        %v1558 = vadd.f32 0.0, %v1557
        %1559 = vdwg.mxu0
        %v1560 = vadd.f32 %v1355, %v1511
        %v1561 = vadd.f32 %v1357, %v1513
        %v1562 = vadd.f32 %v1360, %v1516
        %v1563 = vadd.f32 %v1362, %v1518
        %v1564 = vadd.f32 %v1365, %v1521
        %v1565 = vadd.f32 %v1367, %v1523
        %v1566 = vadd.f32 %v1370, %v1526
        %v1567 = vadd.f32 %v1372, %v1528
        %v1568 = vadd.f32 %v1375, %v1531
        %v1569 = vadd.f32 %v1377, %v1533
        %v1570 = vadd.f32 %v1380, %v1536
        %v1571 = vadd.f32 %v1382, %v1538
        %v1572 = vadd.f32 %v1385, %v1541
        %v1573 = vadd.f32 %v1387, %v1543
        %v1574 = vadd.f32 %v1390, %v1546
        %v1575 = vadd.f32 %v1392, %v1548
        %v1576 = vadd.f32 %v1395, %v1551
        %v1577 = vadd.f32 %v1397, %v1553
        %v1578 = vadd.f32 %v1400, %v1556
        %v1579 = vadd.f32 %v1402, %v1558
        %v1580 = vpack.c.bf16 %v1078, %v1077
        %v1581 = vpack.c.bf16 %v1080, %v1079
        %v1582 = vpack.c.bf16 %v1082, %v1081
        %v1583 = vpack.c.bf16 %v1084, %v1083
        %v1584 = vpack.c.bf16 %v1086, %v1085
        %v1585 = vpack.c.bf16 %v1088, %v1087
        %v1586 = vpack.c.bf16 %v1090, %v1089
        %v1587 = vpack.c.bf16 %v1092, %v1091
        %v1588 = vpack.c.bf16 %v1094, %v1093
        %v1589 = vpack.c.bf16 %v1096, %v1095
        %s1590 = scalar_lea.vmem %s3, 192
        %v1591 = vld [vmem:[%s1590] sm:$0xf]
        %v1592 = vld [vmem:[%s1590 + $0x4] sm:$0xf]
        %v1593 = vld [vmem:[%s1590 + $0x8] sm:$0xf]
        %v1594 = vld [vmem:[%s1590 + $0xc] sm:$0xf]
        %v1595 = vld [vmem:[%s1590 + $0x10] sm:$0xf]
        %v1596 = vld [vmem:[%s1590 + $0x14] sm:$0xf]
        %v1597 = vld [vmem:[%s1590 + $0x18] sm:$0xf]
        %v1598 = vld [vmem:[%s1590 + $0x1c] sm:$0xf]
        %v1599 = vld [vmem:[%s1590 + $0x20] sm:$0xf]
        %v1600 = vld [vmem:[%s1590 + $0x24] sm:$0xf]
        %v1601 = vld [vmem:[%s1590 + $0x28] sm:$0xf]
        %v1602 = vld [vmem:[%s1590 + $0x2c] sm:$0xf]
        %v1603 = vld [vmem:[%s1590 + $0x30] sm:$0xf]
        %v1604 = vld [vmem:[%s1590 + $0x34] sm:$0xf]
        %v1605 = vld [vmem:[%s1590 + $0x38] sm:$0xf]
        %v1606 = vld [vmem:[%s1590 + $0x3c] sm:$0xf]
        %v1623 = vunpack.c.l.b16 %v1591
        %v1624 = vunpack.c.l.b16 %v1592
        %v1625 = vunpack.c.l.b16 %v1593
        %v1626 = vunpack.c.l.b16 %v1594
        %v1627 = vunpack.c.l.b16 %v1595
        %v1628 = vunpack.c.l.b16 %v1596
        %v1629 = vunpack.c.l.b16 %v1597
        %v1630 = vunpack.c.l.b16 %v1598
        %v1631 = vunpack.c.l.b16 %v1599
        %v1632 = vunpack.c.l.b16 %v1600
        %v1633 = vunpack.c.l.b16 %v1601
        %v1634 = vunpack.c.l.b16 %v1602
        %v1635 = vunpack.c.l.b16 %v1603
        %v1636 = vunpack.c.l.b16 %v1604
        %v1637 = vunpack.c.l.b16 %v1605
        %v1638 = vunpack.c.l.b16 %v1606
        %v1639 = vpack.c.b16 %v1624, %v1623
        %v1640 = vpack.c.b16 %v1626, %v1625
        %v1641 = vpack.c.b16 %v1628, %v1627
        %v1642 = vpack.c.b16 %v1630, %v1629
        %v1643 = vpack.c.b16 %v1632, %v1631
        %v1644 = vpack.c.b16 %v1634, %v1633
        %v1645 = vpack.c.b16 %v1636, %v1635
        %v1646 = vpack.c.b16 %v1638, %v1637
        %1655 = vmatpush.bf16.msra.mxu0 %v1646
        %1656 = vmatpush.bf16.msra.mxu0 %v1645
        %1657 = vmatpush.bf16.msra.mxu0 %v1644
        %1658 = vmatpush.bf16.msra.mxu0 %v1643
        %1659 = vmatpush.bf16.msra.mxu0 %v1642
        %1660 = vmatpush.bf16.msra.mxu0 %v1641
        %1661 = vmatpush.bf16.msra.mxu0 %v1640
        %1662 = vmatpush.bf16.msra.mxu0 %v1639
        %1663 = vmatmul.bf16.gmra.mxu0 %v1580
        %v1664 = vpop.f32.mrf.mxu0
        %v1665 = vadd.f32 0.0, %v1664
        %v1666 = vpop.f32.mrf.mxu0
        %v1667 = vadd.f32 0.0, %v1666
        %1668 = vmatmul.bf16.gmra.mxu0 %v1581
        %v1669 = vpop.f32.mrf.mxu0
        %v1670 = vadd.f32 0.0, %v1669
        %v1671 = vpop.f32.mrf.mxu0
        %v1672 = vadd.f32 0.0, %v1671
        %1673 = vmatmul.bf16.gmra.mxu0 %v1582
        %v1674 = vpop.f32.mrf.mxu0
        %v1675 = vadd.f32 0.0, %v1674
        %v1676 = vpop.f32.mrf.mxu0
        %v1677 = vadd.f32 0.0, %v1676
        %1678 = vmatmul.bf16.gmra.mxu0 %v1583
        %v1679 = vpop.f32.mrf.mxu0
        %v1680 = vadd.f32 0.0, %v1679
        %v1681 = vpop.f32.mrf.mxu0
        %v1682 = vadd.f32 0.0, %v1681
        %1683 = vmatmul.bf16.gmra.mxu0 %v1584
        %v1684 = vpop.f32.mrf.mxu0
        %v1685 = vadd.f32 0.0, %v1684
        %v1686 = vpop.f32.mrf.mxu0
        %v1687 = vadd.f32 0.0, %v1686
        %1688 = vmatmul.bf16.gmra.mxu0 %v1585
        %v1689 = vpop.f32.mrf.mxu0
        %v1690 = vadd.f32 0.0, %v1689
        %v1691 = vpop.f32.mrf.mxu0
        %v1692 = vadd.f32 0.0, %v1691
        %1693 = vmatmul.bf16.gmra.mxu0 %v1586
        %v1694 = vpop.f32.mrf.mxu0
        %v1695 = vadd.f32 0.0, %v1694
        %v1696 = vpop.f32.mrf.mxu0
        %v1697 = vadd.f32 0.0, %v1696
        %1698 = vmatmul.bf16.gmra.mxu0 %v1587
        %v1699 = vpop.f32.mrf.mxu0
        %v1700 = vadd.f32 0.0, %v1699
        %v1701 = vpop.f32.mrf.mxu0
        %v1702 = vadd.f32 0.0, %v1701
        %1703 = vmatmul.bf16.gmra.mxu0 %v1588
        %v1704 = vpop.f32.mrf.mxu0
        %v1705 = vadd.f32 0.0, %v1704
        %v1706 = vpop.f32.mrf.mxu0
        %v1707 = vadd.f32 0.0, %v1706
        %1708 = vmatmul.bf16.gmra.mxu0 %v1589
        %v1709 = vpop.f32.mrf.mxu0
        %v1710 = vadd.f32 0.0, %v1709
        %v1711 = vpop.f32.mrf.mxu0
        %v1712 = vadd.f32 0.0, %v1711
        %1713 = vdwg.mxu0
        %v1714 = vadd.f32 %v1560, %v1665
        %v1715 = vadd.f32 %v1561, %v1667
        %v1716 = vadd.f32 %v1562, %v1670
        %v1717 = vadd.f32 %v1563, %v1672
        %v1718 = vadd.f32 %v1564, %v1675
        %v1719 = vadd.f32 %v1565, %v1677
        %v1720 = vadd.f32 %v1566, %v1680
        %v1721 = vadd.f32 %v1567, %v1682
        %v1722 = vadd.f32 %v1568, %v1685
        %v1723 = vadd.f32 %v1569, %v1687
        %v1724 = vadd.f32 %v1570, %v1690
        %v1725 = vadd.f32 %v1571, %v1692
        %v1726 = vadd.f32 %v1572, %v1695
        %v1727 = vadd.f32 %v1573, %v1697
        %v1728 = vadd.f32 %v1574, %v1700
        %v1729 = vadd.f32 %v1575, %v1702
        %v1730 = vadd.f32 %v1576, %v1705
        %v1731 = vadd.f32 %v1577, %v1707
        %v1732 = vadd.f32 %v1578, %v1710
        %v1733 = vadd.f32 %v1579, %v1712
        %v1734 = vpack.c.bf16 %v1097, %v1097
        %s1735 = scalar_lea.vmem %s3, 256
        %v1736 = vld [vmem:[%s1735] sm:$0xf]
        %v1737 = vld [vmem:[%s1735 + $0x4] sm:$0xf]
        %v1738 = vld [vmem:[%s1735 + $0x8] sm:$0xf]
        %v1739 = vld [vmem:[%s1735 + $0xc] sm:$0xf]
        %v1740 = vld [vmem:[%s1735 + $0x10] sm:$0xf]
        %v1741 = vld [vmem:[%s1735 + $0x14] sm:$0xf]
        %v1742 = vld [vmem:[%s1735 + $0x18] sm:$0xf]
        %v1743 = vld [vmem:[%s1735 + $0x1c] sm:$0xf]
        %v1744 = vld [vmem:[%s1735 + $0x20] sm:$0xf]
        %v1745 = vld [vmem:[%s1735 + $0x24] sm:$0xf]
        %v1746 = vld [vmem:[%s1735 + $0x28] sm:$0xf]
        %v1747 = vld [vmem:[%s1735 + $0x2c] sm:$0xf]
        %v1748 = vld [vmem:[%s1735 + $0x30] sm:$0xf]
        %v1749 = vld [vmem:[%s1735 + $0x34] sm:$0xf]
        %v1750 = vld [vmem:[%s1735 + $0x38] sm:$0xf]
        %v1751 = vld [vmem:[%s1735 + $0x3c] sm:$0xf]
        %v1763 = vrot.slane %v1580, 1
        %v1764 = vrot.slane %v1581, 1
        %v1765 = vsel %vm1158, %v1763, %v1764
        %v1766 = vrot.slane %v1582, 1
        %v1767 = vsel %vm1158, %v1764, %v1766
        %v1768 = vrot.slane %v1583, 1
        %v1769 = vsel %vm1158, %v1766, %v1768
        %v1770 = vrot.slane %v1584, 1
        %v1771 = vsel %vm1158, %v1768, %v1770
        %v1772 = vrot.slane %v1585, 1
        %v1773 = vsel %vm1158, %v1770, %v1772
        %v1774 = vrot.slane %v1586, 1
        %v1775 = vsel %vm1158, %v1772, %v1774
        %v1776 = vrot.slane %v1587, 1
        %v1777 = vsel %vm1158, %v1774, %v1776
        %v1778 = vrot.slane %v1588, 1
        %v1779 = vsel %vm1158, %v1776, %v1778
        %v1780 = vrot.slane %v1589, 1
        %v1781 = vsel %vm1158, %v1778, %v1780
        %v1782 = vrot.slane %v1734, 1
        %v1783 = vsel %vm1158, %v1780, %v1782
        %v1810 = vunpack.c.l.b16 %v1736
        %v1811 = vunpack.c.l.b16 %v1737
        %v1812 = vunpack.c.l.b16 %v1738
        %v1813 = vunpack.c.l.b16 %v1739
        %v1814 = vunpack.c.l.b16 %v1740
        %v1815 = vunpack.c.l.b16 %v1741
        %v1816 = vunpack.c.l.b16 %v1742
        %v1817 = vunpack.c.l.b16 %v1743
        %v1818 = vunpack.c.l.b16 %v1744
        %v1819 = vunpack.c.l.b16 %v1745
        %v1820 = vunpack.c.l.b16 %v1746
        %v1821 = vunpack.c.l.b16 %v1747
        %v1822 = vunpack.c.l.b16 %v1748
        %v1823 = vunpack.c.l.b16 %v1749
        %v1824 = vunpack.c.l.b16 %v1750
        %v1825 = vunpack.c.l.b16 %v1751
        %v1826 = vpack.c.b16 %v1811, %v1810
        %v1827 = vpack.c.b16 %v1813, %v1812
        %v1828 = vpack.c.b16 %v1815, %v1814
        %v1829 = vpack.c.b16 %v1817, %v1816
        %v1830 = vpack.c.b16 %v1819, %v1818
        %v1831 = vpack.c.b16 %v1821, %v1820
        %v1832 = vpack.c.b16 %v1823, %v1822
        %v1833 = vpack.c.b16 %v1825, %v1824
        %1842 = vmatpush.bf16.msra.mxu0 %v1833
        %1843 = vmatpush.bf16.msra.mxu0 %v1832
        %1844 = vmatpush.bf16.msra.mxu0 %v1831
        %1845 = vmatpush.bf16.msra.mxu0 %v1830
        %1846 = vmatpush.bf16.msra.mxu0 %v1829
        %1847 = vmatpush.bf16.msra.mxu0 %v1828
        %1848 = vmatpush.bf16.msra.mxu0 %v1827
        %1849 = vmatpush.bf16.msra.mxu0 %v1826
        %1850 = vmatmul.bf16.gmra.mxu0 %v1765
        %v1851 = vpop.f32.mrf.mxu0
        %v1852 = vadd.f32 0.0, %v1851
        %v1853 = vpop.f32.mrf.mxu0
        %v1854 = vadd.f32 0.0, %v1853
        %1855 = vmatmul.bf16.gmra.mxu0 %v1767
        %v1856 = vpop.f32.mrf.mxu0
        %v1857 = vadd.f32 0.0, %v1856
        %v1858 = vpop.f32.mrf.mxu0
        %v1859 = vadd.f32 0.0, %v1858
        %1860 = vmatmul.bf16.gmra.mxu0 %v1769
        %v1861 = vpop.f32.mrf.mxu0
        %v1862 = vadd.f32 0.0, %v1861
        %v1863 = vpop.f32.mrf.mxu0
        %v1864 = vadd.f32 0.0, %v1863
        %1865 = vmatmul.bf16.gmra.mxu0 %v1771
        %v1866 = vpop.f32.mrf.mxu0
        %v1867 = vadd.f32 0.0, %v1866
        %v1868 = vpop.f32.mrf.mxu0
        %v1869 = vadd.f32 0.0, %v1868
        %1870 = vmatmul.bf16.gmra.mxu0 %v1773
        %v1871 = vpop.f32.mrf.mxu0
        %v1872 = vadd.f32 0.0, %v1871
        %v1873 = vpop.f32.mrf.mxu0
        %v1874 = vadd.f32 0.0, %v1873
        %1875 = vmatmul.bf16.gmra.mxu0 %v1775
        %v1876 = vpop.f32.mrf.mxu0
        %v1877 = vadd.f32 0.0, %v1876
        %v1878 = vpop.f32.mrf.mxu0
        %v1879 = vadd.f32 0.0, %v1878
        %1880 = vmatmul.bf16.gmra.mxu0 %v1777
        %v1881 = vpop.f32.mrf.mxu0
        %v1882 = vadd.f32 0.0, %v1881
        %v1883 = vpop.f32.mrf.mxu0
        %v1884 = vadd.f32 0.0, %v1883
        %1885 = vmatmul.bf16.gmra.mxu0 %v1779
        %v1886 = vpop.f32.mrf.mxu0
        %v1887 = vadd.f32 0.0, %v1886
        %v1888 = vpop.f32.mrf.mxu0
        %v1889 = vadd.f32 0.0, %v1888
        %1890 = vmatmul.bf16.gmra.mxu0 %v1781
        %v1891 = vpop.f32.mrf.mxu0
        %v1892 = vadd.f32 0.0, %v1891
        %v1893 = vpop.f32.mrf.mxu0
        %v1894 = vadd.f32 0.0, %v1893
        %1895 = vmatmul.bf16.gmra.mxu0 %v1783
        %v1896 = vpop.f32.mrf.mxu0
        %v1897 = vadd.f32 0.0, %v1896
        %v1898 = vpop.f32.mrf.mxu0
        %v1899 = vadd.f32 0.0, %v1898
        %1900 = vdwg.mxu0
        %v1901 = vadd.f32 %v1714, %v1852
        %v1902 = vadd.f32 %v1715, %v1854
        %v1903 = vadd.f32 %v1716, %v1857
        %v1904 = vadd.f32 %v1717, %v1859
        %v1905 = vadd.f32 %v1718, %v1862
        %v1906 = vadd.f32 %v1719, %v1864
        %v1907 = vadd.f32 %v1720, %v1867
        %v1908 = vadd.f32 %v1721, %v1869
        %v1909 = vadd.f32 %v1722, %v1872
        %v1910 = vadd.f32 %v1723, %v1874
        %v1911 = vadd.f32 %v1724, %v1877
        %v1912 = vadd.f32 %v1725, %v1879
        %v1913 = vadd.f32 %v1726, %v1882
        %v1914 = vadd.f32 %v1727, %v1884
        %v1915 = vadd.f32 %v1728, %v1887
        %v1916 = vadd.f32 %v1729, %v1889
        %v1917 = vadd.f32 %v1730, %v1892
        %v1918 = vadd.f32 %v1731, %v1894
        %v1919 = vadd.f32 %v1732, %v1897
        %v1920 = vadd.f32 %v1733, %v1899
        %s1921 = scalar_lea.vmem %s3, 320
        %v1922 = vld [vmem:[%s1921] sm:$0xf]
        %v1923 = vld [vmem:[%s1921 + $0x4] sm:$0xf]
        %v1924 = vld [vmem:[%s1921 + $0x8] sm:$0xf]
        %v1925 = vld [vmem:[%s1921 + $0xc] sm:$0xf]
        %v1926 = vld [vmem:[%s1921 + $0x10] sm:$0xf]
        %v1927 = vld [vmem:[%s1921 + $0x14] sm:$0xf]
        %v1928 = vld [vmem:[%s1921 + $0x18] sm:$0xf]
        %v1929 = vld [vmem:[%s1921 + $0x1c] sm:$0xf]
        %v1930 = vld [vmem:[%s1921 + $0x20] sm:$0xf]
        %v1931 = vld [vmem:[%s1921 + $0x24] sm:$0xf]
        %v1932 = vld [vmem:[%s1921 + $0x28] sm:$0xf]
        %v1933 = vld [vmem:[%s1921 + $0x2c] sm:$0xf]
        %v1934 = vld [vmem:[%s1921 + $0x30] sm:$0xf]
        %v1935 = vld [vmem:[%s1921 + $0x34] sm:$0xf]
        %v1936 = vld [vmem:[%s1921 + $0x38] sm:$0xf]
        %v1937 = vld [vmem:[%s1921 + $0x3c] sm:$0xf]
        %v1938 = vrot.slane %v1580, 2
        %v1939 = vrot.slane %v1581, 2
        %v1940 = vsel %vm1421, %v1938, %v1939
        %v1941 = vrot.slane %v1582, 2
        %v1942 = vsel %vm1421, %v1939, %v1941
        %v1943 = vrot.slane %v1583, 2
        %v1944 = vsel %vm1421, %v1941, %v1943
        %v1945 = vrot.slane %v1584, 2
        %v1946 = vsel %vm1421, %v1943, %v1945
        %v1947 = vrot.slane %v1585, 2
        %v1948 = vsel %vm1421, %v1945, %v1947
        %v1949 = vrot.slane %v1586, 2
        %v1950 = vsel %vm1421, %v1947, %v1949
        %v1951 = vrot.slane %v1587, 2
        %v1952 = vsel %vm1421, %v1949, %v1951
        %v1953 = vrot.slane %v1588, 2
        %v1954 = vsel %vm1421, %v1951, %v1953
        %v1955 = vrot.slane %v1589, 2
        %v1956 = vsel %vm1421, %v1953, %v1955
        %v1957 = vrot.slane %v1734, 2
        %v1958 = vsel %vm1421, %v1955, %v1957
        %v1985 = vunpack.c.l.b16 %v1922
        %v1986 = vunpack.c.l.b16 %v1923
        %v1987 = vunpack.c.l.b16 %v1924
        %v1988 = vunpack.c.l.b16 %v1925
        %v1989 = vunpack.c.l.b16 %v1926
        %v1990 = vunpack.c.l.b16 %v1927
        %v1991 = vunpack.c.l.b16 %v1928
        %v1992 = vunpack.c.l.b16 %v1929
        %v1993 = vunpack.c.l.b16 %v1930
        %v1994 = vunpack.c.l.b16 %v1931
        %v1995 = vunpack.c.l.b16 %v1932
        %v1996 = vunpack.c.l.b16 %v1933
        %v1997 = vunpack.c.l.b16 %v1934
        %v1998 = vunpack.c.l.b16 %v1935
        %v1999 = vunpack.c.l.b16 %v1936
        %v2000 = vunpack.c.l.b16 %v1937
        %v2001 = vpack.c.b16 %v1986, %v1985
        %v2002 = vpack.c.b16 %v1988, %v1987
        %v2003 = vpack.c.b16 %v1990, %v1989
        %v2004 = vpack.c.b16 %v1992, %v1991
        %v2005 = vpack.c.b16 %v1994, %v1993
        %v2006 = vpack.c.b16 %v1996, %v1995
        %v2007 = vpack.c.b16 %v1998, %v1997
        %v2008 = vpack.c.b16 %v2000, %v1999
        %2017 = vmatpush.bf16.msra.mxu0 %v2008
        %2018 = vmatpush.bf16.msra.mxu0 %v2007
        %2019 = vmatpush.bf16.msra.mxu0 %v2006
        %2020 = vmatpush.bf16.msra.mxu0 %v2005
        %2021 = vmatpush.bf16.msra.mxu0 %v2004
        %2022 = vmatpush.bf16.msra.mxu0 %v2003
        %2023 = vmatpush.bf16.msra.mxu0 %v2002
        %2024 = vmatpush.bf16.msra.mxu0 %v2001
        %2025 = vmatmul.bf16.gmra.mxu0 %v1940
        %v2026 = vpop.f32.mrf.mxu0
        %v2027 = vadd.f32 0.0, %v2026
        %v2028 = vpop.f32.mrf.mxu0
        %v2029 = vadd.f32 0.0, %v2028
        %2030 = vmatmul.bf16.gmra.mxu0 %v1942
        %v2031 = vpop.f32.mrf.mxu0
        %v2032 = vadd.f32 0.0, %v2031
        %v2033 = vpop.f32.mrf.mxu0
        %v2034 = vadd.f32 0.0, %v2033
        %2035 = vmatmul.bf16.gmra.mxu0 %v1944
        %v2036 = vpop.f32.mrf.mxu0
        %v2037 = vadd.f32 0.0, %v2036
        %v2038 = vpop.f32.mrf.mxu0
        %v2039 = vadd.f32 0.0, %v2038
        %2040 = vmatmul.bf16.gmra.mxu0 %v1946
        %v2041 = vpop.f32.mrf.mxu0
        %v2042 = vadd.f32 0.0, %v2041
        %v2043 = vpop.f32.mrf.mxu0
        %v2044 = vadd.f32 0.0, %v2043
        %2045 = vmatmul.bf16.gmra.mxu0 %v1948
        %v2046 = vpop.f32.mrf.mxu0
        %v2047 = vadd.f32 0.0, %v2046
        %v2048 = vpop.f32.mrf.mxu0
        %v2049 = vadd.f32 0.0, %v2048
        %2050 = vmatmul.bf16.gmra.mxu0 %v1950
        %v2051 = vpop.f32.mrf.mxu0
        %v2052 = vadd.f32 0.0, %v2051
        %v2053 = vpop.f32.mrf.mxu0
        %v2054 = vadd.f32 0.0, %v2053
        %2055 = vmatmul.bf16.gmra.mxu0 %v1952
        %v2056 = vpop.f32.mrf.mxu0
        %v2057 = vadd.f32 0.0, %v2056
        %v2058 = vpop.f32.mrf.mxu0
        %v2059 = vadd.f32 0.0, %v2058
        %2060 = vmatmul.bf16.gmra.mxu0 %v1954
        %v2061 = vpop.f32.mrf.mxu0
        %v2062 = vadd.f32 0.0, %v2061
        %v2063 = vpop.f32.mrf.mxu0
        %v2064 = vadd.f32 0.0, %v2063
        %2065 = vmatmul.bf16.gmra.mxu0 %v1956
        %v2066 = vpop.f32.mrf.mxu0
        %v2067 = vadd.f32 0.0, %v2066
        %v2068 = vpop.f32.mrf.mxu0
        %v2069 = vadd.f32 0.0, %v2068
        %2070 = vmatmul.bf16.gmra.mxu0 %v1958
        %v2071 = vpop.f32.mrf.mxu0
        %v2072 = vadd.f32 0.0, %v2071
        %v2073 = vpop.f32.mrf.mxu0
        %v2074 = vadd.f32 0.0, %v2073
        %2075 = vdwg.mxu0
        %v2076 = vadd.f32 %v1901, %v2027
        %v2077 = vadd.f32 %v1902, %v2029
        %v2078 = vadd.f32 %v1903, %v2032
        %v2079 = vadd.f32 %v1904, %v2034
        %v2080 = vadd.f32 %v1905, %v2037
        %v2081 = vadd.f32 %v1906, %v2039
        %v2082 = vadd.f32 %v1907, %v2042
        %v2083 = vadd.f32 %v1908, %v2044
        %v2084 = vadd.f32 %v1909, %v2047
        %v2085 = vadd.f32 %v1910, %v2049
        %v2086 = vadd.f32 %v1911, %v2052
        %v2087 = vadd.f32 %v1912, %v2054
        %v2088 = vadd.f32 %v1913, %v2057
        %v2089 = vadd.f32 %v1914, %v2059
        %v2090 = vadd.f32 %v1915, %v2062
        %v2091 = vadd.f32 %v1916, %v2064
        %v2092 = vadd.f32 %v1917, %v2067
        %v2093 = vadd.f32 %v1918, %v2069
        %v2094 = vadd.f32 %v1919, %v2072
        %v2095 = vadd.f32 %v1920, %v2074
        %v2096 = vpack.c.bf16 %v1093, %v1092
        %v2097 = vpack.c.bf16 %v1095, %v1094
        %v2098 = vpack.c.bf16 %v1097, %v1096
        %v2099 = vpack.c.bf16 %v1099, %v1098
        %v2100 = vpack.c.bf16 %v1101, %v1100
        %s2101 = scalar_lea.vmem %s3, 384
        %v2102 = vld [vmem:[%s2101] sm:$0xf]
        %v2103 = vld [vmem:[%s2101 + $0x4] sm:$0xf]
        %v2104 = vld [vmem:[%s2101 + $0x8] sm:$0xf]
        %v2105 = vld [vmem:[%s2101 + $0xc] sm:$0xf]
        %v2106 = vld [vmem:[%s2101 + $0x10] sm:$0xf]
        %v2107 = vld [vmem:[%s2101 + $0x14] sm:$0xf]
        %v2108 = vld [vmem:[%s2101 + $0x18] sm:$0xf]
        %v2109 = vld [vmem:[%s2101 + $0x1c] sm:$0xf]
        %v2110 = vld [vmem:[%s2101 + $0x20] sm:$0xf]
        %v2111 = vld [vmem:[%s2101 + $0x24] sm:$0xf]
        %v2112 = vld [vmem:[%s2101 + $0x28] sm:$0xf]
        %v2113 = vld [vmem:[%s2101 + $0x2c] sm:$0xf]
        %v2114 = vld [vmem:[%s2101 + $0x30] sm:$0xf]
        %v2115 = vld [vmem:[%s2101 + $0x34] sm:$0xf]
        %v2116 = vld [vmem:[%s2101 + $0x38] sm:$0xf]
        %v2117 = vld [vmem:[%s2101 + $0x3c] sm:$0xf]
        %v2134 = vunpack.c.l.b16 %v2102
        %v2135 = vunpack.c.l.b16 %v2103
        %v2136 = vunpack.c.l.b16 %v2104
        %v2137 = vunpack.c.l.b16 %v2105
        %v2138 = vunpack.c.l.b16 %v2106
        %v2139 = vunpack.c.l.b16 %v2107
        %v2140 = vunpack.c.l.b16 %v2108
        %v2141 = vunpack.c.l.b16 %v2109
        %v2142 = vunpack.c.l.b16 %v2110
        %v2143 = vunpack.c.l.b16 %v2111
        %v2144 = vunpack.c.l.b16 %v2112
        %v2145 = vunpack.c.l.b16 %v2113
        %v2146 = vunpack.c.l.b16 %v2114
        %v2147 = vunpack.c.l.b16 %v2115
        %v2148 = vunpack.c.l.b16 %v2116
        %v2149 = vunpack.c.l.b16 %v2117
        %v2150 = vpack.c.b16 %v2135, %v2134
        %v2151 = vpack.c.b16 %v2137, %v2136
        %v2152 = vpack.c.b16 %v2139, %v2138
        %v2153 = vpack.c.b16 %v2141, %v2140
        %v2154 = vpack.c.b16 %v2143, %v2142
        %v2155 = vpack.c.b16 %v2145, %v2144
        %v2156 = vpack.c.b16 %v2147, %v2146
        %v2157 = vpack.c.b16 %v2149, %v2148
        %2166 = vmatpush.bf16.msra.mxu0 %v2157
        %2167 = vmatpush.bf16.msra.mxu0 %v2156
        %2168 = vmatpush.bf16.msra.mxu0 %v2155
        %2169 = vmatpush.bf16.msra.mxu0 %v2154
        %2170 = vmatpush.bf16.msra.mxu0 %v2153
        %2171 = vmatpush.bf16.msra.mxu0 %v2152
        %2172 = vmatpush.bf16.msra.mxu0 %v2151
        %2173 = vmatpush.bf16.msra.mxu0 %v2150
        %2174 = vmatmul.bf16.gmra.mxu0 %v1108
        %v2175 = vpop.f32.mrf.mxu0
        %v2176 = vadd.f32 0.0, %v2175
        %v2177 = vpop.f32.mrf.mxu0
        %v2178 = vadd.f32 0.0, %v2177
        %2179 = vmatmul.bf16.gmra.mxu0 %v1109
        %v2180 = vpop.f32.mrf.mxu0
        %v2181 = vadd.f32 0.0, %v2180
        %v2182 = vpop.f32.mrf.mxu0
        %v2183 = vadd.f32 0.0, %v2182
        %2184 = vmatmul.bf16.gmra.mxu0 %v1110
        %v2185 = vpop.f32.mrf.mxu0
        %v2186 = vadd.f32 0.0, %v2185
        %v2187 = vpop.f32.mrf.mxu0
        %v2188 = vadd.f32 0.0, %v2187
        %2189 = vmatmul.bf16.gmra.mxu0 %v1111
        %v2190 = vpop.f32.mrf.mxu0
        %v2191 = vadd.f32 0.0, %v2190
        %v2192 = vpop.f32.mrf.mxu0
        %v2193 = vadd.f32 0.0, %v2192
        %2194 = vmatmul.bf16.gmra.mxu0 %v1112
        %v2195 = vpop.f32.mrf.mxu0
        %v2196 = vadd.f32 0.0, %v2195
        %v2197 = vpop.f32.mrf.mxu0
        %v2198 = vadd.f32 0.0, %v2197
        %2199 = vmatmul.bf16.gmra.mxu0 %v2096
        %v2200 = vpop.f32.mrf.mxu0
        %v2201 = vadd.f32 0.0, %v2200
        %v2202 = vpop.f32.mrf.mxu0
        %v2203 = vadd.f32 0.0, %v2202
        %2204 = vmatmul.bf16.gmra.mxu0 %v2097
        %v2205 = vpop.f32.mrf.mxu0
        %v2206 = vadd.f32 0.0, %v2205
        %v2207 = vpop.f32.mrf.mxu0
        %v2208 = vadd.f32 0.0, %v2207
        %2209 = vmatmul.bf16.gmra.mxu0 %v2098
        %v2210 = vpop.f32.mrf.mxu0
        %v2211 = vadd.f32 0.0, %v2210
        %v2212 = vpop.f32.mrf.mxu0
        %v2213 = vadd.f32 0.0, %v2212
        %2214 = vmatmul.bf16.gmra.mxu0 %v2099
        %v2215 = vpop.f32.mrf.mxu0
        %v2216 = vadd.f32 0.0, %v2215
        %v2217 = vpop.f32.mrf.mxu0
        %v2218 = vadd.f32 0.0, %v2217
        %2219 = vmatmul.bf16.gmra.mxu0 %v2100
        %v2220 = vpop.f32.mrf.mxu0
        %v2221 = vadd.f32 0.0, %v2220
        %v2222 = vpop.f32.mrf.mxu0
        %v2223 = vadd.f32 0.0, %v2222
        %2224 = vdwg.mxu0
        %v2225 = vadd.f32 %v2076, %v2176
        %v2226 = vadd.f32 %v2077, %v2178
        %v2227 = vadd.f32 %v2078, %v2181
        %v2228 = vadd.f32 %v2079, %v2183
        %v2229 = vadd.f32 %v2080, %v2186
        %v2230 = vadd.f32 %v2081, %v2188
        %v2231 = vadd.f32 %v2082, %v2191
        %v2232 = vadd.f32 %v2083, %v2193
        %v2233 = vadd.f32 %v2084, %v2196
        %v2234 = vadd.f32 %v2085, %v2198
        %v2235 = vadd.f32 %v2086, %v2201
        %v2236 = vadd.f32 %v2087, %v2203
        %v2237 = vadd.f32 %v2088, %v2206
        %v2238 = vadd.f32 %v2089, %v2208
        %v2239 = vadd.f32 %v2090, %v2211
        %v2240 = vadd.f32 %v2091, %v2213
        %v2241 = vadd.f32 %v2092, %v2216
        %v2242 = vadd.f32 %v2093, %v2218
        %v2243 = vadd.f32 %v2094, %v2221
        %v2244 = vadd.f32 %v2095, %v2223
        %v2245 = vpack.c.bf16 %v1102, %v1102
        %s2246 = scalar_lea.vmem %s3, 448
        %v2247 = vld [vmem:[%s2246] sm:$0xf]
        %v2248 = vld [vmem:[%s2246 + $0x4] sm:$0xf]
        %v2249 = vld [vmem:[%s2246 + $0x8] sm:$0xf]
        %v2250 = vld [vmem:[%s2246 + $0xc] sm:$0xf]
        %v2251 = vld [vmem:[%s2246 + $0x10] sm:$0xf]
        %v2252 = vld [vmem:[%s2246 + $0x14] sm:$0xf]
        %v2253 = vld [vmem:[%s2246 + $0x18] sm:$0xf]
        %v2254 = vld [vmem:[%s2246 + $0x1c] sm:$0xf]
        %v2255 = vld [vmem:[%s2246 + $0x20] sm:$0xf]
        %v2256 = vld [vmem:[%s2246 + $0x24] sm:$0xf]
        %v2257 = vld [vmem:[%s2246 + $0x28] sm:$0xf]
        %v2258 = vld [vmem:[%s2246 + $0x2c] sm:$0xf]
        %v2259 = vld [vmem:[%s2246 + $0x30] sm:$0xf]
        %v2260 = vld [vmem:[%s2246 + $0x34] sm:$0xf]
        %v2261 = vld [vmem:[%s2246 + $0x38] sm:$0xf]
        %v2262 = vld [vmem:[%s2246 + $0x3c] sm:$0xf]
        %v2269 = vrot.slane %v2096, 1
        %v2270 = vsel %vm1158, %v1176, %v2269
        %v2271 = vrot.slane %v2097, 1
        %v2272 = vsel %vm1158, %v2269, %v2271
        %v2273 = vrot.slane %v2098, 1
        %v2274 = vsel %vm1158, %v2271, %v2273
        %v2275 = vrot.slane %v2099, 1
        %v2276 = vsel %vm1158, %v2273, %v2275
        %v2277 = vrot.slane %v2100, 1
        %v2278 = vsel %vm1158, %v2275, %v2277
        %v2279 = vrot.slane %v2245, 1
        %v2280 = vsel %vm1158, %v2277, %v2279
        %v2303 = vunpack.c.l.b16 %v2247
        %v2304 = vunpack.c.l.b16 %v2248
        %v2305 = vunpack.c.l.b16 %v2249
        %v2306 = vunpack.c.l.b16 %v2250
        %v2307 = vunpack.c.l.b16 %v2251
        %v2308 = vunpack.c.l.b16 %v2252
        %v2309 = vunpack.c.l.b16 %v2253
        %v2310 = vunpack.c.l.b16 %v2254
        %v2311 = vunpack.c.l.b16 %v2255
        %v2312 = vunpack.c.l.b16 %v2256
        %v2313 = vunpack.c.l.b16 %v2257
        %v2314 = vunpack.c.l.b16 %v2258
        %v2315 = vunpack.c.l.b16 %v2259
        %v2316 = vunpack.c.l.b16 %v2260
        %v2317 = vunpack.c.l.b16 %v2261
        %v2318 = vunpack.c.l.b16 %v2262
        %v2319 = vpack.c.b16 %v2304, %v2303
        %v2320 = vpack.c.b16 %v2306, %v2305
        %v2321 = vpack.c.b16 %v2308, %v2307
        %v2322 = vpack.c.b16 %v2310, %v2309
        %v2323 = vpack.c.b16 %v2312, %v2311
        %v2324 = vpack.c.b16 %v2314, %v2313
        %v2325 = vpack.c.b16 %v2316, %v2315
        %v2326 = vpack.c.b16 %v2318, %v2317
        %2335 = vmatpush.bf16.msra.mxu0 %v2326
        %2336 = vmatpush.bf16.msra.mxu0 %v2325
        %2337 = vmatpush.bf16.msra.mxu0 %v2324
        %2338 = vmatpush.bf16.msra.mxu0 %v2323
        %2339 = vmatpush.bf16.msra.mxu0 %v2322
        %2340 = vmatpush.bf16.msra.mxu0 %v2321
        %2341 = vmatpush.bf16.msra.mxu0 %v2320
        %2342 = vmatpush.bf16.msra.mxu0 %v2319
        %2343 = vmatmul.bf16.gmra.mxu0 %v1171
        %v2344 = vpop.f32.mrf.mxu0
        %v2345 = vadd.f32 0.0, %v2344
        %v2346 = vpop.f32.mrf.mxu0
        %v2347 = vadd.f32 0.0, %v2346
        %2348 = vmatmul.bf16.gmra.mxu0 %v1173
        %v2349 = vpop.f32.mrf.mxu0
        %v2350 = vadd.f32 0.0, %v2349
        %v2351 = vpop.f32.mrf.mxu0
        %v2352 = vadd.f32 0.0, %v2351
        %2353 = vmatmul.bf16.gmra.mxu0 %v1175
        %v2354 = vpop.f32.mrf.mxu0
        %v2355 = vadd.f32 0.0, %v2354
        %v2356 = vpop.f32.mrf.mxu0
        %v2357 = vadd.f32 0.0, %v2356
        %2358 = vmatmul.bf16.gmra.mxu0 %v1177
        %v2359 = vpop.f32.mrf.mxu0
        %v2360 = vadd.f32 0.0, %v2359
        %v2361 = vpop.f32.mrf.mxu0
        %v2362 = vadd.f32 0.0, %v2361
        %2363 = vmatmul.bf16.gmra.mxu0 %v2270
        %v2364 = vpop.f32.mrf.mxu0
        %v2365 = vadd.f32 0.0, %v2364
        %v2366 = vpop.f32.mrf.mxu0
        %v2367 = vadd.f32 0.0, %v2366
        %2368 = vmatmul.bf16.gmra.mxu0 %v2272
        %v2369 = vpop.f32.mrf.mxu0
        %v2370 = vadd.f32 0.0, %v2369
        %v2371 = vpop.f32.mrf.mxu0
        %v2372 = vadd.f32 0.0, %v2371
        %2373 = vmatmul.bf16.gmra.mxu0 %v2274
        %v2374 = vpop.f32.mrf.mxu0
        %v2375 = vadd.f32 0.0, %v2374
        %v2376 = vpop.f32.mrf.mxu0
        %v2377 = vadd.f32 0.0, %v2376
        %2378 = vmatmul.bf16.gmra.mxu0 %v2276
        %v2379 = vpop.f32.mrf.mxu0
        %v2380 = vadd.f32 0.0, %v2379
        %v2381 = vpop.f32.mrf.mxu0
        %v2382 = vadd.f32 0.0, %v2381
        %2383 = vmatmul.bf16.gmra.mxu0 %v2278
        %v2384 = vpop.f32.mrf.mxu0
        %v2385 = vadd.f32 0.0, %v2384
        %v2386 = vpop.f32.mrf.mxu0
        %v2387 = vadd.f32 0.0, %v2386
        %2388 = vmatmul.bf16.gmra.mxu0 %v2280
        %v2389 = vpop.f32.mrf.mxu0
        %v2390 = vadd.f32 0.0, %v2389
        %v2391 = vpop.f32.mrf.mxu0
        %v2392 = vadd.f32 0.0, %v2391
        %2393 = vdwg.mxu0
        %v2394 = vadd.f32 %v2225, %v2345
        %v2395 = vadd.f32 %v2226, %v2347
        %v2396 = vadd.f32 %v2227, %v2350
        %v2397 = vadd.f32 %v2228, %v2352
        %v2398 = vadd.f32 %v2229, %v2355
        %v2399 = vadd.f32 %v2230, %v2357
        %v2400 = vadd.f32 %v2231, %v2360
        %v2401 = vadd.f32 %v2232, %v2362
        %v2402 = vadd.f32 %v2233, %v2365
        %v2403 = vadd.f32 %v2234, %v2367
        %v2404 = vadd.f32 %v2235, %v2370
        %v2405 = vadd.f32 %v2236, %v2372
        %v2406 = vadd.f32 %v2237, %v2375
        %v2407 = vadd.f32 %v2238, %v2377
        %v2408 = vadd.f32 %v2239, %v2380
        %v2409 = vadd.f32 %v2240, %v2382
        %v2410 = vadd.f32 %v2241, %v2385
        %v2411 = vadd.f32 %v2242, %v2387
        %v2412 = vadd.f32 %v2243, %v2390
        %v2413 = vadd.f32 %v2244, %v2392
        %s2414 = scalar_lea.vmem %s3, 512
        %v2415 = vld [vmem:[%s2414] sm:$0xf]
        %v2416 = vld [vmem:[%s2414 + $0x4] sm:$0xf]
        %v2417 = vld [vmem:[%s2414 + $0x8] sm:$0xf]
        %v2418 = vld [vmem:[%s2414 + $0xc] sm:$0xf]
        %v2419 = vld [vmem:[%s2414 + $0x10] sm:$0xf]
        %v2420 = vld [vmem:[%s2414 + $0x14] sm:$0xf]
        %v2421 = vld [vmem:[%s2414 + $0x18] sm:$0xf]
        %v2422 = vld [vmem:[%s2414 + $0x1c] sm:$0xf]
        %v2423 = vld [vmem:[%s2414 + $0x20] sm:$0xf]
        %v2424 = vld [vmem:[%s2414 + $0x24] sm:$0xf]
        %v2425 = vld [vmem:[%s2414 + $0x28] sm:$0xf]
        %v2426 = vld [vmem:[%s2414 + $0x2c] sm:$0xf]
        %v2427 = vld [vmem:[%s2414 + $0x30] sm:$0xf]
        %v2428 = vld [vmem:[%s2414 + $0x34] sm:$0xf]
        %v2429 = vld [vmem:[%s2414 + $0x38] sm:$0xf]
        %v2430 = vld [vmem:[%s2414 + $0x3c] sm:$0xf]
        %v2431 = vrot.slane %v2096, 2
        %v2432 = vsel %vm1421, %v1439, %v2431
        %v2433 = vrot.slane %v2097, 2
        %v2434 = vsel %vm1421, %v2431, %v2433
        %v2435 = vrot.slane %v2098, 2
        %v2436 = vsel %vm1421, %v2433, %v2435
        %v2437 = vrot.slane %v2099, 2
        %v2438 = vsel %vm1421, %v2435, %v2437
        %v2439 = vrot.slane %v2100, 2
        %v2440 = vsel %vm1421, %v2437, %v2439
        %v2441 = vrot.slane %v2245, 2
        %v2442 = vsel %vm1421, %v2439, %v2441
        %v2465 = vunpack.c.l.b16 %v2415
        %v2466 = vunpack.c.l.b16 %v2416
        %v2467 = vunpack.c.l.b16 %v2417
        %v2468 = vunpack.c.l.b16 %v2418
        %v2469 = vunpack.c.l.b16 %v2419
        %v2470 = vunpack.c.l.b16 %v2420
        %v2471 = vunpack.c.l.b16 %v2421
        %v2472 = vunpack.c.l.b16 %v2422
        %v2473 = vunpack.c.l.b16 %v2423
        %v2474 = vunpack.c.l.b16 %v2424
        %v2475 = vunpack.c.l.b16 %v2425
        %v2476 = vunpack.c.l.b16 %v2426
        %v2477 = vunpack.c.l.b16 %v2427
        %v2478 = vunpack.c.l.b16 %v2428
        %v2479 = vunpack.c.l.b16 %v2429
        %v2480 = vunpack.c.l.b16 %v2430
        %v2481 = vpack.c.b16 %v2466, %v2465
        %v2482 = vpack.c.b16 %v2468, %v2467
        %v2483 = vpack.c.b16 %v2470, %v2469
        %v2484 = vpack.c.b16 %v2472, %v2471
        %v2485 = vpack.c.b16 %v2474, %v2473
        %v2486 = vpack.c.b16 %v2476, %v2475
        %v2487 = vpack.c.b16 %v2478, %v2477
        %v2488 = vpack.c.b16 %v2480, %v2479
        %2497 = vmatpush.bf16.msra.mxu0 %v2488
        %2498 = vmatpush.bf16.msra.mxu0 %v2487
        %2499 = vmatpush.bf16.msra.mxu0 %v2486
        %2500 = vmatpush.bf16.msra.mxu0 %v2485
        %2501 = vmatpush.bf16.msra.mxu0 %v2484
        %2502 = vmatpush.bf16.msra.mxu0 %v2483
        %2503 = vmatpush.bf16.msra.mxu0 %v2482
        %2504 = vmatpush.bf16.msra.mxu0 %v2481
        %2505 = vmatmul.bf16.gmra.mxu0 %v1434
        %v2506 = vpop.f32.mrf.mxu0
        %v2507 = vadd.f32 0.0, %v2506
        %v2508 = vpop.f32.mrf.mxu0
        %v2509 = vadd.f32 0.0, %v2508
        %2510 = vmatmul.bf16.gmra.mxu0 %v1436
        %v2511 = vpop.f32.mrf.mxu0
        %v2512 = vadd.f32 0.0, %v2511
        %v2513 = vpop.f32.mrf.mxu0
        %v2514 = vadd.f32 0.0, %v2513
        %2515 = vmatmul.bf16.gmra.mxu0 %v1438
        %v2516 = vpop.f32.mrf.mxu0
        %v2517 = vadd.f32 0.0, %v2516
        %v2518 = vpop.f32.mrf.mxu0
        %v2519 = vadd.f32 0.0, %v2518
        %2520 = vmatmul.bf16.gmra.mxu0 %v1440
        %v2521 = vpop.f32.mrf.mxu0
        %v2522 = vadd.f32 0.0, %v2521
        %v2523 = vpop.f32.mrf.mxu0
        %v2524 = vadd.f32 0.0, %v2523
        %2525 = vmatmul.bf16.gmra.mxu0 %v2432
        %v2526 = vpop.f32.mrf.mxu0
        %v2527 = vadd.f32 0.0, %v2526
        %v2528 = vpop.f32.mrf.mxu0
        %v2529 = vadd.f32 0.0, %v2528
        %2530 = vmatmul.bf16.gmra.mxu0 %v2434
        %v2531 = vpop.f32.mrf.mxu0
        %v2532 = vadd.f32 0.0, %v2531
        %v2533 = vpop.f32.mrf.mxu0
        %v2534 = vadd.f32 0.0, %v2533
        %2535 = vmatmul.bf16.gmra.mxu0 %v2436
        %v2536 = vpop.f32.mrf.mxu0
        %v2537 = vadd.f32 0.0, %v2536
        %v2538 = vpop.f32.mrf.mxu0
        %v2539 = vadd.f32 0.0, %v2538
        %2540 = vmatmul.bf16.gmra.mxu0 %v2438
        %v2541 = vpop.f32.mrf.mxu0
        %v2542 = vadd.f32 0.0, %v2541
        %v2543 = vpop.f32.mrf.mxu0
        %v2544 = vadd.f32 0.0, %v2543
        %2545 = vmatmul.bf16.gmra.mxu0 %v2440
        %v2546 = vpop.f32.mrf.mxu0
        %v2547 = vadd.f32 0.0, %v2546
        %v2548 = vpop.f32.mrf.mxu0
        %v2549 = vadd.f32 0.0, %v2548
        %2550 = vmatmul.bf16.gmra.mxu0 %v2442
        %v2551 = vpop.f32.mrf.mxu0
        %v2552 = vadd.f32 0.0, %v2551
        %v2553 = vpop.f32.mrf.mxu0
        %v2554 = vadd.f32 0.0, %v2553
        %2555 = vdwg.mxu0
        %v2556 = vadd.f32 %v2394, %v2507
        %v2557 = vadd.f32 %v2395, %v2509
        %v2558 = vadd.f32 %v2396, %v2512
        %v2559 = vadd.f32 %v2397, %v2514
        %v2560 = vadd.f32 %v2398, %v2517
        %v2561 = vadd.f32 %v2399, %v2519
        %v2562 = vadd.f32 %v2400, %v2522
        %v2563 = vadd.f32 %v2401, %v2524
        %v2564 = vadd.f32 %v2402, %v2527
        %v2565 = vadd.f32 %v2403, %v2529
        %v2566 = vadd.f32 %v2404, %v2532
        %v2567 = vadd.f32 %v2405, %v2534
        %v2568 = vadd.f32 %v2406, %v2537
        %v2569 = vadd.f32 %v2407, %v2539
        %v2570 = vadd.f32 %v2408, %v2542
        %v2571 = vadd.f32 %v2409, %v2544
        %v2572 = vadd.f32 %v2410, %v2547
        %v2573 = vadd.f32 %v2411, %v2549
        %v2574 = vadd.f32 %v2412, %v2552
        %v2575 = vadd.f32 %v2413, %v2554
        %v2576 = vld [vmem:[%s7] sm:$0x1]
        %v2578 = vperm.slane %v2576, 0
        %v2580 = vmul.f32 %v2556, %v2578
        %v2581 = vmul.f32 %v2557, %v2578
        %v2582 = vmul.f32 %v2558, %v2578
        %v2583 = vmul.f32 %v2559, %v2578
        %v2584 = vmul.f32 %v2560, %v2578
        %v2585 = vmul.f32 %v2561, %v2578
        %v2586 = vmul.f32 %v2562, %v2578
        %v2587 = vmul.f32 %v2563, %v2578
        %v2588 = vmul.f32 %v2564, %v2578
        %v2589 = vmul.f32 %v2565, %v2578
        %v2590 = vmul.f32 %v2566, %v2578
        %v2591 = vmul.f32 %v2567, %v2578
        %v2592 = vmul.f32 %v2568, %v2578
        %v2593 = vmul.f32 %v2569, %v2578
        %v2594 = vmul.f32 %v2570, %v2578
        %v2595 = vmul.f32 %v2571, %v2578
        %v2596 = vmul.f32 %v2572, %v2578
        %v2597 = vmul.f32 %v2573, %v2578
        %v2598 = vmul.f32 %v2574, %v2578
        %v2599 = vmul.f32 %v2575, %v2578
        %v2600 = vld [vmem:[%s8] sm:$0x1]
        %v2602 = vperm.slane %v2600, 0
        %v2604 = vadd.f32 %v2580, %v2602
        %v2605 = vadd.f32 %v2581, %v2602
        %v2606 = vadd.f32 %v2582, %v2602
        %v2607 = vadd.f32 %v2583, %v2602
        %v2608 = vadd.f32 %v2584, %v2602
        %v2609 = vadd.f32 %v2585, %v2602
        %v2610 = vadd.f32 %v2586, %v2602
        %v2611 = vadd.f32 %v2587, %v2602
        %v2612 = vadd.f32 %v2588, %v2602
        %v2613 = vadd.f32 %v2589, %v2602
        %v2614 = vadd.f32 %v2590, %v2602
        %v2615 = vadd.f32 %v2591, %v2602
        %v2616 = vadd.f32 %v2592, %v2602
        %v2617 = vadd.f32 %v2593, %v2602
        %v2618 = vadd.f32 %v2594, %v2602
        %v2619 = vadd.f32 %v2595, %v2602
        %v2620 = vadd.f32 %v2596, %v2602
        %v2621 = vadd.f32 %v2597, %v2602
        %v2622 = vadd.f32 %v2598, %v2602
        %v2623 = vadd.f32 %v2599, %v2602
        %v2624 = vmax.f32 %v2604, 0.0
        %v2625 = vmax.f32 %v2605, 0.0
        %v2626 = vmax.f32 %v2606, 0.0
        %v2627 = vmax.f32 %v2607, 0.0
        %v2628 = vmax.f32 %v2608, 0.0
        %v2629 = vmax.f32 %v2609, 0.0
        %v2630 = vmax.f32 %v2610, 0.0
        %v2631 = vmax.f32 %v2611, 0.0
        %v2632 = vmax.f32 %v2612, 0.0
        %v2633 = vmax.f32 %v2613, 0.0
        %v2634 = vmax.f32 %v2614, 0.0
        %v2635 = vmax.f32 %v2615, 0.0
        %v2636 = vmax.f32 %v2616, 0.0
        %v2637 = vmax.f32 %v2617, 0.0
        %v2638 = vmax.f32 %v2618, 0.0
        %v2639 = vmax.f32 %v2619, 0.0
        %v2640 = vmax.f32 %v2620, 0.0
        %v2641 = vmax.f32 %v2621, 0.0
        %v2642 = vmax.f32 %v2622, 0.0
        %v2643 = vmax.f32 %v2623, 0.0
        %v2644 = vpack.c.bf16 %v2625, %v2624
        %v2645 = vpack.c.bf16 %v2627, %v2626
        %v2646 = vpack.c.bf16 %v2629, %v2628
        %v2647 = vpack.c.bf16 %v2631, %v2630
        %v2648 = vpack.c.bf16 %v2633, %v2632
        %v2649 = vpack.c.bf16 %v2635, %v2634
        %v2650 = vpack.c.bf16 %v2637, %v2636
        %v2651 = vpack.c.bf16 %v2639, %v2638
        %v2652 = vpack.c.bf16 %v2641, %v2640
        %v2653 = vpack.c.bf16 %v2643, %v2642
        %v2654 = vld [vmem:[%s4] sm:$0xf]
        %v2655 = vld [vmem:[%s4 + $0x4] sm:$0xf]
        %v2656 = vld [vmem:[%s4 + $0x8] sm:$0xf]
        %v2657 = vld [vmem:[%s4 + $0xc] sm:$0xf]
        %v2658 = vld [vmem:[%s4 + $0x10] sm:$0xf]
        %v2659 = vld [vmem:[%s4 + $0x14] sm:$0xf]
        %v2660 = vld [vmem:[%s4 + $0x18] sm:$0xf]
        %v2661 = vld [vmem:[%s4 + $0x1c] sm:$0xf]
        %v2662 = vld [vmem:[%s4 + $0x20] sm:$0xf]
        %v2663 = vld [vmem:[%s4 + $0x24] sm:$0xf]
        %v2664 = vld [vmem:[%s4 + $0x28] sm:$0xf]
        %v2665 = vld [vmem:[%s4 + $0x2c] sm:$0xf]
        %v2666 = vld [vmem:[%s4 + $0x30] sm:$0xf]
        %v2667 = vld [vmem:[%s4 + $0x34] sm:$0xf]
        %v2668 = vld [vmem:[%s4 + $0x38] sm:$0xf]
        %v2669 = vld [vmem:[%s4 + $0x3c] sm:$0xf]
        %v2686 = vunpack.c.l.b16 %v2654
        %v2687 = vunpack.c.l.b16 %v2655
        %v2688 = vunpack.c.l.b16 %v2656
        %v2689 = vunpack.c.l.b16 %v2657
        %v2690 = vunpack.c.l.b16 %v2658
        %v2691 = vunpack.c.l.b16 %v2659
        %v2692 = vunpack.c.l.b16 %v2660
        %v2693 = vunpack.c.l.b16 %v2661
        %v2694 = vunpack.c.l.b16 %v2662
        %v2695 = vunpack.c.l.b16 %v2663
        %v2696 = vunpack.c.l.b16 %v2664
        %v2697 = vunpack.c.l.b16 %v2665
        %v2698 = vunpack.c.l.b16 %v2666
        %v2699 = vunpack.c.l.b16 %v2667
        %v2700 = vunpack.c.l.b16 %v2668
        %v2701 = vunpack.c.l.b16 %v2669
        %v2702 = vpack.c.b16 %v2687, %v2686
        %v2703 = vpack.c.b16 %v2689, %v2688
        %v2704 = vpack.c.b16 %v2691, %v2690
        %v2705 = vpack.c.b16 %v2693, %v2692
        %v2706 = vpack.c.b16 %v2695, %v2694
        %v2707 = vpack.c.b16 %v2697, %v2696
        %v2708 = vpack.c.b16 %v2699, %v2698
        %v2709 = vpack.c.b16 %v2701, %v2700
        %2718 = vmatpush.bf16.msra.mxu0 %v2709
        %2719 = vmatpush.bf16.msra.mxu0 %v2708
        %2720 = vmatpush.bf16.msra.mxu0 %v2707
        %2721 = vmatpush.bf16.msra.mxu0 %v2706
        %2722 = vmatpush.bf16.msra.mxu0 %v2705
        %2723 = vmatpush.bf16.msra.mxu0 %v2704
        %2724 = vmatpush.bf16.msra.mxu0 %v2703
        %2725 = vmatpush.bf16.msra.mxu0 %v2702
        %2726 = vmatmul.bf16.gmra.mxu0 %v2644
        %v2727 = vpop.f32.mrf.mxu0
        %v2728 = vadd.f32 0.0, %v2727
        %v2729 = vpop.f32.mrf.mxu0
        %v2730 = vadd.f32 0.0, %v2729
        %2731 = vmatmul.bf16.gmra.mxu0 %v2645
        %v2732 = vpop.f32.mrf.mxu0
        %v2733 = vadd.f32 0.0, %v2732
        %v2734 = vpop.f32.mrf.mxu0
        %v2735 = vadd.f32 0.0, %v2734
        %2736 = vmatmul.bf16.gmra.mxu0 %v2646
        %v2737 = vpop.f32.mrf.mxu0
        %v2738 = vadd.f32 0.0, %v2737
        %v2739 = vpop.f32.mrf.mxu0
        %v2740 = vadd.f32 0.0, %v2739
        %2741 = vmatmul.bf16.gmra.mxu0 %v2647
        %v2742 = vpop.f32.mrf.mxu0
        %v2743 = vadd.f32 0.0, %v2742
        %v2744 = vpop.f32.mrf.mxu0
        %v2745 = vadd.f32 0.0, %v2744
        %2746 = vmatmul.bf16.gmra.mxu0 %v2648
        %v2747 = vpop.f32.mrf.mxu0
        %v2748 = vadd.f32 0.0, %v2747
        %v2749 = vpop.f32.mrf.mxu0
        %v2750 = vadd.f32 0.0, %v2749
        %2751 = vmatmul.bf16.gmra.mxu0 %v2649
        %v2752 = vpop.f32.mrf.mxu0
        %v2753 = vadd.f32 0.0, %v2752
        %v2754 = vpop.f32.mrf.mxu0
        %v2755 = vadd.f32 0.0, %v2754
        %2756 = vmatmul.bf16.gmra.mxu0 %v2650
        %v2757 = vpop.f32.mrf.mxu0
        %v2758 = vadd.f32 0.0, %v2757
        %v2759 = vpop.f32.mrf.mxu0
        %v2760 = vadd.f32 0.0, %v2759
        %2761 = vmatmul.bf16.gmra.mxu0 %v2651
        %v2762 = vpop.f32.mrf.mxu0
        %v2763 = vadd.f32 0.0, %v2762
        %v2764 = vpop.f32.mrf.mxu0
        %v2765 = vadd.f32 0.0, %v2764
        %2766 = vmatmul.bf16.gmra.mxu0 %v2652
        %v2767 = vpop.f32.mrf.mxu0
        %v2768 = vadd.f32 0.0, %v2767
        %v2769 = vpop.f32.mrf.mxu0
        %v2770 = vadd.f32 0.0, %v2769
        %2771 = vmatmul.bf16.gmra.mxu0 %v2653
        %v2772 = vpop.f32.mrf.mxu0
        %v2773 = vadd.f32 0.0, %v2772
        %v2774 = vpop.f32.mrf.mxu0
        %v2775 = vadd.f32 0.0, %v2774
        %2776 = vdwg.mxu0
        %v2777 = vld [vmem:[%s9] sm:$0x1]
        %v2779 = vperm.slane %v2777, 0
        %v2781 = vmul.f32 %v2728, %v2779
        %v2782 = vmul.f32 %v2730, %v2779
        %v2783 = vmul.f32 %v2733, %v2779
        %v2784 = vmul.f32 %v2735, %v2779
        %v2785 = vmul.f32 %v2738, %v2779
        %v2786 = vmul.f32 %v2740, %v2779
        %v2787 = vmul.f32 %v2743, %v2779
        %v2788 = vmul.f32 %v2745, %v2779
        %v2789 = vmul.f32 %v2748, %v2779
        %v2790 = vmul.f32 %v2750, %v2779
        %v2791 = vmul.f32 %v2753, %v2779
        %v2792 = vmul.f32 %v2755, %v2779
        %v2793 = vmul.f32 %v2758, %v2779
        %v2794 = vmul.f32 %v2760, %v2779
        %v2795 = vmul.f32 %v2763, %v2779
        %v2796 = vmul.f32 %v2765, %v2779
        %v2797 = vmul.f32 %v2768, %v2779
        %v2798 = vmul.f32 %v2770, %v2779
        %v2799 = vmul.f32 %v2773, %v2779
        %v2800 = vmul.f32 %v2775, %v2779
        %v2801 = vld [vmem:[%s10] sm:$0x1]
        %v2803 = vperm.slane %v2801, 0
        %v2805 = vadd.f32 %v2781, %v2803
        %v2806 = vadd.f32 %v2782, %v2803
        %v2807 = vadd.f32 %v2783, %v2803
        %v2808 = vadd.f32 %v2784, %v2803
        %v2809 = vadd.f32 %v2785, %v2803
        %v2810 = vadd.f32 %v2786, %v2803
        %v2811 = vadd.f32 %v2787, %v2803
        %v2812 = vadd.f32 %v2788, %v2803
        %v2813 = vadd.f32 %v2789, %v2803
        %v2814 = vadd.f32 %v2790, %v2803
        %v2815 = vadd.f32 %v2791, %v2803
        %v2816 = vadd.f32 %v2792, %v2803
        %v2817 = vadd.f32 %v2793, %v2803
        %v2818 = vadd.f32 %v2794, %v2803
        %v2819 = vadd.f32 %v2795, %v2803
        %v2820 = vadd.f32 %v2796, %v2803
        %v2821 = vadd.f32 %v2797, %v2803
        %v2822 = vadd.f32 %v2798, %v2803
        %v2823 = vadd.f32 %v2799, %v2803
        %v2824 = vadd.f32 %v2800, %v2803
        %vm2846 = vcmask 1045504
        %v2847 = vrot.slane %v591, 2
        %v2848 = vrot.slane %v592, 2
        %v2849 = vsel %vm2846, %v2847, %v2848
        %v2850 = vrot.slane %v593, 2
        %v2851 = vsel %vm2846, %v2848, %v2850
        %v2852 = vrot.slane %v594, 2
        %v2853 = vsel %vm2846, %v2850, %v2852
        %v2854 = vrot.slane %v595, 2
        %v2855 = vsel %vm2846, %v2852, %v2854
        %v2856 = vrot.slane %v596, 2
        %v2857 = vsel %vm2846, %v2854, %v2856
        %v2858 = vrot.slane %v597, 2
        %v2859 = vsel %vm2846, %v2856, %v2858
        %v2860 = vrot.slane %v598, 2
        %v2861 = vsel %vm2846, %v2858, %v2860
        %v2862 = vrot.slane %v599, 2
        %v2863 = vsel %vm2846, %v2860, %v2862
        %v2864 = vrot.slane %v600, 2
        %v2865 = vsel %vm2846, %v2862, %v2864
        %v2866 = vrot.slane %v601, 2
        %v2867 = vsel %vm2846, %v2864, %v2866
        %v2868 = vrot.slane %v602, 2
        %v2869 = vsel %vm2846, %v2866, %v2868
        %v2870 = vrot.slane %v603, 2
        %v2871 = vsel %vm2846, %v2868, %v2870
        %v2872 = vrot.slane %v604, 2
        %v2873 = vsel %vm2846, %v2870, %v2872
        %v2874 = vrot.slane %v605, 2
        %v2875 = vsel %vm2846, %v2872, %v2874
        %v2876 = vrot.slane %v606, 2
        %v2877 = vsel %vm2846, %v2874, %v2876
        %v2878 = vrot.slane %v607, 2
        %v2879 = vsel %vm2846, %v2876, %v2878
        %v2880 = vrot.slane %v608, 2
        %v2881 = vsel %vm2846, %v2878, %v2880
        %v2882 = vrot.slane %v609, 2
        %v2883 = vsel %vm2846, %v2880, %v2882
        %v2884 = vrot.slane %v610, 2
        %v2885 = vsel %vm2846, %v2882, %v2884
        %v2886 = vrot.slane %v611, 2
        %v2887 = vsel %vm2846, %v2884, %v2886
        %v2908 = vadd.f32 %v2805, %v2849
        %v2909 = vadd.f32 %v2806, %v2851
        %v2910 = vadd.f32 %v2807, %v2853
        %v2911 = vadd.f32 %v2808, %v2855
        %v2912 = vadd.f32 %v2809, %v2857
        %v2913 = vadd.f32 %v2810, %v2859
        %v2914 = vadd.f32 %v2811, %v2861
        %v2915 = vadd.f32 %v2812, %v2863
        %v2916 = vadd.f32 %v2813, %v2865
        %v2917 = vadd.f32 %v2814, %v2867
        %v2918 = vadd.f32 %v2815, %v2869
        %v2919 = vadd.f32 %v2816, %v2871
        %v2920 = vadd.f32 %v2817, %v2873
        %v2921 = vadd.f32 %v2818, %v2875
        %v2922 = vadd.f32 %v2819, %v2877
        %v2923 = vadd.f32 %v2820, %v2879
        %v2924 = vadd.f32 %v2821, %v2881
        %v2925 = vadd.f32 %v2822, %v2883
        %v2926 = vadd.f32 %v2823, %v2885
        %v2927 = vadd.f32 %v2824, %v2887
        %v2928 = vmax.f32 %v2908, 0.0
        %v2929 = vmax.f32 %v2909, 0.0
        %v2930 = vmax.f32 %v2910, 0.0
        %v2931 = vmax.f32 %v2911, 0.0
        %v2932 = vmax.f32 %v2912, 0.0
        %v2933 = vmax.f32 %v2913, 0.0
        %v2934 = vmax.f32 %v2914, 0.0
        %v2935 = vmax.f32 %v2915, 0.0
        %v2936 = vmax.f32 %v2916, 0.0
        %v2937 = vmax.f32 %v2917, 0.0
        %v2938 = vmax.f32 %v2918, 0.0
        %v2939 = vmax.f32 %v2919, 0.0
        %v2940 = vmax.f32 %v2920, 0.0
        %v2941 = vmax.f32 %v2921, 0.0
        %v2942 = vmax.f32 %v2922, 0.0
        %v2943 = vmax.f32 %v2923, 0.0
        %v2944 = vmax.f32 %v2924, 0.0
        %v2945 = vmax.f32 %v2925, 0.0
        %v2946 = vmax.f32 %v2926, 0.0
        %v2947 = vmax.f32 %v2927, 0.0
        %2948 = vst [vmem:[%s367] sm:$0xff] %v2928
        %2949 = vst [vmem:[%s367 + $0x8] sm:$0xff] %v2929
        %2950 = vst [vmem:[%s367 + $0x10] sm:$0xff] %v2930
        %2951 = vst [vmem:[%s367 + $0x18] sm:$0xff] %v2931
        %2952 = vst [vmem:[%s367 + $0x20] sm:$0xff] %v2932
        %2953 = vst [vmem:[%s367 + $0x28] sm:$0xff] %v2933
        %2954 = vst [vmem:[%s367 + $0x30] sm:$0xff] %v2934
        %2955 = vst [vmem:[%s367 + $0x38] sm:$0xff] %v2935
        %2956 = vst [vmem:[%s367 + $0x40] sm:$0xff] %v2936
        %2957 = vst [vmem:[%s367 + $0x48] sm:$0xff] %v2937
        %2958 = vst [vmem:[%s367 + $0x50] sm:$0xff] %v2938
        %2959 = vst [vmem:[%s367 + $0x58] sm:$0xff] %v2939
        %2960 = vst [vmem:[%s367 + $0x60] sm:$0xff] %v2940
        %2961 = vst [vmem:[%s367 + $0x68] sm:$0xff] %v2941
        %2962 = vst [vmem:[%s367 + $0x70] sm:$0xff] %v2942
        %2963 = vst [vmem:[%s367 + $0x78] sm:$0xff] %v2943
        %2964 = vst [vmem:[%s367 + $0x80] sm:$0xff] %v2944
        %2965 = vst [vmem:[%s367 + $0x88] sm:$0xff] %v2945
        %2966 = vst [vmem:[%s367 + $0x90] sm:$0xff] %v2946
        %2967 = vst [vmem:[%s367 + $0x98] sm:$0xff] %v2947
        %s2968 = sand.u32 %s262, 1
        %s2969 = scalar_lea.sflag [#allocation5], %s2968
        %s2970 = sand.u32 %s262, 1
        %s2971 = smul.addr %s2970, 160
        %s2972 = scalar_lea.vmem [#allocation4], %s2971
        // Predicated region
        $region113: #{tpu_custom_call.1} parent=59 // pred_check
          %p2973 = pneg %p272
        $region114: #{tpu_custom_call.1} parent=59 // pred_check_branch
          %2975 = sbr.rel (%p2973) target = $region116
        $region115: #{tpu_custom_call.1} parent=59 // pred_region
          %s2976 = smul.u32 20, %s30
          %2978 = vsyncadd %s2969, 0
          %s2979 = smul.addr %s29, 40
          %s2980 = sadd.s32 %s2976, %s2979
          %s2981 = smul.addr %s2980, 8
          %s2982 = scalar_lea.hbm %s11, %s2981
          %s2983 = sshll.u32 %s2972, 4
          %s2984 = int_to_ptr.vmem [resolvable:$true] %s2983
          %s2985 = sshll.u32 %s2982, 4
          %s2986 = int_to_ptr.hbm [resolvable:$true] %s2985
          %2991 = dma.vmem_to_hbm [thread:$0]  %s2984, 2560, %s2986, %s2969, 128, 128, 8
        $region116: #{tpu_custom_call.1} parent=59 // pred_fallthru
          _
      $region60: #{tpu_custom_call.1} parent=5 // pred_fallthru
        _
      %p2992 = scmp.le.s32.totalorder 2, %s20
      // Predicated region
      $region117: #{tpu_custom_call.1} parent=5 // pred_check
        %p2993 = pneg %p2992
      $region118: #{tpu_custom_call.1} parent=5 // pred_check_branch
        %2995 = sbr.rel (%p2993) target = $region120
      $region119: #{tpu_custom_call.1} parent=5 // pred_region
        %s2996 = ssub.s32 %s20, 2
        // Predicated region
        $region121: #{tpu_custom_call.1} parent=119 // pred_check
          %p2997 = pneg %p278
        $region122: #{tpu_custom_call.1} parent=119 // pred_check_branch
          %2999 = sbr.rel (%p2997) target = $region124
        $region123: #{tpu_custom_call.1} parent=119 // pred_region
          %s3000 = sand.u32 %s263, 1
          %s3001 = scalar_lea.sflag [#allocation5], %s3000
          %s3002 = sand.u32 %s263, 1
          %s3003 = smul.addr %s3002, 160
          %s3004 = scalar_lea.vmem [#allocation4], %s3003
          %3006 = dma.done %s3001, 2560
        $region124: #{tpu_custom_call.1} parent=119 // pred_fallthru
          _
      $region120: #{tpu_custom_call.1} parent=5 // pred_fallthru
        _
    $region6: #{tpu_custom_call.1} parent=1 // loop_footer
      %s24 = sadd.s32 1, %s20
    $region7: #{tpu_custom_call.1} parent=1 // loop_footer_branch
      %19 = sbr.rel target = $region3
    $region8: #{tpu_custom_call.1} parent=1 // loop_exit
      _
    %3007 = vsyncpa [#allocation5], 1
    %s3008 = scalar_lea.sflag [#allocation5], 1
    %3009 = vsyncpa %s3008, 1
  %3010 = vsyncmov [#allocation3]
  %s3011 = vpop.sfrf %3010
  %p3012 = scmp.eq.s32.totalorder %s3011, 0
  %p3013 = pneg %p3012
  %3015 = shalt.err (%p3013)
  %s3016 = scalar_lea.sflag [#allocation3], 1
  %3017 = vsyncmov %s3016
  %s3018 = vpop.sfrf %3017
  %p3019 = scmp.eq.s32.totalorder %s3018, 0
  %p3020 = pneg %p3019
  %3022 = shalt.err (%p3020)

</llo_original>
